<compile_context>
chip_gen: v7x
topology: tpu7x:2x2x1
jax: 0.10.0
libtpu: 0.0.40
codegen_flags: <defaults>
</compile_context>

<pallas_src>
import functools

import jax
import jax.numpy as jnp
from jax.experimental import pallas as pl
from jax.experimental.pallas import tpu as pltpu

EMBED_DIM = 200     # conv in/out channels in the reference module
PADDED_DIM = 256    # channel dim zero-padded to a lane-aligned 256


def _round_up(x, m):
    return (x + m - 1) // m * m


def _tpu_vmem_and_cores():
    """Best-effort query of per-core VMEM capacity and TensorCore count."""
    vmem = 64 * 1024 * 1024   # conservative default (v7x per-TC VMEM)
    cores = 1
    try:
        info = pltpu.get_tpu_info()
        vmem = int(getattr(info, "vmem_capacity_bytes", vmem))
        cores = int(getattr(info, "num_cores", cores) or cores)
    except Exception:
        pass
    return vmem, cores


def textcnn_pool_kernel(xp_ref, w1_ref, w2_ref, w3_ref, b_ref, out_ref, *,
                        seq_len, lout_pad):
    """Fused 3-branch conv + bias + ReLU + global max-pool for one batch tile.

    xp_ref : (bt, lpe, 256) bf16   embedded tokens, zero-padded (2 left, rest right)
    w*_ref : (K, 256, 256)  bf16   per-branch conv taps (K = 3 / 4 / 5)
    b_ref  : (1, 3*256)     f32    fused conv biases (padded channels are 0)
    out_ref: (bt, 3*256)    f32    max-pooled conv features, lane-dense
    """
    bt, _, cp = xp_ref.shape
    m = bt * lout_pad
    xp = xp_ref[...]                                   # (bt, lpe, cp) bf16
    t_idx = jax.lax.broadcasted_iota(jnp.int32, (1, lout_pad, 1), 1)

    def branch(w_ref, tap_start, valid_len, bias):
        n_taps = w_ref.shape[0]

        def tap(j):
            # Time-shifted view: one sublane-shifted (m, cp) slice per tap.
            return xp[:, tap_start + j:tap_start + j + lout_pad, :].reshape(m, cp)

        # Per-tap K=256 MXU matmuls accumulating in f32 (no im2col slab).
        acc = jnp.dot(tap(0), w_ref[0], preferred_element_type=jnp.float32)
        for j in range(1, n_taps):
            acc = acc + jnp.dot(tap(j), w_ref[j],
                                preferred_element_type=jnp.float32)

        y = jnp.maximum(acc + bias, 0.0).reshape(bt, lout_pad, cp)
        # Zero out time positions past this branch's valid conv length; ReLU
        # output >= 0, so masking to 0 leaves the max unchanged.
        y = jnp.where(t_idx < valid_len, y, 0.0)
        return jnp.max(y, axis=1)                      # (bt, cp)

    # branch1: conv k=3, pad=1 -> taps 1..3 of the unified padding, L outputs
    # branch2: conv k=4, pad=2 -> taps 0..3, L+1 outputs
    # branch3: conv k=5, pad=2 -> taps 0..4, L outputs
    out_ref[:, 0 * cp:1 * cp] = branch(w1_ref, 1, seq_len, b_ref[:, 0 * cp:1 * cp])
    out_ref[:, 1 * cp:2 * cp] = branch(w2_ref, 0, seq_len + 1, b_ref[:, 1 * cp:2 * cp])
    out_ref[:, 2 * cp:3 * cp] = branch(w3_ref, 0, seq_len, b_ref[:, 2 * cp:3 * cp])


def _prepare_params(params, compute_dtype):
    """Pad channels 200->256 and lay out per-branch weights / fused bias / FC."""
    C, CP = EMBED_DIM, PADDED_DIM

    def pad_w(w):   # (K, 200, 200) -> (K, 256, 256) bf16
        w = jnp.pad(w.astype(jnp.float32), ((0, 0), (0, CP - C), (0, CP - C)))
        return w.astype(compute_dtype)

    def pad_b(b):   # (1, 200) -> (1, 256) f32
        return jnp.pad(b.astype(jnp.float32), ((0, 0), (0, CP - C)))

    w1, w2, w3 = pad_w(params["w1"]), pad_w(params["w2"]), pad_w(params["w3"])
    b_all = jnp.concatenate(
        [pad_b(params["b1"]), pad_b(params["b2"]), pad_b(params["b3"])], axis=1)

    # FC weights re-laid-out for the channel-padded pooled output (zero rows
    # for the padded channels so the FC result is unchanged).
    fc_w = params["fc_w"].astype(jnp.float32)
    fcw_p = jnp.zeros((3 * CP, fc_w.shape[1]), jnp.float32)
    for i in range(3):
        fcw_p = fcw_p.at[i * CP:i * CP + C, :].set(fc_w[i * C:(i + 1) * C, :])

    return w1, w2, w3, b_all, fcw_p


def textcnn_forward(tokens, embed_matrix, params, num_classes, *,
                    block_b=256, compute_dtype=jnp.bfloat16):
    B, L = tokens.shape
    C, CP = EMBED_DIM, PADDED_DIM

    lout_pad = _round_up(L + 1, 8)      # branch2 emits L+1 positions
    lpe = lout_pad + 8                  # padded time length (covers max tap 4)

    vmem_cap, n_cores = _tpu_vmem_and_cores()

    # VMEM bytes per unit of bt: double-buffered bf16 input tile + generous
    # allowance for in-kernel tap slices / f32 accumulator / masked y + output.
    per_b = (lpe * CP * 2 * 2) + (lout_pad * CP * 16) + (3 * CP * 4 * 2)
    fixed = 6 * 1024 * 1024             # resident conv weights (+buffers) & slack
    budget = max(vmem_cap // 2 - fixed, 1 * 1024 * 1024)
    bt = max(1, min(block_b, B, budget // per_b))
    # Only split the grid across TensorCores when each core still gets a
    # decent matmul M (>= ~512 rows); otherwise one big step wins (v5e/v6e).
    if n_cores >= 2 and (B * lout_pad) // n_cores >= 512:
        bt = min(bt, pl.cdiv(B, n_cores))
    if bt >= B:
        bt, b_pad = B, B                # single grid step, block == full array
    else:
        bt = max(8, (bt // 8) * 8)      # (8,128) alignment for the output block
        b_pad = pl.cdiv(B, bt) * bt
    # TODO(synk): for very long sequences a time-tiled in-kernel running max
    # (review's v7x suggestion) would decouple bt from L; not needed here.

    # Embedding lookup (gather) in bf16 + channel pad 200->256 + time/batch pad.
    emb_p = jnp.pad(embed_matrix, ((0, 0), (0, CP - C))).astype(compute_dtype)
    emb = jnp.take(emb_p, tokens, axis=0)                          # (B, L, 256) bf16
    xp = jnp.pad(emb, ((0, b_pad - B), (2, lpe - L - 2), (0, 0)))  # (b_pad, lpe, 256)

    w1, w2, w3, b_all, fcw_p = _prepare_params(params, compute_dtype)

    vmem_limit = int(max(min(vmem_cap * 3 // 4, 96 * 1024 * 1024),
                         32 * 1024 * 1024))

    pooled = pl.pallas_call(
        functools.partial(textcnn_pool_kernel, seq_len=L, lout_pad=lout_pad),
        out_shape=jax.ShapeDtypeStruct((b_pad, 3 * CP), jnp.float32),
        grid_spec=pltpu.PrefetchScalarGridSpec(
            num_scalar_prefetch=0,
            grid=(b_pad // bt,),
            in_specs=[
                pl.BlockSpec((bt, lpe, CP), lambda i: (i, 0, 0)),
                pl.BlockSpec((3, CP, CP), lambda i: (0, 0, 0)),   # resident
                pl.BlockSpec((4, CP, CP), lambda i: (0, 0, 0)),   # resident
                pl.BlockSpec((5, CP, CP), lambda i: (0, 0, 0)),   # resident
                pl.BlockSpec((1, 3 * CP), lambda i: (0, 0)),      # resident
            ],
            out_specs=pl.BlockSpec((bt, 3 * CP), lambda i: (i, 0)),
        ),
        compiler_params=pltpu.CompilerParams(
            dimension_semantics=("parallel",),
            vmem_limit_bytes=vmem_limit),
    )(xp, w1, w2, w3, b_all)

    # Tiny num_classes FC stays in plain JAX so the kernel output is lane-dense
    # (768 = 6*128 lanes).  Dropout(p=0.5) is identity at inference time.
    return pooled[:B] @ fcw_p + params["fc_b"].astype(jnp.float32)


def reference_forward(tokens, embed_matrix, params):
    """Pure-JAX f32 reference matching the PyTorch forward (NCL conv)."""
    emb = jnp.take(embed_matrix, tokens, axis=0).astype(jnp.float32)
    x = jnp.transpose(emb, (0, 2, 1))  # (B, C, L)  == x.permute(0, 2, 1)

    def conv1d(x, w, b, pad):
        rhs = jnp.transpose(w, (2, 1, 0))  # (Cout, Cin, K)
        y = jax.lax.conv_general_dilated(
            x, rhs, window_strides=(1,), padding=[(pad, pad)],
            dimension_numbers=("NCH", "OIH", "NCH"))
        return y + b.reshape(1, -1, 1)

    y1 = jax.nn.relu(conv1d(x, params["w1"], params["b1"][0], 1)).max(axis=2)
    y2 = jax.nn.relu(conv1d(x, params["w2"], params["b2"][0], 2)).max(axis=2)
    y3 = jax.nn.relu(conv1d(x, params["w3"], params["b3"][0], 2)).max(axis=2)
    out = jnp.concatenate([y1, y2, y3], axis=1)  # (B, 600)
    return out @ params["fc_w"] + params["fc_b"][0]  # dropout == identity (eval)


if __name__ == "__main__":
    B, L = 2, 16
    vocab, num_classes, pad_idx = 50, 4, 0
    C = EMBED_DIM

    key = jax.random.PRNGKey(0)
    k_emb, k_tok, kw1, kb1, kw2, kb2, kw3, kb3, kfw, kfb = jax.random.split(key, 10)

    embed_matrix = 0.1 * jax.random.normal(k_emb, (vocab, C), jnp.float32)
    embed_matrix = embed_matrix.at[pad_idx].set(0.0)  # padding_idx row
    tokens = jax.random.randint(k_tok, (B, L), 0, vocab, dtype=jnp.int32)

    params = {
        "w1": 0.05 * jax.random.normal(kw1, (3, C, C), jnp.float32),
        "b1": 0.05 * jax.random.normal(kb1, (1, C), jnp.float32),
        "w2": 0.05 * jax.random.normal(kw2, (4, C, C), jnp.float32),
        "b2": 0.05 * jax.random.normal(kb2, (1, C), jnp.float32),
        "w3": 0.05 * jax.random.normal(kw3, (5, C, C), jnp.float32),
        "b3": 0.05 * jax.random.normal(kb3, (1, C), jnp.float32),
        "fc_w": 0.05 * jax.random.normal(kfw, (3 * C, num_classes), jnp.float32),
        "fc_b": 0.05 * jax.random.normal(kfb, (1, num_classes), jnp.float32),
    }

    out = textcnn_forward(tokens, embed_matrix, params, num_classes)
    out = jax.block_until_ready(out)

    ref = jax.block_until_ready(reference_forward(tokens, embed_matrix, params))
    assert out.shape == (B, num_classes)
    # bf16 matmul operands (f32 accumulation) => slightly looser tolerance.
    assert jnp.allclose(out, ref, rtol=2e-2, atol=2e-2), (out, ref)

    # TODO(synk): dropout is implemented as identity (inference mode); training-mode
    # stochastic dropout would need pltpu.prng_* inside the kernel.
    print("KERNEL_OK")
</pallas_src>

<mosaic_0001>
module attributes {stable_mosaic.version = 11 : i64} {
  func.func @textcnn_pool_kernel(%arg0: i32, %arg1: memref<2x32x256xbf16, #tpu.memory_space<vmem>>, %arg2: memref<3x256x256xbf16, #tpu.memory_space<vmem>>, %arg3: memref<4x256x256xbf16, #tpu.memory_space<vmem>>, %arg4: memref<5x256x256xbf16, #tpu.memory_space<vmem>>, %arg5: memref<1x768xf32, #tpu.memory_space<vmem>>, %arg6: memref<2x768xf32, #tpu.memory_space<vmem>>) attributes {dimension_semantics = [#tpu.dimension_semantics<parallel>], iteration_bounds = array<i64: 1>, scalar_prefetch = 0 : i64, scratch_operands = 0 : i64, tpu.core_type = #tpu.core_type<tc>, window_params = [{transform_indices = @transform_0, window_bounds = array<i64: 2, 32, 256>}, {pipeline_mode = #tpu.pipeline_mode<synchronous>, transform_indices = @transform_1, window_bounds = array<i64: 3, 256, 256>}, {pipeline_mode = #tpu.pipeline_mode<synchronous>, transform_indices = @transform_2, window_bounds = array<i64: 4, 256, 256>}, {pipeline_mode = #tpu.pipeline_mode<synchronous>, transform_indices = @transform_3, window_bounds = array<i64: 5, 256, 256>}, {pipeline_mode = #tpu.pipeline_mode<synchronous>, transform_indices = @transform_4, window_bounds = array<i64: 1, 768>}, {transform_indices = @transform_5, window_bounds = array<i64: 2, 768>}]} {
    %c0 = arith.constant 0 : index
    %c0_0 = arith.constant 0 : index
    %c0_1 = arith.constant 0 : index
    %0 = vector.load %arg1[%c0, %c0_0, %c0_1] : memref<2x32x256xbf16, #tpu.memory_space<vmem>>, vector<2x32x256xbf16>
    %1 = tpu.iota {dimensions = array<i32: 1>} : vector<1x24x1xi32>
    %c0_2 = arith.constant 0 : index
    %c0_3 = arith.constant 0 : index
    %2 = vector.load %arg5[%c0_2, %c0_3] : memref<1x768xf32, #tpu.memory_space<vmem>>, vector<1x256xf32>
    %3 = vector.extract_strided_slice %0 {offsets = [0, 1, 0], sizes = [2, 24, 256], strides = [1, 1, 1]} : vector<2x32x256xbf16> to vector<2x24x256xbf16>
    %4 = vector.shape_cast %3 : vector<2x24x256xbf16> to vector<48x256xbf16>
    %c0_4 = arith.constant 0 : index
    %c0_5 = arith.constant 0 : index
    %c0_6 = arith.constant 0 : index
    %5 = vector.load %arg2[%c0_4, %c0_5, %c0_6] : memref<3x256x256xbf16, #tpu.memory_space<vmem>>, vector<1x256x256xbf16>
    %6 = vector.shape_cast %5 : vector<1x256x256xbf16> to vector<256x256xbf16>
    %cst = arith.constant dense<0.000000e+00> : vector<48x256xf32>
    %7 = tpu.matmul %4, %6, %cst {dimension_numbers = #tpu.dot_dimension_numbers<[1], [0], [0], [1], [0, 0, 1, 1], [], []>} : vector<48x256xbf16>, vector<256x256xbf16>, vector<48x256xf32> -> vector<48x256xf32>
    %8 = vector.extract_strided_slice %0 {offsets = [0, 2, 0], sizes = [2, 24, 256], strides = [1, 1, 1]} : vector<2x32x256xbf16> to vector<2x24x256xbf16>
    %9 = vector.shape_cast %8 : vector<2x24x256xbf16> to vector<48x256xbf16>
    %c1 = arith.constant 1 : index
    %c0_7 = arith.constant 0 : index
    %c0_8 = arith.constant 0 : index
    %10 = vector.load %arg2[%c1, %c0_7, %c0_8] : memref<3x256x256xbf16, #tpu.memory_space<vmem>>, vector<1x256x256xbf16>
    %11 = vector.shape_cast %10 : vector<1x256x256xbf16> to vector<256x256xbf16>
    %cst_9 = arith.constant dense<0.000000e+00> : vector<48x256xf32>
    %12 = tpu.matmul %9, %11, %cst_9 {dimension_numbers = #tpu.dot_dimension_numbers<[1], [0], [0], [1], [0, 0, 1, 1], [], []>} : vector<48x256xbf16>, vector<256x256xbf16>, vector<48x256xf32> -> vector<48x256xf32>
    %13 = arith.addf %7, %12 : vector<48x256xf32>
    %14 = vector.extract_strided_slice %0 {offsets = [0, 3, 0], sizes = [2, 24, 256], strides = [1, 1, 1]} : vector<2x32x256xbf16> to vector<2x24x256xbf16>
    %15 = vector.shape_cast %14 : vector<2x24x256xbf16> to vector<48x256xbf16>
    %c2 = arith.constant 2 : index
    %c0_10 = arith.constant 0 : index
    %c0_11 = arith.constant 0 : index
    %16 = vector.load %arg2[%c2, %c0_10, %c0_11] : memref<3x256x256xbf16, #tpu.memory_space<vmem>>, vector<1x256x256xbf16>
    %17 = vector.shape_cast %16 : vector<1x256x256xbf16> to vector<256x256xbf16>
    %cst_12 = arith.constant dense<0.000000e+00> : vector<48x256xf32>
    %18 = tpu.matmul %15, %17, %cst_12 {dimension_numbers = #tpu.dot_dimension_numbers<[1], [0], [0], [1], [0, 0, 1, 1], [], []>} : vector<48x256xbf16>, vector<256x256xbf16>, vector<48x256xf32> -> vector<48x256xf32>
    %19 = arith.addf %13, %18 : vector<48x256xf32>
    %20 = vector.broadcast %2 : vector<1x256xf32> to vector<48x256xf32>
    %21 = arith.addf %19, %20 : vector<48x256xf32>
    %cst_13 = arith.constant 0.000000e+00 : f32
    %22 = vector.broadcast %cst_13 : f32 to vector<48x256xf32>
    %23 = arith.maximumf %21, %22 : vector<48x256xf32>
    %24 = vector.shape_cast %23 : vector<48x256xf32> to vector<2x24x256xf32>
    %c16_i32 = arith.constant 16 : i32
    %25 = vector.broadcast %c16_i32 : i32 to vector<1x24x1xi32>
    %26 = arith.cmpi slt, %1, %25 : vector<1x24x1xi32>
    %cst_14 = arith.constant 0.000000e+00 : f32
    %27 = vector.shape_cast %26 : vector<1x24x1xi1> to vector<1x24x1xi1>
    %28 = vector.broadcast %27 : vector<1x24x1xi1> to vector<2x24x256xi1>
    %29 = vector.broadcast %cst_14 : f32 to vector<2x24x256xf32>
    %30 = arith.select %28, %24, %29 : vector<2x24x256xi1>, vector<2x24x256xf32>
    %cst_15 = arith.constant dense<0xFF800000> : vector<2x256xf32>
    %31 = vector.multi_reduction <maximumf>, %30, %cst_15 [1] : vector<2x24x256xf32> to vector<2x256xf32>
    %c0_16 = arith.constant 0 : index
    %c0_17 = arith.constant 0 : index
    %32 = vector.load %arg6[%c0_16, %c0_17] : memref<2x768xf32, #tpu.memory_space<vmem>>, vector<2x256xf32>
    tpu.vector_store %arg6[%c0_16, %c0_17], %31 {strides = array<i32>} : memref<2x768xf32, #tpu.memory_space<vmem>>, vector<2x256xf32>,
    %c0_18 = arith.constant 0 : index
    %c256 = arith.constant 256 : index
    %33 = vector.load %arg5[%c0_18, %c256] : memref<1x768xf32, #tpu.memory_space<vmem>>, vector<1x256xf32>
    %34 = vector.extract_strided_slice %0 {offsets = [0, 0, 0], sizes = [2, 24, 256], strides = [1, 1, 1]} : vector<2x32x256xbf16> to vector<2x24x256xbf16>
    %35 = vector.shape_cast %34 : vector<2x24x256xbf16> to vector<48x256xbf16>
    %c0_19 = arith.constant 0 : index
    %c0_20 = arith.constant 0 : index
    %c0_21 = arith.constant 0 : index
    %36 = vector.load %arg3[%c0_19, %c0_20, %c0_21] : memref<4x256x256xbf16, #tpu.memory_space<vmem>>, vector<1x256x256xbf16>
    %37 = vector.shape_cast %36 : vector<1x256x256xbf16> to vector<256x256xbf16>
    %cst_22 = arith.constant dense<0.000000e+00> : vector<48x256xf32>
    %38 = tpu.matmul %35, %37, %cst_22 {dimension_numbers = #tpu.dot_dimension_numbers<[1], [0], [0], [1], [0, 0, 1, 1], [], []>} : vector<48x256xbf16>, vector<256x256xbf16>, vector<48x256xf32> -> vector<48x256xf32>
    %39 = vector.extract_strided_slice %0 {offsets = [0, 1, 0], sizes = [2, 24, 256], strides = [1, 1, 1]} : vector<2x32x256xbf16> to vector<2x24x256xbf16>
    %40 = vector.shape_cast %39 : vector<2x24x256xbf16> to vector<48x256xbf16>
    %c1_23 = arith.constant 1 : index
    %c0_24 = arith.constant 0 : index
    %c0_25 = arith.constant 0 : index
    %41 = vector.load %arg3[%c1_23, %c0_24, %c0_25] : memref<4x256x256xbf16, #tpu.memory_space<vmem>>, vector<1x256x256xbf16>
    %42 = vector.shape_cast %41 : vector<1x256x256xbf16> to vector<256x256xbf16>
    %cst_26 = arith.constant dense<0.000000e+00> : vector<48x256xf32>
    %43 = tpu.matmul %40, %42, %cst_26 {dimension_numbers = #tpu.dot_dimension_numbers<[1], [0], [0], [1], [0, 0, 1, 1], [], []>} : vector<48x256xbf16>, vector<256x256xbf16>, vector<48x256xf32> -> vector<48x256xf32>
    %44 = arith.addf %38, %43 : vector<48x256xf32>
    %45 = vector.extract_strided_slice %0 {offsets = [0, 2, 0], sizes = [2, 24, 256], strides = [1, 1, 1]} : vector<2x32x256xbf16> to vector<2x24x256xbf16>
    %46 = vector.shape_cast %45 : vector<2x24x256xbf16> to vector<48x256xbf16>
    %c2_27 = arith.constant 2 : index
    %c0_28 = arith.constant 0 : index
    %c0_29 = arith.constant 0 : index
    %47 = vector.load %arg3[%c2_27, %c0_28, %c0_29] : memref<4x256x256xbf16, #tpu.memory_space<vmem>>, vector<1x256x256xbf16>
    %48 = vector.shape_cast %47 : vector<1x256x256xbf16> to vector<256x256xbf16>
    %cst_30 = arith.constant dense<0.000000e+00> : vector<48x256xf32>
    %49 = tpu.matmul %46, %48, %cst_30 {dimension_numbers = #tpu.dot_dimension_numbers<[1], [0], [0], [1], [0, 0, 1, 1], [], []>} : vector<48x256xbf16>, vector<256x256xbf16>, vector<48x256xf32> -> vector<48x256xf32>
    %50 = arith.addf %44, %49 : vector<48x256xf32>
    %51 = vector.extract_strided_slice %0 {offsets = [0, 3, 0], sizes = [2, 24, 256], strides = [1, 1, 1]} : vector<2x32x256xbf16> to vector<2x24x256xbf16>
    %52 = vector.shape_cast %51 : vector<2x24x256xbf16> to vector<48x256xbf16>
    %c3 = arith.constant 3 : index
    %c0_31 = arith.constant 0 : index
    %c0_32 = arith.constant 0 : index
    %53 = vector.load %arg3[%c3, %c0_31, %c0_32] : memref<4x256x256xbf16, #tpu.memory_space<vmem>>, vector<1x256x256xbf16>
    %54 = vector.shape_cast %53 : vector<1x256x256xbf16> to vector<256x256xbf16>
    %cst_33 = arith.constant dense<0.000000e+00> : vector<48x256xf32>
    %55 = tpu.matmul %52, %54, %cst_33 {dimension_numbers = #tpu.dot_dimension_numbers<[1], [0], [0], [1], [0, 0, 1, 1], [], []>} : vector<48x256xbf16>, vector<256x256xbf16>, vector<48x256xf32> -> vector<48x256xf32>
    %56 = arith.addf %50, %55 : vector<48x256xf32>
    %57 = vector.broadcast %33 : vector<1x256xf32> to vector<48x256xf32>
    %58 = arith.addf %56, %57 : vector<48x256xf32>
    %cst_34 = arith.constant 0.000000e+00 : f32
    %59 = vector.broadcast %cst_34 : f32 to vector<48x256xf32>
    %60 = arith.maximumf %58, %59 : vector<48x256xf32>
    %61 = vector.shape_cast %60 : vector<48x256xf32> to vector<2x24x256xf32>
    %c17_i32 = arith.constant 17 : i32
    %62 = vector.broadcast %c17_i32 : i32 to vector<1x24x1xi32>
    %63 = arith.cmpi slt, %1, %62 : vector<1x24x1xi32>
    %cst_35 = arith.constant 0.000000e+00 : f32
    %64 = vector.shape_cast %63 : vector<1x24x1xi1> to vector<1x24x1xi1>
    %65 = vector.broadcast %64 : vector<1x24x1xi1> to vector<2x24x256xi1>
    %66 = vector.broadcast %cst_35 : f32 to vector<2x24x256xf32>
    %67 = arith.select %65, %61, %66 : vector<2x24x256xi1>, vector<2x24x256xf32>
    %cst_36 = arith.constant dense<0xFF800000> : vector<2x256xf32>
    %68 = vector.multi_reduction <maximumf>, %67, %cst_36 [1] : vector<2x24x256xf32> to vector<2x256xf32>
    %c0_37 = arith.constant 0 : index
    %c256_38 = arith.constant 256 : index
    %69 = vector.load %arg6[%c0_37, %c256_38] : memref<2x768xf32, #tpu.memory_space<vmem>>, vector<2x256xf32>
    tpu.vector_store %arg6[%c0_37, %c256_38], %68 {strides = array<i32>} : memref<2x768xf32, #tpu.memory_space<vmem>>, vector<2x256xf32>,
    %c0_39 = arith.constant 0 : index
    %c512 = arith.constant 512 : index
    %70 = vector.load %arg5[%c0_39, %c512] : memref<1x768xf32, #tpu.memory_space<vmem>>, vector<1x256xf32>
    %71 = vector.extract_strided_slice %0 {offsets = [0, 0, 0], sizes = [2, 24, 256], strides = [1, 1, 1]} : vector<2x32x256xbf16> to vector<2x24x256xbf16>
    %72 = vector.shape_cast %71 : vector<2x24x256xbf16> to vector<48x256xbf16>
    %c0_40 = arith.constant 0 : index
    %c0_41 = arith.constant 0 : index
    %c0_42 = arith.constant 0 : index
    %73 = vector.load %arg4[%c0_40, %c0_41, %c0_42] : memref<5x256x256xbf16, #tpu.memory_space<vmem>>, vector<1x256x256xbf16>
    %74 = vector.shape_cast %73 : vector<1x256x256xbf16> to vector<256x256xbf16>
    %cst_43 = arith.constant dense<0.000000e+00> : vector<48x256xf32>
    %75 = tpu.matmul %72, %74, %cst_43 {dimension_numbers = #tpu.dot_dimension_numbers<[1], [0], [0], [1], [0, 0, 1, 1], [], []>} : vector<48x256xbf16>, vector<256x256xbf16>, vector<48x256xf32> -> vector<48x256xf32>
    %76 = vector.extract_strided_slice %0 {offsets = [0, 1, 0], sizes = [2, 24, 256], strides = [1, 1, 1]} : vector<2x32x256xbf16> to vector<2x24x256xbf16>
    %77 = vector.shape_cast %76 : vector<2x24x256xbf16> to vector<48x256xbf16>
    %c1_44 = arith.constant 1 : index
    %c0_45 = arith.constant 0 : index
    %c0_46 = arith.constant 0 : index
    %78 = vector.load %arg4[%c1_44, %c0_45, %c0_46] : memref<5x256x256xbf16, #tpu.memory_space<vmem>>, vector<1x256x256xbf16>
    %79 = vector.shape_cast %78 : vector<1x256x256xbf16> to vector<256x256xbf16>
    %cst_47 = arith.constant dense<0.000000e+00> : vector<48x256xf32>
    %80 = tpu.matmul %77, %79, %cst_47 {dimension_numbers = #tpu.dot_dimension_numbers<[1], [0], [0], [1], [0, 0, 1, 1], [], []>} : vector<48x256xbf16>, vector<256x256xbf16>, vector<48x256xf32> -> vector<48x256xf32>
    %81 = arith.addf %75, %80 : vector<48x256xf32>
    %82 = vector.extract_strided_slice %0 {offsets = [0, 2, 0], sizes = [2, 24, 256], strides = [1, 1, 1]} : vector<2x32x256xbf16> to vector<2x24x256xbf16>
    %83 = vector.shape_cast %82 : vector<2x24x256xbf16> to vector<48x256xbf16>
    %c2_48 = arith.constant 2 : index
    %c0_49 = arith.constant 0 : index
    %c0_50 = arith.constant 0 : index
    %84 = vector.load %arg4[%c2_48, %c0_49, %c0_50] : memref<5x256x256xbf16, #tpu.memory_space<vmem>>, vector<1x256x256xbf16>
    %85 = vector.shape_cast %84 : vector<1x256x256xbf16> to vector<256x256xbf16>
    %cst_51 = arith.constant dense<0.000000e+00> : vector<48x256xf32>
    %86 = tpu.matmul %83, %85, %cst_51 {dimension_numbers = #tpu.dot_dimension_numbers<[1], [0], [0], [1], [0, 0, 1, 1], [], []>} : vector<48x256xbf16>, vector<256x256xbf16>, vector<48x256xf32> -> vector<48x256xf32>
    %87 = arith.addf %81, %86 : vector<48x256xf32>
    %88 = vector.extract_strided_slice %0 {offsets = [0, 3, 0], sizes = [2, 24, 256], strides = [1, 1, 1]} : vector<2x32x256xbf16> to vector<2x24x256xbf16>
    %89 = vector.shape_cast %88 : vector<2x24x256xbf16> to vector<48x256xbf16>
    %c3_52 = arith.constant 3 : index
    %c0_53 = arith.constant 0 : index
    %c0_54 = arith.constant 0 : index
    %90 = vector.load %arg4[%c3_52, %c0_53, %c0_54] : memref<5x256x256xbf16, #tpu.memory_space<vmem>>, vector<1x256x256xbf16>
    %91 = vector.shape_cast %90 : vector<1x256x256xbf16> to vector<256x256xbf16>
    %cst_55 = arith.constant dense<0.000000e+00> : vector<48x256xf32>
    %92 = tpu.matmul %89, %91, %cst_55 {dimension_numbers = #tpu.dot_dimension_numbers<[1], [0], [0], [1], [0, 0, 1, 1], [], []>} : vector<48x256xbf16>, vector<256x256xbf16>, vector<48x256xf32> -> vector<48x256xf32>
    %93 = arith.addf %87, %92 : vector<48x256xf32>
    %94 = vector.extract_strided_slice %0 {offsets = [0, 4, 0], sizes = [2, 24, 256], strides = [1, 1, 1]} : vector<2x32x256xbf16> to vector<2x24x256xbf16>
    %95 = vector.shape_cast %94 : vector<2x24x256xbf16> to vector<48x256xbf16>
    %c4 = arith.constant 4 : index
    %c0_56 = arith.constant 0 : index
    %c0_57 = arith.constant 0 : index
    %96 = vector.load %arg4[%c4, %c0_56, %c0_57] : memref<5x256x256xbf16, #tpu.memory_space<vmem>>, vector<1x256x256xbf16>
    %97 = vector.shape_cast %96 : vector<1x256x256xbf16> to vector<256x256xbf16>
    %cst_58 = arith.constant dense<0.000000e+00> : vector<48x256xf32>
    %98 = tpu.matmul %95, %97, %cst_58 {dimension_numbers = #tpu.dot_dimension_numbers<[1], [0], [0], [1], [0, 0, 1, 1], [], []>} : vector<48x256xbf16>, vector<256x256xbf16>, vector<48x256xf32> -> vector<48x256xf32>
    %99 = arith.addf %93, %98 : vector<48x256xf32>
    %100 = vector.broadcast %70 : vector<1x256xf32> to vector<48x256xf32>
    %101 = arith.addf %99, %100 : vector<48x256xf32>
    %cst_59 = arith.constant 0.000000e+00 : f32
    %102 = vector.broadcast %cst_59 : f32 to vector<48x256xf32>
    %103 = arith.maximumf %101, %102 : vector<48x256xf32>
    %104 = vector.shape_cast %103 : vector<48x256xf32> to vector<2x24x256xf32>
    %c16_i32_60 = arith.constant 16 : i32
    %105 = vector.broadcast %c16_i32_60 : i32 to vector<1x24x1xi32>
    %106 = arith.cmpi slt, %1, %105 : vector<1x24x1xi32>
    %cst_61 = arith.constant 0.000000e+00 : f32
    %107 = vector.shape_cast %106 : vector<1x24x1xi1> to vector<1x24x1xi1>
    %108 = vector.broadcast %107 : vector<1x24x1xi1> to vector<2x24x256xi1>
    %109 = vector.broadcast %cst_61 : f32 to vector<2x24x256xf32>
    %110 = arith.select %108, %104, %109 : vector<2x24x256xi1>, vector<2x24x256xf32>
    %cst_62 = arith.constant dense<0xFF800000> : vector<2x256xf32>
    %111 = vector.multi_reduction <maximumf>, %110, %cst_62 [1] : vector<2x24x256xf32> to vector<2x256xf32>
    %c0_63 = arith.constant 0 : index
    %c512_64 = arith.constant 512 : index
    %112 = vector.load %arg6[%c0_63, %c512_64] : memref<2x768xf32, #tpu.memory_space<vmem>>, vector<2x256xf32>
    tpu.vector_store %arg6[%c0_63, %c512_64], %111 {strides = array<i32>} : memref<2x768xf32, #tpu.memory_space<vmem>>, vector<2x256xf32>,
    return
  }
  func.func @transform_0(%arg0: i32) -> (i32, i32, i32) {
    %c0_i32 = arith.constant 0 : i32
    %c0_i32_0 = arith.constant 0 : i32
    %c0_i32_1 = arith.constant 0 : i32
    return %arg0, %c0_i32, %c0_i32_0 : i32, i32, i32
  }
  func.func @transform_1(%arg0: i32) -> (i32, i32, i32) {
    %c0_i32 = arith.constant 0 : i32
    %c0_i32_0 = arith.constant 0 : i32
    %c0_i32_1 = arith.constant 0 : i32
    %c0_i32_2 = arith.constant 0 : i32
    return %c0_i32, %c0_i32_0, %c0_i32_1 : i32, i32, i32
  }
  func.func @transform_2(%arg0: i32) -> (i32, i32, i32) {
    %c0_i32 = arith.constant 0 : i32
    %c0_i32_0 = arith.constant 0 : i32
    %c0_i32_1 = arith.constant 0 : i32
    %c0_i32_2 = arith.constant 0 : i32
    return %c0_i32, %c0_i32_0, %c0_i32_1 : i32, i32, i32
  }
  func.func @transform_3(%arg0: i32) -> (i32, i32, i32) {
    %c0_i32 = arith.constant 0 : i32
    %c0_i32_0 = arith.constant 0 : i32
    %c0_i32_1 = arith.constant 0 : i32
    %c0_i32_2 = arith.constant 0 : i32
    return %c0_i32, %c0_i32_0, %c0_i32_1 : i32, i32, i32
  }
  func.func @transform_4(%arg0: i32) -> (i32, i32) {
    %c0_i32 = arith.constant 0 : i32
    %c0_i32_0 = arith.constant 0 : i32
    %c0_i32_1 = arith.constant 0 : i32
    return %c0_i32, %c0_i32_0 : i32, i32
  }
  func.func @transform_5(%arg0: i32) -> (i32, i32) {
    %c0_i32 = arith.constant 0 : i32
    %c0_i32_0 = arith.constant 0 : i32
    return %arg0, %c0_i32 : i32, i32
  }
}

</mosaic_0001>

<llo_original>
// kernel: tpu_custom_call.1
$region0: #{tpu_custom_call.1}
  #allocation0 [shape = 'u32[]', space=smem, size = 0x4, offset = 0x4, fixed_abs, tag = 'smem constant byte address 0x4 - core index']
  #allocation1 [shape = 'u32[144,128]{1,0:T(1,128)}', space=vmem, size = 0x12000, scoped, tag = 'internal scratch']
  %s0 = inlined_call_operand.hbm [shape: bf16[2,32,256], index: 0, kind: input, shape index: {}]
  %s1 = inlined_call_operand.hbm [shape: bf16[3,256,256], index: 1, kind: input, shape index: {}]
  %s2 = inlined_call_operand.hbm [shape: bf16[4,256,256], index: 2, kind: input, shape index: {}]
  %s3 = inlined_call_operand.hbm [shape: bf16[5,256,256], index: 3, kind: input, shape index: {}]
  %s4 = inlined_call_operand.vmem [shape: f32[1,768], index: 4, kind: input, shape index: {}]
  %s5 = inlined_call_operand.hbm [shape: f32[2,768], index: 5, kind: output, shape index: {}]
  %s6 = sld [smem:[#allocation0]]
  $region46: #{tpu_custom_call.1} parent=0
    _
  %s8 = ssub.s32 1, %s6
  %s9 = scalar_select 0, %s8, %s6
  $region1: #{tpu_custom_call.1} parent=0
    #allocation2 [shape = 'u8[32768]{0}', space=vmem, size = 0x8000, scoped, tag = 'input window, operand 0, single buffered']
    #allocation3 [shape = 's32[1]{0}', space=sflag, size = 0x4, scoped, tag = 'scoped memory for tpu_custom_call.1']
    #allocation4 [shape = 's32[1]{0}', space=sflag, size = 0x4, scoped, tag = 'scoped memory for tpu_custom_call.1']
    #allocation5 [shape = 'u8[393216]{0}', space=vmem, size = 0x60000, scoped, tag = 'input window, operand 1, single buffered']
    #allocation6 [shape = 's32[1]{0}', space=sflag, size = 0x4, scoped, tag = 'scoped memory for tpu_custom_call.1']
    #allocation7 [shape = 'u8[524288]{0}', space=vmem, size = 0x80000, scoped, tag = 'input window, operand 2, single buffered']
    #allocation8 [shape = 'u8[655360]{0}', space=vmem, size = 0xa0000, scoped, tag = 'input window, operand 3, single buffered']
    #allocation9 [shape = 's32[1]{0}', space=sflag, size = 0x4, scoped, tag = 'scoped memory for tpu_custom_call.1']
    #allocation10 [shape = 'u8[6144]{0}', space=vmem, size = 0x1800, scoped, tag = 'output window, operand 0, single buffered']
    %10 = vsyncpa [#allocation3], 0
    %11 = vsyncpa [#allocation6], 0
    %12 = vsyncpa [#allocation9], 0
    %13 = vsyncpa [#allocation4], 0
    // Predicated region
    $region2: #{tpu_custom_call.1} parent=1 // pred_check
      _
    $region3: #{tpu_custom_call.1} parent=1 // pred_check_branch
      %15 = sbr.rel (0) target = $region5
    $region4: #{tpu_custom_call.1} parent=1 // pred_region
      %s17 = ssub.s32 1024, 1024
      %18 = vsyncadd [#allocation3], %s17
      %s19 = sshll.u32 [#allocation2], 4
      %s20 = int_to_ptr.vmem [resolvable:$true] %s19
      %25 = dma.hbm_to_vmem [thread:$0]  %s0, 1024, %s20, [#allocation3], 128, 128, 8
    $region5: #{tpu_custom_call.1} parent=1 // pred_fallthru
      _
    // Predicated region
    $region6: #{tpu_custom_call.1} parent=1 // pred_check
      _
    $region7: #{tpu_custom_call.1} parent=1 // pred_check_branch
      %27 = sbr.rel (0) target = $region9
    $region8: #{tpu_custom_call.1} parent=1 // pred_region
      %s29 = ssub.s32 12288, 12288
      %30 = vsyncadd [#allocation6], %s29
      %s31 = sshll.u32 [#allocation5], 4
      %s32 = int_to_ptr.vmem [resolvable:$true] %s31
      %37 = dma.hbm_to_vmem [thread:$0]  %s1, 12288, %s32, [#allocation6], 128, 128, 8
    $region9: #{tpu_custom_call.1} parent=1 // pred_fallthru
      _
    // Predicated region
    $region10: #{tpu_custom_call.1} parent=1 // pred_check
      _
    $region11: #{tpu_custom_call.1} parent=1 // pred_check_branch
      %39 = sbr.rel (0) target = $region13
    $region12: #{tpu_custom_call.1} parent=1 // pred_region
      %s41 = ssub.s32 16384, 16384
      %42 = vsyncadd [#allocation6], %s41
      %s43 = sshll.u32 [#allocation7], 4
      %s44 = int_to_ptr.vmem [resolvable:$true] %s43
      %49 = dma.hbm_to_vmem [thread:$0]  %s2, 16384, %s44, [#allocation6], 128, 128, 8
    $region13: #{tpu_custom_call.1} parent=1 // pred_fallthru
      _
    // Predicated region
    $region14: #{tpu_custom_call.1} parent=1 // pred_check
      _
    $region15: #{tpu_custom_call.1} parent=1 // pred_check_branch
      %51 = sbr.rel (0) target = $region17
    $region16: #{tpu_custom_call.1} parent=1 // pred_region
      %s53 = ssub.s32 20480, 20480
      %54 = vsyncadd [#allocation9], %s53
      %s55 = sshll.u32 [#allocation8], 4
      %s56 = int_to_ptr.vmem [resolvable:$true] %s55
      %61 = dma.hbm_to_vmem [thread:$0]  %s3, 20480, %s56, [#allocation9], 128, 128, 8
    $region17: #{tpu_custom_call.1} parent=1 // pred_fallthru
      _
    // Predicated region
    $region18: #{tpu_custom_call.1} parent=1 // pred_check
      _
    $region19: #{tpu_custom_call.1} parent=1 // pred_check_branch
      %63 = sbr.rel (0) target = $region21
    $region20: #{tpu_custom_call.1} parent=1 // pred_region
      _
    $region21: #{tpu_custom_call.1} parent=1 // pred_fallthru
      _
    // Predicated region
    $region22: #{tpu_custom_call.1} parent=1 // pred_check
      _
    $region23: #{tpu_custom_call.1} parent=1 // pred_check_branch
      %65 = sbr.rel (0) target = $region25
    $region24: #{tpu_custom_call.1} parent=1 // pred_region
      %66 = dma.done [#allocation3], 1024
    $region25: #{tpu_custom_call.1} parent=1 // pred_fallthru
      _
    // Predicated region
    $region26: #{tpu_custom_call.1} parent=1 // pred_check
      _
    $region27: #{tpu_custom_call.1} parent=1 // pred_check_branch
      %68 = sbr.rel (0) target = $region29
    $region28: #{tpu_custom_call.1} parent=1 // pred_region
      %69 = dma.done [#allocation6], 12288
    $region29: #{tpu_custom_call.1} parent=1 // pred_fallthru
      _
    // Predicated region
    $region30: #{tpu_custom_call.1} parent=1 // pred_check
      _
    $region31: #{tpu_custom_call.1} parent=1 // pred_check_branch
      %71 = sbr.rel (0) target = $region33
    $region32: #{tpu_custom_call.1} parent=1 // pred_region
      %72 = dma.done [#allocation6], 16384
    $region33: #{tpu_custom_call.1} parent=1 // pred_fallthru
      _
    // Predicated region
    $region34: #{tpu_custom_call.1} parent=1 // pred_check
      _
    $region35: #{tpu_custom_call.1} parent=1 // pred_check_branch
      %74 = sbr.rel (0) target = $region37
    $region36: #{tpu_custom_call.1} parent=1 // pred_region
      %75 = dma.done [#allocation9], 20480
    $region37: #{tpu_custom_call.1} parent=1 // pred_fallthru
      _
    %v76 = vld [vmem:[#allocation2] sm:$0xff]
    %v77 = vld [vmem:[#allocation2 + $0x8] sm:$0xff]
    %v78 = vld [vmem:[#allocation2 + $0x10] sm:$0xff]
    %v79 = vld [vmem:[#allocation2 + $0x18] sm:$0xff]
    %v80 = vld [vmem:[#allocation2 + $0x20] sm:$0xff]
    %v81 = vld [vmem:[#allocation2 + $0x28] sm:$0xff]
    %v82 = vld [vmem:[#allocation2 + $0x30] sm:$0xff]
    %v83 = vld [vmem:[#allocation2 + $0x38] sm:$0xff]
    %v84 = vlaneseq
    %v85 = vshrl.u32 %v84, 7
    %v86 = vadd.s32 %v85, 8
    %v87 = vadd.s32 %v85, 16
    %v88 = vld [vmem:[%s4] sm:$0x3]
    %vm89 = vsmask.f32 3328
    %vm90 = vsmask.f32 7440
    %vm91 = vmor %vm89, %vm90
    %v93 = vshrl.u32 %v76, 16
    %v95 = vrot.slane %v93, 4
    %v96 = vshll.u32 %v76, 16
    %v98 = vrot.slane %v96, 5
    %v99 = vor.u32 %v95, %v98
    %v100 = vrot.slane %v99, 4
    %v102 = vshll.u32 %v77, 16
    %v104 = vrot.slane %v102, 5
    %v105 = vsel %vm91, %v100, %v104
    %v106 = vshrl.u32 %v77, 16
    %v108 = vrot.slane %v106, 4
    %v109 = vor.u32 %v108, %v104
    %v110 = vrot.slane %v109, 4
    %v112 = vshll.u32 %v78, 16
    %v114 = vrot.slane %v112, 5
    %v115 = vsel %vm91, %v110, %v114
    %v116 = vshrl.u32 %v78, 16
    %v118 = vrot.slane %v116, 4
    %v119 = vor.u32 %v118, %v114
    %v120 = vrot.slane %v119, 4
    %v122 = vshll.u32 %v79, 16
    %v124 = vrot.slane %v122, 5
    %v125 = vsel %vm91, %v120, %v124
    %v127 = vshrl.u32 %v80, 16
    %v129 = vrot.slane %v127, 4
    %v130 = vshll.u32 %v80, 16
    %v132 = vrot.slane %v130, 5
    %v133 = vor.u32 %v129, %v132
    %v134 = vrot.slane %v133, 4
    %v136 = vshll.u32 %v81, 16
    %v138 = vrot.slane %v136, 5
    %v139 = vsel %vm91, %v134, %v138
    %v140 = vshrl.u32 %v81, 16
    %v142 = vrot.slane %v140, 4
    %v143 = vor.u32 %v142, %v138
    %v144 = vrot.slane %v143, 4
    %v146 = vshll.u32 %v82, 16
    %v148 = vrot.slane %v146, 5
    %v149 = vsel %vm91, %v144, %v148
    %v150 = vshrl.u32 %v82, 16
    %v152 = vrot.slane %v150, 4
    %v153 = vor.u32 %v152, %v148
    %v154 = vrot.slane %v153, 4
    %v156 = vshll.u32 %v83, 16
    %v158 = vrot.slane %v156, 5
    %v159 = vsel %vm91, %v154, %v158
    %v160 = vld [vmem:[#allocation5] sm:$0xff]
    %v161 = vld [vmem:[#allocation5 + $0x8] sm:$0xff]
    %v162 = vld [vmem:[#allocation5 + $0x10] sm:$0xff]
    %v163 = vld [vmem:[#allocation5 + $0x18] sm:$0xff]
    %v164 = vld [vmem:[#allocation5 + $0x20] sm:$0xff]
    %v165 = vld [vmem:[#allocation5 + $0x28] sm:$0xff]
    %v166 = vld [vmem:[#allocation5 + $0x30] sm:$0xff]
    %v167 = vld [vmem:[#allocation5 + $0x38] sm:$0xff]
    %v168 = vld [vmem:[#allocation5 + $0x40] sm:$0xff]
    %v169 = vld [vmem:[#allocation5 + $0x48] sm:$0xff]
    %v170 = vld [vmem:[#allocation5 + $0x50] sm:$0xff]
    %v171 = vld [vmem:[#allocation5 + $0x58] sm:$0xff]
    %v172 = vld [vmem:[#allocation5 + $0x60] sm:$0xff]
    %v173 = vld [vmem:[#allocation5 + $0x68] sm:$0xff]
    %v174 = vld [vmem:[#allocation5 + $0x70] sm:$0xff]
    %v175 = vld [vmem:[#allocation5 + $0x78] sm:$0xff]
    %v176 = vld [vmem:[#allocation5 + $0x80] sm:$0xff]
    %v177 = vld [vmem:[#allocation5 + $0x88] sm:$0xff]
    %v178 = vld [vmem:[#allocation5 + $0x90] sm:$0xff]
    %v179 = vld [vmem:[#allocation5 + $0x98] sm:$0xff]
    %v180 = vld [vmem:[#allocation5 + $0xa0] sm:$0xff]
    %v181 = vld [vmem:[#allocation5 + $0xa8] sm:$0xff]
    %v182 = vld [vmem:[#allocation5 + $0xb0] sm:$0xff]
    %v183 = vld [vmem:[#allocation5 + $0xb8] sm:$0xff]
    %v184 = vld [vmem:[#allocation5 + $0xc0] sm:$0xff]
    %v185 = vld [vmem:[#allocation5 + $0xc8] sm:$0xff]
    %v186 = vld [vmem:[#allocation5 + $0xd0] sm:$0xff]
    %v187 = vld [vmem:[#allocation5 + $0xd8] sm:$0xff]
    %v188 = vld [vmem:[#allocation5 + $0xe0] sm:$0xff]
    %v189 = vld [vmem:[#allocation5 + $0xe8] sm:$0xff]
    %v190 = vld [vmem:[#allocation5 + $0xf0] sm:$0xff]
    %v191 = vld [vmem:[#allocation5 + $0xf8] sm:$0xff]
    %vm200 = vcmask 1042432
    %vm201 = vcmask 1046532
    %vm202 = vmor %vm200, %vm201
    %v203 = vrot.slane %v76, 5
    %v204 = vrot.slane %v203, 4
    %v205 = vrot.slane %v77, 5
    %v206 = vsel %vm202, %v204, %v205
    %v207 = vrot.slane %v205, 4
    %v208 = vrot.slane %v78, 5
    %v209 = vsel %vm202, %v207, %v208
    %v210 = vrot.slane %v208, 4
    %v211 = vrot.slane %v79, 5
    %v212 = vsel %vm202, %v210, %v211
    %v213 = vrot.slane %v80, 5
    %v214 = vrot.slane %v213, 4
    %v215 = vrot.slane %v81, 5
    %v216 = vsel %vm202, %v214, %v215
    %v217 = vrot.slane %v215, 4
    %v218 = vrot.slane %v82, 5
    %v219 = vsel %vm202, %v217, %v218
    %v220 = vrot.slane %v218, 4
    %v221 = vrot.slane %v83, 5
    %v222 = vsel %vm202, %v220, %v221
    %s223 = scalar_lea.vmem [#allocation5], 256
    %v224 = vld [vmem:[%s223] sm:$0xff]
    %v225 = vld [vmem:[%s223 + $0x8] sm:$0xff]
    %v226 = vld [vmem:[%s223 + $0x10] sm:$0xff]
    %v227 = vld [vmem:[%s223 + $0x18] sm:$0xff]
    %v228 = vld [vmem:[%s223 + $0x20] sm:$0xff]
    %v229 = vld [vmem:[%s223 + $0x28] sm:$0xff]
    %v230 = vld [vmem:[%s223 + $0x30] sm:$0xff]
    %v231 = vld [vmem:[%s223 + $0x38] sm:$0xff]
    %v232 = vld [vmem:[%s223 + $0x40] sm:$0xff]
    %v233 = vld [vmem:[%s223 + $0x48] sm:$0xff]
    %v234 = vld [vmem:[%s223 + $0x50] sm:$0xff]
    %v235 = vld [vmem:[%s223 + $0x58] sm:$0xff]
    %v236 = vld [vmem:[%s223 + $0x60] sm:$0xff]
    %v237 = vld [vmem:[%s223 + $0x68] sm:$0xff]
    %v238 = vld [vmem:[%s223 + $0x70] sm:$0xff]
    %v239 = vld [vmem:[%s223 + $0x78] sm:$0xff]
    %v240 = vld [vmem:[%s223 + $0x80] sm:$0xff]
    %v241 = vld [vmem:[%s223 + $0x88] sm:$0xff]
    %v242 = vld [vmem:[%s223 + $0x90] sm:$0xff]
    %v243 = vld [vmem:[%s223 + $0x98] sm:$0xff]
    %v244 = vld [vmem:[%s223 + $0xa0] sm:$0xff]
    %v245 = vld [vmem:[%s223 + $0xa8] sm:$0xff]
    %v246 = vld [vmem:[%s223 + $0xb0] sm:$0xff]
    %v247 = vld [vmem:[%s223 + $0xb8] sm:$0xff]
    %v248 = vld [vmem:[%s223 + $0xc0] sm:$0xff]
    %v249 = vld [vmem:[%s223 + $0xc8] sm:$0xff]
    %v250 = vld [vmem:[%s223 + $0xd0] sm:$0xff]
    %v251 = vld [vmem:[%s223 + $0xd8] sm:$0xff]
    %v252 = vld [vmem:[%s223 + $0xe0] sm:$0xff]
    %v253 = vld [vmem:[%s223 + $0xe8] sm:$0xff]
    %v254 = vld [vmem:[%s223 + $0xf0] sm:$0xff]
    %v255 = vld [vmem:[%s223 + $0xf8] sm:$0xff]
    %v256 = vunpack.c.l.b16 %v206
    %v257 = vunpack.c.h.b16 %v206
    %v258 = vunpack.c.l.b16 %v209
    %v259 = vunpack.c.h.b16 %v209
    %v260 = vunpack.c.l.b16 %v212
    %v261 = vunpack.c.h.b16 %v212
    %v262 = vunpack.c.l.b16 %v216
    %v263 = vunpack.c.h.b16 %v216
    %v264 = vunpack.c.l.b16 %v219
    %v265 = vunpack.c.h.b16 %v219
    %v266 = vunpack.c.l.b16 %v222
    %v267 = vunpack.c.h.b16 %v222
    %v268 = vpack.c.b16 %v258, %v256
    %v269 = vpack.c.b16 %v259, %v257
    %v270 = vpack.c.b16 %v262, %v260
    %v271 = vpack.c.b16 %v263, %v261
    %v272 = vpack.c.b16 %v266, %v264
    %v273 = vpack.c.b16 %v267, %v265
    %v312 = vunpack.c.l.b16 %v224
    %v313 = vunpack.c.h.b16 %v224
    %v314 = vunpack.c.l.b16 %v225
    %v315 = vunpack.c.h.b16 %v225
    %v316 = vunpack.c.l.b16 %v226
    %v317 = vunpack.c.h.b16 %v226
    %v318 = vunpack.c.l.b16 %v227
    %v319 = vunpack.c.h.b16 %v227
    %v320 = vunpack.c.l.b16 %v228
    %v321 = vunpack.c.h.b16 %v228
    %v322 = vunpack.c.l.b16 %v229
    %v323 = vunpack.c.h.b16 %v229
    %v324 = vunpack.c.l.b16 %v230
    %v325 = vunpack.c.h.b16 %v230
    %v326 = vunpack.c.l.b16 %v231
    %v327 = vunpack.c.h.b16 %v231
    %v328 = vunpack.c.l.b16 %v232
    %v329 = vunpack.c.h.b16 %v232
    %v330 = vunpack.c.l.b16 %v233
    %v331 = vunpack.c.h.b16 %v233
    %v332 = vunpack.c.l.b16 %v234
    %v333 = vunpack.c.h.b16 %v234
    %v334 = vunpack.c.l.b16 %v235
    %v335 = vunpack.c.h.b16 %v235
    %v336 = vunpack.c.l.b16 %v236
    %v337 = vunpack.c.h.b16 %v236
    %v338 = vunpack.c.l.b16 %v237
    %v339 = vunpack.c.h.b16 %v237
    %v340 = vunpack.c.l.b16 %v238
    %v341 = vunpack.c.h.b16 %v238
    %v342 = vunpack.c.l.b16 %v239
    %v343 = vunpack.c.h.b16 %v239
    %v344 = vunpack.c.l.b16 %v240
    %v345 = vunpack.c.h.b16 %v240
    %v346 = vunpack.c.l.b16 %v241
    %v347 = vunpack.c.h.b16 %v241
    %v348 = vunpack.c.l.b16 %v242
    %v349 = vunpack.c.h.b16 %v242
    %v350 = vunpack.c.l.b16 %v243
    %v351 = vunpack.c.h.b16 %v243
    %v352 = vunpack.c.l.b16 %v244
    %v353 = vunpack.c.h.b16 %v244
    %v354 = vunpack.c.l.b16 %v245
    %v355 = vunpack.c.h.b16 %v245
    %v356 = vunpack.c.l.b16 %v246
    %v357 = vunpack.c.h.b16 %v246
    %v358 = vunpack.c.l.b16 %v247
    %v359 = vunpack.c.h.b16 %v247
    %v360 = vunpack.c.l.b16 %v248
    %v361 = vunpack.c.h.b16 %v248
    %v362 = vunpack.c.l.b16 %v249
    %v363 = vunpack.c.h.b16 %v249
    %v364 = vunpack.c.l.b16 %v250
    %v365 = vunpack.c.h.b16 %v250
    %v366 = vunpack.c.l.b16 %v251
    %v367 = vunpack.c.h.b16 %v251
    %v368 = vunpack.c.l.b16 %v252
    %v369 = vunpack.c.h.b16 %v252
    %v370 = vunpack.c.l.b16 %v253
    %v371 = vunpack.c.h.b16 %v253
    %v372 = vunpack.c.l.b16 %v254
    %v373 = vunpack.c.h.b16 %v254
    %v374 = vunpack.c.l.b16 %v255
    %v375 = vunpack.c.h.b16 %v255
    %v376 = vpack.c.b16 %v314, %v312
    %v377 = vpack.c.b16 %v315, %v313
    %v378 = vpack.c.b16 %v318, %v316
    %v379 = vpack.c.b16 %v319, %v317
    %v380 = vpack.c.b16 %v322, %v320
    %v381 = vpack.c.b16 %v323, %v321
    %v382 = vpack.c.b16 %v326, %v324
    %v383 = vpack.c.b16 %v327, %v325
    %v384 = vpack.c.b16 %v330, %v328
    %v385 = vpack.c.b16 %v331, %v329
    %v386 = vpack.c.b16 %v334, %v332
    %v387 = vpack.c.b16 %v335, %v333
    %v388 = vpack.c.b16 %v338, %v336
    %v389 = vpack.c.b16 %v339, %v337
    %v390 = vpack.c.b16 %v342, %v340
    %v391 = vpack.c.b16 %v343, %v341
    %v392 = vpack.c.b16 %v346, %v344
    %v393 = vpack.c.b16 %v347, %v345
    %v394 = vpack.c.b16 %v350, %v348
    %v395 = vpack.c.b16 %v351, %v349
    %v396 = vpack.c.b16 %v354, %v352
    %v397 = vpack.c.b16 %v355, %v353
    %v398 = vpack.c.b16 %v358, %v356
    %v399 = vpack.c.b16 %v359, %v357
    %v400 = vpack.c.b16 %v362, %v360
    %v401 = vpack.c.b16 %v363, %v361
    %v402 = vpack.c.b16 %v366, %v364
    %v403 = vpack.c.b16 %v367, %v365
    %v404 = vpack.c.b16 %v370, %v368
    %v405 = vpack.c.b16 %v371, %v369
    %v406 = vpack.c.b16 %v374, %v372
    %v407 = vpack.c.b16 %v375, %v373
    %440 = vmatprep.subr.bf16.mxu0 %v377
    %441 = vmatpush1.bf16.msra.mxu0 %v376
    %442 = vmatprep.subr.bf16.mxu0 %v379
    %443 = vmatpush1.bf16.msra.mxu0 %v378
    %444 = vmatprep.subr.bf16.mxu0 %v381
    %445 = vmatpush1.bf16.msra.mxu0 %v380
    %446 = vmatprep.subr.bf16.mxu0 %v383
    %447 = vmatpush1.bf16.msra.mxu0 %v382
    %448 = vmatprep.subr.bf16.mxu0 %v385
    %449 = vmatpush1.bf16.msra.mxu0 %v384
    %450 = vmatprep.subr.bf16.mxu0 %v387
    %451 = vmatpush1.bf16.msra.mxu0 %v386
    %452 = vmatprep.subr.bf16.mxu0 %v389
    %453 = vmatpush1.bf16.msra.mxu0 %v388
    %454 = vmatprep.subr.bf16.mxu0 %v391
    %455 = vmatpush1.bf16.msra.mxu0 %v390
    %456 = vmatprep.subr.bf16.mxu0 %v393
    %457 = vmatpush1.bf16.msra.mxu0 %v392
    %458 = vmatprep.subr.bf16.mxu0 %v395
    %459 = vmatpush1.bf16.msra.mxu0 %v394
    %460 = vmatprep.subr.bf16.mxu0 %v397
    %461 = vmatpush1.bf16.msra.mxu0 %v396
    %462 = vmatprep.subr.bf16.mxu0 %v399
    %463 = vmatpush1.bf16.msra.mxu0 %v398
    %464 = vmatprep.subr.bf16.mxu0 %v401
    %465 = vmatpush1.bf16.msra.mxu0 %v400
    %466 = vmatprep.subr.bf16.mxu0 %v403
    %467 = vmatpush1.bf16.msra.mxu0 %v402
    %468 = vmatprep.subr.bf16.mxu0 %v405
    %469 = vmatpush1.bf16.msra.mxu0 %v404
    %470 = vmatprep.subr.bf16.mxu0 %v407
    %471 = vmatpush1.bf16.msra.mxu0 %v406
    %472 = vmatprep.mubr.bf16.mxu0 %v269
    %473 = vmatmul.mubr.bf16.gmra.mrb[0].mxu0 %v268
    %v474 = vpop.f32.mrb[0].mxu0
    %v475 = vadd.f32 0.0, %v474
    %v476 = vpop.f32.mrb[0].mxu0
    %v477 = vadd.f32 0.0, %v476
    %v478 = vpop.f32.mrb[0].mxu0
    %v479 = vadd.f32 0.0, %v478
    %v480 = vpop.f32.mrb[0].mxu0
    %v481 = vadd.f32 0.0, %v480
    %482 = vmatprep.mubr.bf16.mxu0 %v271
    %483 = vmatmul.mubr.bf16.gmra.mrb[0].mxu0 %v270
    %v484 = vpop.f32.mrb[0].mxu0
    %v485 = vadd.f32 0.0, %v484
    %v486 = vpop.f32.mrb[0].mxu0
    %v487 = vadd.f32 0.0, %v486
    %v488 = vpop.f32.mrb[0].mxu0
    %v489 = vadd.f32 0.0, %v488
    %v490 = vpop.f32.mrb[0].mxu0
    %v491 = vadd.f32 0.0, %v490
    %492 = vmatprep.mubr.bf16.mxu0 %v273
    %493 = vmatmul.mubr.bf16.gmra.mrb[0].mxu0 %v272
    %v494 = vpop.f32.mrb[0].mxu0
    %v495 = vadd.f32 0.0, %v494
    %v496 = vpop.f32.mrb[0].mxu0
    %v497 = vadd.f32 0.0, %v496
    %v498 = vpop.f32.mrb[0].mxu0
    %v499 = vadd.f32 0.0, %v498
    %v500 = vpop.f32.mrb[0].mxu0
    %v501 = vadd.f32 0.0, %v500
    %502 = vdwg.mxu0
    %v503 = vunpack.c.l.b16 %v105
    %v504 = vunpack.c.h.b16 %v105
    %v505 = vunpack.c.l.b16 %v115
    %v506 = vunpack.c.h.b16 %v115
    %v507 = vunpack.c.l.b16 %v125
    %v508 = vunpack.c.h.b16 %v125
    %v509 = vunpack.c.l.b16 %v139
    %v510 = vunpack.c.h.b16 %v139
    %v511 = vunpack.c.l.b16 %v149
    %v512 = vunpack.c.h.b16 %v149
    %v513 = vunpack.c.l.b16 %v159
    %v514 = vunpack.c.h.b16 %v159
    %v515 = vpack.c.b16 %v505, %v503
    %v516 = vpack.c.b16 %v506, %v504
    %v517 = vpack.c.b16 %v509, %v507
    %v518 = vpack.c.b16 %v510, %v508
    %v519 = vpack.c.b16 %v513, %v511
    %v520 = vpack.c.b16 %v514, %v512
    %v559 = vunpack.c.l.b16 %v160
    %v560 = vunpack.c.h.b16 %v160
    %v561 = vunpack.c.l.b16 %v161
    %v562 = vunpack.c.h.b16 %v161
    %v563 = vunpack.c.l.b16 %v162
    %v564 = vunpack.c.h.b16 %v162
    %v565 = vunpack.c.l.b16 %v163
    %v566 = vunpack.c.h.b16 %v163
    %v567 = vunpack.c.l.b16 %v164
    %v568 = vunpack.c.h.b16 %v164
    %v569 = vunpack.c.l.b16 %v165
    %v570 = vunpack.c.h.b16 %v165
    %v571 = vunpack.c.l.b16 %v166
    %v572 = vunpack.c.h.b16 %v166
    %v573 = vunpack.c.l.b16 %v167
    %v574 = vunpack.c.h.b16 %v167
    %v575 = vunpack.c.l.b16 %v168
    %v576 = vunpack.c.h.b16 %v168
    %v577 = vunpack.c.l.b16 %v169
    %v578 = vunpack.c.h.b16 %v169
    %v579 = vunpack.c.l.b16 %v170
    %v580 = vunpack.c.h.b16 %v170
    %v581 = vunpack.c.l.b16 %v171
    %v582 = vunpack.c.h.b16 %v171
    %v583 = vunpack.c.l.b16 %v172
    %v584 = vunpack.c.h.b16 %v172
    %v585 = vunpack.c.l.b16 %v173
    %v586 = vunpack.c.h.b16 %v173
    %v587 = vunpack.c.l.b16 %v174
    %v588 = vunpack.c.h.b16 %v174
    %v589 = vunpack.c.l.b16 %v175
    %v590 = vunpack.c.h.b16 %v175
    %v591 = vunpack.c.l.b16 %v176
    %v592 = vunpack.c.h.b16 %v176
    %v593 = vunpack.c.l.b16 %v177
    %v594 = vunpack.c.h.b16 %v177
    %v595 = vunpack.c.l.b16 %v178
    %v596 = vunpack.c.h.b16 %v178
    %v597 = vunpack.c.l.b16 %v179
    %v598 = vunpack.c.h.b16 %v179
    %v599 = vunpack.c.l.b16 %v180
    %v600 = vunpack.c.h.b16 %v180
    %v601 = vunpack.c.l.b16 %v181
    %v602 = vunpack.c.h.b16 %v181
    %v603 = vunpack.c.l.b16 %v182
    %v604 = vunpack.c.h.b16 %v182
    %v605 = vunpack.c.l.b16 %v183
    %v606 = vunpack.c.h.b16 %v183
    %v607 = vunpack.c.l.b16 %v184
    %v608 = vunpack.c.h.b16 %v184
    %v609 = vunpack.c.l.b16 %v185
    %v610 = vunpack.c.h.b16 %v185
    %v611 = vunpack.c.l.b16 %v186
    %v612 = vunpack.c.h.b16 %v186
    %v613 = vunpack.c.l.b16 %v187
    %v614 = vunpack.c.h.b16 %v187
    %v615 = vunpack.c.l.b16 %v188
    %v616 = vunpack.c.h.b16 %v188
    %v617 = vunpack.c.l.b16 %v189
    %v618 = vunpack.c.h.b16 %v189
    %v619 = vunpack.c.l.b16 %v190
    %v620 = vunpack.c.h.b16 %v190
    %v621 = vunpack.c.l.b16 %v191
    %v622 = vunpack.c.h.b16 %v191
    %v623 = vpack.c.b16 %v561, %v559
    %v624 = vpack.c.b16 %v562, %v560
    %v625 = vpack.c.b16 %v565, %v563
    %v626 = vpack.c.b16 %v566, %v564
    %v627 = vpack.c.b16 %v569, %v567
    %v628 = vpack.c.b16 %v570, %v568
    %v629 = vpack.c.b16 %v573, %v571
    %v630 = vpack.c.b16 %v574, %v572
    %v631 = vpack.c.b16 %v577, %v575
    %v632 = vpack.c.b16 %v578, %v576
    %v633 = vpack.c.b16 %v581, %v579
    %v634 = vpack.c.b16 %v582, %v580
    %v635 = vpack.c.b16 %v585, %v583
    %v636 = vpack.c.b16 %v586, %v584
    %v637 = vpack.c.b16 %v589, %v587
    %v638 = vpack.c.b16 %v590, %v588
    %v639 = vpack.c.b16 %v593, %v591
    %v640 = vpack.c.b16 %v594, %v592
    %v641 = vpack.c.b16 %v597, %v595
    %v642 = vpack.c.b16 %v598, %v596
    %v643 = vpack.c.b16 %v601, %v599
    %v644 = vpack.c.b16 %v602, %v600
    %v645 = vpack.c.b16 %v605, %v603
    %v646 = vpack.c.b16 %v606, %v604
    %v647 = vpack.c.b16 %v609, %v607
    %v648 = vpack.c.b16 %v610, %v608
    %v649 = vpack.c.b16 %v613, %v611
    %v650 = vpack.c.b16 %v614, %v612
    %v651 = vpack.c.b16 %v617, %v615
    %v652 = vpack.c.b16 %v618, %v616
    %v653 = vpack.c.b16 %v621, %v619
    %v654 = vpack.c.b16 %v622, %v620
    %687 = vmatprep.subr.bf16.mxu0 %v624
    %688 = vmatpush1.bf16.msra.mxu0 %v623
    %689 = vmatprep.subr.bf16.mxu0 %v626
    %690 = vmatpush1.bf16.msra.mxu0 %v625
    %691 = vmatprep.subr.bf16.mxu0 %v628
    %692 = vmatpush1.bf16.msra.mxu0 %v627
    %693 = vmatprep.subr.bf16.mxu0 %v630
    %694 = vmatpush1.bf16.msra.mxu0 %v629
    %695 = vmatprep.subr.bf16.mxu0 %v632
    %696 = vmatpush1.bf16.msra.mxu0 %v631
    %697 = vmatprep.subr.bf16.mxu0 %v634
    %698 = vmatpush1.bf16.msra.mxu0 %v633
    %699 = vmatprep.subr.bf16.mxu0 %v636
    %700 = vmatpush1.bf16.msra.mxu0 %v635
    %701 = vmatprep.subr.bf16.mxu0 %v638
    %702 = vmatpush1.bf16.msra.mxu0 %v637
    %703 = vmatprep.subr.bf16.mxu0 %v640
    %704 = vmatpush1.bf16.msra.mxu0 %v639
    %705 = vmatprep.subr.bf16.mxu0 %v642
    %706 = vmatpush1.bf16.msra.mxu0 %v641
    %707 = vmatprep.subr.bf16.mxu0 %v644
    %708 = vmatpush1.bf16.msra.mxu0 %v643
    %709 = vmatprep.subr.bf16.mxu0 %v646
    %710 = vmatpush1.bf16.msra.mxu0 %v645
    %711 = vmatprep.subr.bf16.mxu0 %v648
    %712 = vmatpush1.bf16.msra.mxu0 %v647
    %713 = vmatprep.subr.bf16.mxu0 %v650
    %714 = vmatpush1.bf16.msra.mxu0 %v649
    %715 = vmatprep.subr.bf16.mxu0 %v652
    %716 = vmatpush1.bf16.msra.mxu0 %v651
    %717 = vmatprep.subr.bf16.mxu0 %v654
    %718 = vmatpush1.bf16.msra.mxu0 %v653
    %719 = vmatprep.mubr.bf16.mxu0 %v516
    %720 = vmatmul.mubr.bf16.gmra.mrb[0].mxu0 %v515
    %v721 = vpop.f32.mrb[0].mxu0
    %v722 = vadd.f32 %v475, %v721
    %v723 = vpop.f32.mrb[0].mxu0
    %v724 = vadd.f32 %v477, %v723
    %v725 = vpop.f32.mrb[0].mxu0
    %v726 = vadd.f32 %v479, %v725
    %v727 = vpop.f32.mrb[0].mxu0
    %v728 = vadd.f32 %v481, %v727
    %729 = vmatprep.mubr.bf16.mxu0 %v518
    %730 = vmatmul.mubr.bf16.gmra.mrb[0].mxu0 %v517
    %v731 = vpop.f32.mrb[0].mxu0
    %v732 = vadd.f32 %v485, %v731
    %v733 = vpop.f32.mrb[0].mxu0
    %v734 = vadd.f32 %v487, %v733
    %v735 = vpop.f32.mrb[0].mxu0
    %v736 = vadd.f32 %v489, %v735
    %v737 = vpop.f32.mrb[0].mxu0
    %v738 = vadd.f32 %v491, %v737
    %739 = vmatprep.mubr.bf16.mxu0 %v520
    %740 = vmatmul.mubr.bf16.gmra.mrb[0].mxu0 %v519
    %v741 = vpop.f32.mrb[0].mxu0
    %v742 = vadd.f32 %v495, %v741
    %v743 = vpop.f32.mrb[0].mxu0
    %v744 = vadd.f32 %v497, %v743
    %v745 = vpop.f32.mrb[0].mxu0
    %v746 = vadd.f32 %v499, %v745
    %v747 = vpop.f32.mrb[0].mxu0
    %v748 = vadd.f32 %v501, %v747
    %749 = vdwg.mxu0
    %vm750 = vsmask.f32 2304
    %vm751 = vsmask.f32 6416
    %vm752 = vmor %vm750, %vm751
    %v753 = vrot.slane %v93, 5
    %v754 = vrot.slane %v96, 6
    %v755 = vor.u32 %v753, %v754
    %v756 = vrot.slane %v755, 4
    %v757 = vrot.slane %v106, 5
    %v758 = vrot.slane %v102, 6
    %v759 = vor.u32 %v757, %v758
    %v760 = vsel %vm752, %v756, %v759
    %v761 = vrot.slane %v759, 4
    %v762 = vrot.slane %v116, 5
    %v763 = vrot.slane %v112, 6
    %v764 = vor.u32 %v762, %v763
    %v765 = vsel %vm752, %v761, %v764
    %v766 = vrot.slane %v764, 4
    %v767 = vshrl.u32 %v79, 16
    %v769 = vrot.slane %v767, 5
    %v770 = vrot.slane %v122, 6
    %v771 = vor.u32 %v769, %v770
    %v772 = vsel %vm752, %v766, %v771
    %v773 = vrot.slane %v127, 5
    %v774 = vrot.slane %v130, 6
    %v775 = vor.u32 %v773, %v774
    %v776 = vrot.slane %v775, 4
    %v777 = vrot.slane %v140, 5
    %v778 = vrot.slane %v136, 6
    %v779 = vor.u32 %v777, %v778
    %v780 = vsel %vm752, %v776, %v779
    %v781 = vrot.slane %v779, 4
    %v782 = vrot.slane %v150, 5
    %v783 = vrot.slane %v146, 6
    %v784 = vor.u32 %v782, %v783
    %v785 = vsel %vm752, %v781, %v784
    %v786 = vrot.slane %v784, 4
    %v787 = vshrl.u32 %v83, 16
    %v789 = vrot.slane %v787, 5
    %v790 = vrot.slane %v156, 6
    %v791 = vor.u32 %v789, %v790
    %v792 = vsel %vm752, %v786, %v791
    %s793 = scalar_lea.vmem [#allocation5], 512
    %v794 = vld [vmem:[%s793] sm:$0xff]
    %v795 = vld [vmem:[%s793 + $0x8] sm:$0xff]
    %v796 = vld [vmem:[%s793 + $0x10] sm:$0xff]
    %v797 = vld [vmem:[%s793 + $0x18] sm:$0xff]
    %v798 = vld [vmem:[%s793 + $0x20] sm:$0xff]
    %v799 = vld [vmem:[%s793 + $0x28] sm:$0xff]
    %v800 = vld [vmem:[%s793 + $0x30] sm:$0xff]
    %v801 = vld [vmem:[%s793 + $0x38] sm:$0xff]
    %v802 = vld [vmem:[%s793 + $0x40] sm:$0xff]
    %v803 = vld [vmem:[%s793 + $0x48] sm:$0xff]
    %v804 = vld [vmem:[%s793 + $0x50] sm:$0xff]
    %v805 = vld [vmem:[%s793 + $0x58] sm:$0xff]
    %v806 = vld [vmem:[%s793 + $0x60] sm:$0xff]
    %v807 = vld [vmem:[%s793 + $0x68] sm:$0xff]
    %v808 = vld [vmem:[%s793 + $0x70] sm:$0xff]
    %v809 = vld [vmem:[%s793 + $0x78] sm:$0xff]
    %v810 = vld [vmem:[%s793 + $0x80] sm:$0xff]
    %v811 = vld [vmem:[%s793 + $0x88] sm:$0xff]
    %v812 = vld [vmem:[%s793 + $0x90] sm:$0xff]
    %v813 = vld [vmem:[%s793 + $0x98] sm:$0xff]
    %v814 = vld [vmem:[%s793 + $0xa0] sm:$0xff]
    %v815 = vld [vmem:[%s793 + $0xa8] sm:$0xff]
    %v816 = vld [vmem:[%s793 + $0xb0] sm:$0xff]
    %v817 = vld [vmem:[%s793 + $0xb8] sm:$0xff]
    %v818 = vld [vmem:[%s793 + $0xc0] sm:$0xff]
    %v819 = vld [vmem:[%s793 + $0xc8] sm:$0xff]
    %v820 = vld [vmem:[%s793 + $0xd0] sm:$0xff]
    %v821 = vld [vmem:[%s793 + $0xd8] sm:$0xff]
    %v822 = vld [vmem:[%s793 + $0xe0] sm:$0xff]
    %v823 = vld [vmem:[%s793 + $0xe8] sm:$0xff]
    %v824 = vld [vmem:[%s793 + $0xf0] sm:$0xff]
    %v825 = vld [vmem:[%s793 + $0xf8] sm:$0xff]
    %v826 = vunpack.c.l.b16 %v760
    %v827 = vunpack.c.h.b16 %v760
    %v828 = vunpack.c.l.b16 %v765
    %v829 = vunpack.c.h.b16 %v765
    %v830 = vunpack.c.l.b16 %v772
    %v831 = vunpack.c.h.b16 %v772
    %v832 = vunpack.c.l.b16 %v780
    %v833 = vunpack.c.h.b16 %v780
    %v834 = vunpack.c.l.b16 %v785
    %v835 = vunpack.c.h.b16 %v785
    %v836 = vunpack.c.l.b16 %v792
    %v837 = vunpack.c.h.b16 %v792
    %v838 = vpack.c.b16 %v828, %v826
    %v839 = vpack.c.b16 %v829, %v827
    %v840 = vpack.c.b16 %v832, %v830
    %v841 = vpack.c.b16 %v833, %v831
    %v842 = vpack.c.b16 %v836, %v834
    %v843 = vpack.c.b16 %v837, %v835
    %v882 = vunpack.c.l.b16 %v794
    %v883 = vunpack.c.h.b16 %v794
    %v884 = vunpack.c.l.b16 %v795
    %v885 = vunpack.c.h.b16 %v795
    %v886 = vunpack.c.l.b16 %v796
    %v887 = vunpack.c.h.b16 %v796
    %v888 = vunpack.c.l.b16 %v797
    %v889 = vunpack.c.h.b16 %v797
    %v890 = vunpack.c.l.b16 %v798
    %v891 = vunpack.c.h.b16 %v798
    %v892 = vunpack.c.l.b16 %v799
    %v893 = vunpack.c.h.b16 %v799
    %v894 = vunpack.c.l.b16 %v800
    %v895 = vunpack.c.h.b16 %v800
    %v896 = vunpack.c.l.b16 %v801
    %v897 = vunpack.c.h.b16 %v801
    %v898 = vunpack.c.l.b16 %v802
    %v899 = vunpack.c.h.b16 %v802
    %v900 = vunpack.c.l.b16 %v803
    %v901 = vunpack.c.h.b16 %v803
    %v902 = vunpack.c.l.b16 %v804
    %v903 = vunpack.c.h.b16 %v804
    %v904 = vunpack.c.l.b16 %v805
    %v905 = vunpack.c.h.b16 %v805
    %v906 = vunpack.c.l.b16 %v806
    %v907 = vunpack.c.h.b16 %v806
    %v908 = vunpack.c.l.b16 %v807
    %v909 = vunpack.c.h.b16 %v807
    %v910 = vunpack.c.l.b16 %v808
    %v911 = vunpack.c.h.b16 %v808
    %v912 = vunpack.c.l.b16 %v809
    %v913 = vunpack.c.h.b16 %v809
    %v914 = vunpack.c.l.b16 %v810
    %v915 = vunpack.c.h.b16 %v810
    %v916 = vunpack.c.l.b16 %v811
    %v917 = vunpack.c.h.b16 %v811
    %v918 = vunpack.c.l.b16 %v812
    %v919 = vunpack.c.h.b16 %v812
    %v920 = vunpack.c.l.b16 %v813
    %v921 = vunpack.c.h.b16 %v813
    %v922 = vunpack.c.l.b16 %v814
    %v923 = vunpack.c.h.b16 %v814
    %v924 = vunpack.c.l.b16 %v815
    %v925 = vunpack.c.h.b16 %v815
    %v926 = vunpack.c.l.b16 %v816
    %v927 = vunpack.c.h.b16 %v816
    %v928 = vunpack.c.l.b16 %v817
    %v929 = vunpack.c.h.b16 %v817
    %v930 = vunpack.c.l.b16 %v818
    %v931 = vunpack.c.h.b16 %v818
    %v932 = vunpack.c.l.b16 %v819
    %v933 = vunpack.c.h.b16 %v819
    %v934 = vunpack.c.l.b16 %v820
    %v935 = vunpack.c.h.b16 %v820
    %v936 = vunpack.c.l.b16 %v821
    %v937 = vunpack.c.h.b16 %v821
    %v938 = vunpack.c.l.b16 %v822
    %v939 = vunpack.c.h.b16 %v822
    %v940 = vunpack.c.l.b16 %v823
    %v941 = vunpack.c.h.b16 %v823
    %v942 = vunpack.c.l.b16 %v824
    %v943 = vunpack.c.h.b16 %v824
    %v944 = vunpack.c.l.b16 %v825
    %v945 = vunpack.c.h.b16 %v825
    %v946 = vpack.c.b16 %v884, %v882
    %v947 = vpack.c.b16 %v885, %v883
    %v948 = vpack.c.b16 %v888, %v886
    %v949 = vpack.c.b16 %v889, %v887
    %v950 = vpack.c.b16 %v892, %v890
    %v951 = vpack.c.b16 %v893, %v891
    %v952 = vpack.c.b16 %v896, %v894
    %v953 = vpack.c.b16 %v897, %v895
    %v954 = vpack.c.b16 %v900, %v898
    %v955 = vpack.c.b16 %v901, %v899
    %v956 = vpack.c.b16 %v904, %v902
    %v957 = vpack.c.b16 %v905, %v903
    %v958 = vpack.c.b16 %v908, %v906
    %v959 = vpack.c.b16 %v909, %v907
    %v960 = vpack.c.b16 %v912, %v910
    %v961 = vpack.c.b16 %v913, %v911
    %v962 = vpack.c.b16 %v916, %v914
    %v963 = vpack.c.b16 %v917, %v915
    %v964 = vpack.c.b16 %v920, %v918
    %v965 = vpack.c.b16 %v921, %v919
    %v966 = vpack.c.b16 %v924, %v922
    %v967 = vpack.c.b16 %v925, %v923
    %v968 = vpack.c.b16 %v928, %v926
    %v969 = vpack.c.b16 %v929, %v927
    %v970 = vpack.c.b16 %v932, %v930
    %v971 = vpack.c.b16 %v933, %v931
    %v972 = vpack.c.b16 %v936, %v934
    %v973 = vpack.c.b16 %v937, %v935
    %v974 = vpack.c.b16 %v940, %v938
    %v975 = vpack.c.b16 %v941, %v939
    %v976 = vpack.c.b16 %v944, %v942
    %v977 = vpack.c.b16 %v945, %v943
    %1010 = vmatprep.subr.bf16.mxu0 %v947
    %1011 = vmatpush1.bf16.msra.mxu0 %v946
    %1012 = vmatprep.subr.bf16.mxu0 %v949
    %1013 = vmatpush1.bf16.msra.mxu0 %v948
    %1014 = vmatprep.subr.bf16.mxu0 %v951
    %1015 = vmatpush1.bf16.msra.mxu0 %v950
    %1016 = vmatprep.subr.bf16.mxu0 %v953
    %1017 = vmatpush1.bf16.msra.mxu0 %v952
    %1018 = vmatprep.subr.bf16.mxu0 %v955
    %1019 = vmatpush1.bf16.msra.mxu0 %v954
    %1020 = vmatprep.subr.bf16.mxu0 %v957
    %1021 = vmatpush1.bf16.msra.mxu0 %v956
    %1022 = vmatprep.subr.bf16.mxu0 %v959
    %1023 = vmatpush1.bf16.msra.mxu0 %v958
    %1024 = vmatprep.subr.bf16.mxu0 %v961
    %1025 = vmatpush1.bf16.msra.mxu0 %v960
    %1026 = vmatprep.subr.bf16.mxu0 %v963
    %1027 = vmatpush1.bf16.msra.mxu0 %v962
    %1028 = vmatprep.subr.bf16.mxu0 %v965
    %1029 = vmatpush1.bf16.msra.mxu0 %v964
    %1030 = vmatprep.subr.bf16.mxu0 %v967
    %1031 = vmatpush1.bf16.msra.mxu0 %v966
    %1032 = vmatprep.subr.bf16.mxu0 %v969
    %1033 = vmatpush1.bf16.msra.mxu0 %v968
    %1034 = vmatprep.subr.bf16.mxu0 %v971
    %1035 = vmatpush1.bf16.msra.mxu0 %v970
    %1036 = vmatprep.subr.bf16.mxu0 %v973
    %1037 = vmatpush1.bf16.msra.mxu0 %v972
    %1038 = vmatprep.subr.bf16.mxu0 %v975
    %1039 = vmatpush1.bf16.msra.mxu0 %v974
    %1040 = vmatprep.subr.bf16.mxu0 %v977
    %1041 = vmatpush1.bf16.msra.mxu0 %v976
    %1042 = vmatprep.mubr.bf16.mxu0 %v839
    %1043 = vmatmul.mubr.bf16.gmra.mrb[0].mxu0 %v838
    %v1044 = vpop.f32.mrb[0].mxu0
    %v1045 = vadd.f32 0.0, %v1044
    %v1046 = vpop.f32.mrb[0].mxu0
    %v1047 = vadd.f32 0.0, %v1046
    %v1048 = vpop.f32.mrb[0].mxu0
    %v1049 = vadd.f32 0.0, %v1048
    %v1050 = vpop.f32.mrb[0].mxu0
    %v1051 = vadd.f32 0.0, %v1050
    %1052 = vmatprep.mubr.bf16.mxu0 %v841
    %1053 = vmatmul.mubr.bf16.gmra.mrb[0].mxu0 %v840
    %v1054 = vpop.f32.mrb[0].mxu0
    %v1055 = vadd.f32 0.0, %v1054
    %v1056 = vpop.f32.mrb[0].mxu0
    %v1057 = vadd.f32 0.0, %v1056
    %v1058 = vpop.f32.mrb[0].mxu0
    %v1059 = vadd.f32 0.0, %v1058
    %v1060 = vpop.f32.mrb[0].mxu0
    %v1061 = vadd.f32 0.0, %v1060
    %1062 = vmatprep.mubr.bf16.mxu0 %v843
    %1063 = vmatmul.mubr.bf16.gmra.mrb[0].mxu0 %v842
    %v1064 = vpop.f32.mrb[0].mxu0
    %v1065 = vadd.f32 0.0, %v1064
    %v1066 = vpop.f32.mrb[0].mxu0
    %v1067 = vadd.f32 0.0, %v1066
    %v1068 = vpop.f32.mrb[0].mxu0
    %v1069 = vadd.f32 0.0, %v1068
    %v1070 = vpop.f32.mrb[0].mxu0
    %v1071 = vadd.f32 0.0, %v1070
    %1072 = vdwg.mxu0
    %v1073 = vadd.f32 %v722, %v1045
    %v1074 = vadd.f32 %v724, %v1047
    %v1075 = vadd.f32 %v726, %v1049
    %v1076 = vadd.f32 %v728, %v1051
    %v1077 = vadd.f32 %v732, %v1055
    %v1078 = vadd.f32 %v734, %v1057
    %v1079 = vadd.f32 %v736, %v1059
    %v1080 = vadd.f32 %v738, %v1061
    %v1081 = vadd.f32 %v742, %v1065
    %v1082 = vadd.f32 %v744, %v1067
    %v1083 = vadd.f32 %v746, %v1069
    %v1084 = vadd.f32 %v748, %v1071
    %v1086 = vlaneseq
    %v1087 = vshrl.u32 %v1086, 7
    %v1088 = vsub.s32 0, %v1087
    %v1089 = vrot.slane %v88, %v1088
    %v1090 = vlaneseq
    %v1091 = vshrl.u32 %v1090, 7
    %v1092 = vsub.s32 1, %v1091
    %v1093 = vrot.slane %v88, %v1092
    %v1096 = vadd.f32 %v1073, %v1089
    %v1097 = vadd.f32 %v1074, %v1093
    %v1098 = vadd.f32 %v1075, %v1089
    %v1099 = vadd.f32 %v1076, %v1093
    %v1100 = vadd.f32 %v1077, %v1089
    %v1101 = vadd.f32 %v1078, %v1093
    %v1102 = vadd.f32 %v1079, %v1089
    %v1103 = vadd.f32 %v1080, %v1093
    %v1104 = vadd.f32 %v1081, %v1089
    %v1105 = vadd.f32 %v1082, %v1093
    %v1106 = vadd.f32 %v1083, %v1089
    %v1107 = vadd.f32 %v1084, %v1093
    %v1108 = vmax.f32 %v1096, 0.0
    %v1109 = vmax.f32 %v1097, 0.0
    %v1110 = vmax.f32 %v1098, 0.0
    %v1111 = vmax.f32 %v1099, 0.0
    %v1112 = vmax.f32 %v1100, 0.0
    %v1113 = vmax.f32 %v1101, 0.0
    %v1114 = vmax.f32 %v1102, 0.0
    %v1115 = vmax.f32 %v1103, 0.0
    %v1116 = vmax.f32 %v1104, 0.0
    %v1117 = vmax.f32 %v1105, 0.0
    %v1118 = vmax.f32 %v1106, 0.0
    %v1119 = vmax.f32 %v1107, 0.0
    %vm1120 = vcmp.lt.s32.totalorder %v85, 16
    %vm1121 = vcmp.lt.s32.totalorder %v86, 16
    %vm1122 = vcmp.lt.s32.totalorder %v87, 16
    %v1123 = vsel %vm1120, 1, 0
    %v1124 = vsel %vm1121, 1, 0
    %v1125 = vsel %vm1122, 1, 0
    %vm1126 = vcmp.eq.s32.totalorder %v1123, 1
    %vm1127 = vcmp.eq.s32.totalorder %v1124, 1
    %vm1128 = vcmp.eq.s32.totalorder %v1125, 1
    %v1129 = vsel %vm1126, %v1108, 0.0
    %v1130 = vsel %vm1126, %v1109, 0.0
    %v1131 = vsel %vm1127, %v1110, 0.0
    %v1132 = vsel %vm1127, %v1111, 0.0
    %v1133 = vsel %vm1128, %v1112, 0.0
    %v1134 = vsel %vm1128, %v1113, 0.0
    %v1135 = vsel %vm1126, %v1114, 0.0
    %v1136 = vsel %vm1126, %v1115, 0.0
    %v1137 = vsel %vm1127, %v1116, 0.0
    %v1138 = vsel %vm1127, %v1117, 0.0
    %v1139 = vsel %vm1128, %v1118, 0.0
    %v1140 = vsel %vm1128, %v1119, 0.0
    %v1141 = vmax.f32 %v1129, %v1131
    %v1142 = vmax.f32 %v1141, %v1133
    %v1143 = vrot.slane %v1142, 4
    %v1144 = vmax.f32 %v1142, %v1143
    %v1145 = vrot.slane %v1144, 2
    %v1146 = vmax.f32 %v1144, %v1145
    %v1147 = vrot.slane %v1146, 1
    %v1148 = vmax.f32 %v1146, %v1147
    %v1149 = vmax.f32 %v1130, %v1132
    %v1150 = vmax.f32 %v1149, %v1134
    %v1151 = vrot.slane %v1150, 4
    %v1152 = vmax.f32 %v1150, %v1151
    %v1153 = vrot.slane %v1152, 2
    %v1154 = vmax.f32 %v1152, %v1153
    %v1155 = vrot.slane %v1154, 1
    %v1156 = vmax.f32 %v1154, %v1155
    %v1157 = vmax.f32 %v1135, %v1137
    %v1158 = vmax.f32 %v1157, %v1139
    %v1159 = vrot.slane %v1158, 4
    %v1160 = vmax.f32 %v1158, %v1159
    %v1161 = vrot.slane %v1160, 2
    %v1162 = vmax.f32 %v1160, %v1161
    %v1163 = vrot.slane %v1162, 1
    %v1164 = vmax.f32 %v1162, %v1163
    %v1165 = vmax.f32 %v1136, %v1138
    %v1166 = vmax.f32 %v1165, %v1140
    %v1167 = vrot.slane %v1166, 4
    %v1168 = vmax.f32 %v1166, %v1167
    %v1169 = vrot.slane %v1168, 2
    %v1170 = vmax.f32 %v1168, %v1169
    %v1171 = vrot.slane %v1170, 1
    %v1172 = vmax.f32 %v1170, %v1171
    %v1177 = vcombine.low %v1148, %v1156
    %v1179 = vunpack.c.l.s4 1983009808
    %v1180 = vunpack.c.0.s8 %v1179
    %v1181 = vlaneseq
    %v1182 = vshrl.u32 %v1181, 7
    %v1183 = vsub.s32 %v1180, %v1182
    %v1184 = vrot.slane %v1177, %v1183
    %v1185 = vcombine.low %v1164, %v1172
    %v1187 = vunpack.c.l.s4 1983009808
    %v1188 = vunpack.c.0.s8 %v1187
    %v1189 = vlaneseq
    %v1190 = vshrl.u32 %v1189, 7
    %v1191 = vsub.s32 %v1188, %v1190
    %v1192 = vrot.slane %v1185, %v1191
    %vm1193 = vcmask 1044484
    %v1194 = vsel %vm1193, %v1184, %v1184
    %vm1195 = vcmask 1046534
    %v1196 = vsel %vm1195, %v1184, %v1194
    %v1197 = vrot.slane %v1192, 7
    %vm1198 = vcmask 1041409
    %v1199 = vsel %vm1198, %v1197, %v1196
    %vm1200 = vcmask 1043459
    %v1201 = vsel %vm1200, %v1197, %v1199
    %vm1202 = vcmask 1045509
    %v1203 = vsel %vm1202, %v1197, %v1201
    %vm1204 = vcmask 1047559
    %v1205 = vsel %vm1204, %v1197, %v1203
    %1207 = vst [vmem:[#allocation10] sm:$0xf] %v1205
    %v1208 = vld [vmem:[%s4 + $0x2] sm:$0x3]
    %v1209 = vld [vmem:[#allocation7] sm:$0xff]
    %v1210 = vld [vmem:[#allocation7 + $0x8] sm:$0xff]
    %v1211 = vld [vmem:[#allocation7 + $0x10] sm:$0xff]
    %v1212 = vld [vmem:[#allocation7 + $0x18] sm:$0xff]
    %v1213 = vld [vmem:[#allocation7 + $0x20] sm:$0xff]
    %v1214 = vld [vmem:[#allocation7 + $0x28] sm:$0xff]
    %v1215 = vld [vmem:[#allocation7 + $0x30] sm:$0xff]
    %v1216 = vld [vmem:[#allocation7 + $0x38] sm:$0xff]
    %v1217 = vld [vmem:[#allocation7 + $0x40] sm:$0xff]
    %v1218 = vld [vmem:[#allocation7 + $0x48] sm:$0xff]
    %v1219 = vld [vmem:[#allocation7 + $0x50] sm:$0xff]
    %v1220 = vld [vmem:[#allocation7 + $0x58] sm:$0xff]
    %v1221 = vld [vmem:[#allocation7 + $0x60] sm:$0xff]
    %v1222 = vld [vmem:[#allocation7 + $0x68] sm:$0xff]
    %v1223 = vld [vmem:[#allocation7 + $0x70] sm:$0xff]
    %v1224 = vld [vmem:[#allocation7 + $0x78] sm:$0xff]
    %v1225 = vld [vmem:[#allocation7 + $0x80] sm:$0xff]
    %v1226 = vld [vmem:[#allocation7 + $0x88] sm:$0xff]
    %v1227 = vld [vmem:[#allocation7 + $0x90] sm:$0xff]
    %v1228 = vld [vmem:[#allocation7 + $0x98] sm:$0xff]
    %v1229 = vld [vmem:[#allocation7 + $0xa0] sm:$0xff]
    %v1230 = vld [vmem:[#allocation7 + $0xa8] sm:$0xff]
    %v1231 = vld [vmem:[#allocation7 + $0xb0] sm:$0xff]
    %v1232 = vld [vmem:[#allocation7 + $0xb8] sm:$0xff]
    %v1233 = vld [vmem:[#allocation7 + $0xc0] sm:$0xff]
    %v1234 = vld [vmem:[#allocation7 + $0xc8] sm:$0xff]
    %v1235 = vld [vmem:[#allocation7 + $0xd0] sm:$0xff]
    %v1236 = vld [vmem:[#allocation7 + $0xd8] sm:$0xff]
    %v1237 = vld [vmem:[#allocation7 + $0xe0] sm:$0xff]
    %v1238 = vld [vmem:[#allocation7 + $0xe8] sm:$0xff]
    %v1239 = vld [vmem:[#allocation7 + $0xf0] sm:$0xff]
    %v1240 = vld [vmem:[#allocation7 + $0xf8] sm:$0xff]
    %s1241 = scalar_lea.vmem [#allocation7], 256
    %v1242 = vld [vmem:[%s1241] sm:$0xff]
    %v1243 = vld [vmem:[%s1241 + $0x8] sm:$0xff]
    %v1244 = vld [vmem:[%s1241 + $0x10] sm:$0xff]
    %v1245 = vld [vmem:[%s1241 + $0x18] sm:$0xff]
    %v1246 = vld [vmem:[%s1241 + $0x20] sm:$0xff]
    %v1247 = vld [vmem:[%s1241 + $0x28] sm:$0xff]
    %v1248 = vld [vmem:[%s1241 + $0x30] sm:$0xff]
    %v1249 = vld [vmem:[%s1241 + $0x38] sm:$0xff]
    %v1250 = vld [vmem:[%s1241 + $0x40] sm:$0xff]
    %v1251 = vld [vmem:[%s1241 + $0x48] sm:$0xff]
    %v1252 = vld [vmem:[%s1241 + $0x50] sm:$0xff]
    %v1253 = vld [vmem:[%s1241 + $0x58] sm:$0xff]
    %v1254 = vld [vmem:[%s1241 + $0x60] sm:$0xff]
    %v1255 = vld [vmem:[%s1241 + $0x68] sm:$0xff]
    %v1256 = vld [vmem:[%s1241 + $0x70] sm:$0xff]
    %v1257 = vld [vmem:[%s1241 + $0x78] sm:$0xff]
    %v1258 = vld [vmem:[%s1241 + $0x80] sm:$0xff]
    %v1259 = vld [vmem:[%s1241 + $0x88] sm:$0xff]
    %v1260 = vld [vmem:[%s1241 + $0x90] sm:$0xff]
    %v1261 = vld [vmem:[%s1241 + $0x98] sm:$0xff]
    %v1262 = vld [vmem:[%s1241 + $0xa0] sm:$0xff]
    %v1263 = vld [vmem:[%s1241 + $0xa8] sm:$0xff]
    %v1264 = vld [vmem:[%s1241 + $0xb0] sm:$0xff]
    %v1265 = vld [vmem:[%s1241 + $0xb8] sm:$0xff]
    %v1266 = vld [vmem:[%s1241 + $0xc0] sm:$0xff]
    %v1267 = vld [vmem:[%s1241 + $0xc8] sm:$0xff]
    %v1268 = vld [vmem:[%s1241 + $0xd0] sm:$0xff]
    %v1269 = vld [vmem:[%s1241 + $0xd8] sm:$0xff]
    %v1270 = vld [vmem:[%s1241 + $0xe0] sm:$0xff]
    %v1271 = vld [vmem:[%s1241 + $0xe8] sm:$0xff]
    %v1272 = vld [vmem:[%s1241 + $0xf0] sm:$0xff]
    %v1273 = vld [vmem:[%s1241 + $0xf8] sm:$0xff]
    %v1306 = vunpack.c.l.b16 %v1242
    %v1307 = vunpack.c.h.b16 %v1242
    %v1308 = vunpack.c.l.b16 %v1243
    %v1309 = vunpack.c.h.b16 %v1243
    %v1310 = vunpack.c.l.b16 %v1244
    %v1311 = vunpack.c.h.b16 %v1244
    %v1312 = vunpack.c.l.b16 %v1245
    %v1313 = vunpack.c.h.b16 %v1245
    %v1314 = vunpack.c.l.b16 %v1246
    %v1315 = vunpack.c.h.b16 %v1246
    %v1316 = vunpack.c.l.b16 %v1247
    %v1317 = vunpack.c.h.b16 %v1247
    %v1318 = vunpack.c.l.b16 %v1248
    %v1319 = vunpack.c.h.b16 %v1248
    %v1320 = vunpack.c.l.b16 %v1249
    %v1321 = vunpack.c.h.b16 %v1249
    %v1322 = vunpack.c.l.b16 %v1250
    %v1323 = vunpack.c.h.b16 %v1250
    %v1324 = vunpack.c.l.b16 %v1251
    %v1325 = vunpack.c.h.b16 %v1251
    %v1326 = vunpack.c.l.b16 %v1252
    %v1327 = vunpack.c.h.b16 %v1252
    %v1328 = vunpack.c.l.b16 %v1253
    %v1329 = vunpack.c.h.b16 %v1253
    %v1330 = vunpack.c.l.b16 %v1254
    %v1331 = vunpack.c.h.b16 %v1254
    %v1332 = vunpack.c.l.b16 %v1255
    %v1333 = vunpack.c.h.b16 %v1255
    %v1334 = vunpack.c.l.b16 %v1256
    %v1335 = vunpack.c.h.b16 %v1256
    %v1336 = vunpack.c.l.b16 %v1257
    %v1337 = vunpack.c.h.b16 %v1257
    %v1338 = vunpack.c.l.b16 %v1258
    %v1339 = vunpack.c.h.b16 %v1258
    %v1340 = vunpack.c.l.b16 %v1259
    %v1341 = vunpack.c.h.b16 %v1259
    %v1342 = vunpack.c.l.b16 %v1260
    %v1343 = vunpack.c.h.b16 %v1260
    %v1344 = vunpack.c.l.b16 %v1261
    %v1345 = vunpack.c.h.b16 %v1261
    %v1346 = vunpack.c.l.b16 %v1262
    %v1347 = vunpack.c.h.b16 %v1262
    %v1348 = vunpack.c.l.b16 %v1263
    %v1349 = vunpack.c.h.b16 %v1263
    %v1350 = vunpack.c.l.b16 %v1264
    %v1351 = vunpack.c.h.b16 %v1264
    %v1352 = vunpack.c.l.b16 %v1265
    %v1353 = vunpack.c.h.b16 %v1265
    %v1354 = vunpack.c.l.b16 %v1266
    %v1355 = vunpack.c.h.b16 %v1266
    %v1356 = vunpack.c.l.b16 %v1267
    %v1357 = vunpack.c.h.b16 %v1267
    %v1358 = vunpack.c.l.b16 %v1268
    %v1359 = vunpack.c.h.b16 %v1268
    %v1360 = vunpack.c.l.b16 %v1269
    %v1361 = vunpack.c.h.b16 %v1269
    %v1362 = vunpack.c.l.b16 %v1270
    %v1363 = vunpack.c.h.b16 %v1270
    %v1364 = vunpack.c.l.b16 %v1271
    %v1365 = vunpack.c.h.b16 %v1271
    %v1366 = vunpack.c.l.b16 %v1272
    %v1367 = vunpack.c.h.b16 %v1272
    %v1368 = vunpack.c.l.b16 %v1273
    %v1369 = vunpack.c.h.b16 %v1273
    %v1370 = vpack.c.b16 %v1308, %v1306
    %v1371 = vpack.c.b16 %v1309, %v1307
    %v1372 = vpack.c.b16 %v1312, %v1310
    %v1373 = vpack.c.b16 %v1313, %v1311
    %v1374 = vpack.c.b16 %v1316, %v1314
    %v1375 = vpack.c.b16 %v1317, %v1315
    %v1376 = vpack.c.b16 %v1320, %v1318
    %v1377 = vpack.c.b16 %v1321, %v1319
    %v1378 = vpack.c.b16 %v1324, %v1322
    %v1379 = vpack.c.b16 %v1325, %v1323
    %v1380 = vpack.c.b16 %v1328, %v1326
    %v1381 = vpack.c.b16 %v1329, %v1327
    %v1382 = vpack.c.b16 %v1332, %v1330
    %v1383 = vpack.c.b16 %v1333, %v1331
    %v1384 = vpack.c.b16 %v1336, %v1334
    %v1385 = vpack.c.b16 %v1337, %v1335
    %v1386 = vpack.c.b16 %v1340, %v1338
    %v1387 = vpack.c.b16 %v1341, %v1339
    %v1388 = vpack.c.b16 %v1344, %v1342
    %v1389 = vpack.c.b16 %v1345, %v1343
    %v1390 = vpack.c.b16 %v1348, %v1346
    %v1391 = vpack.c.b16 %v1349, %v1347
    %v1392 = vpack.c.b16 %v1352, %v1350
    %v1393 = vpack.c.b16 %v1353, %v1351
    %v1394 = vpack.c.b16 %v1356, %v1354
    %v1395 = vpack.c.b16 %v1357, %v1355
    %v1396 = vpack.c.b16 %v1360, %v1358
    %v1397 = vpack.c.b16 %v1361, %v1359
    %v1398 = vpack.c.b16 %v1364, %v1362
    %v1399 = vpack.c.b16 %v1365, %v1363
    %v1400 = vpack.c.b16 %v1368, %v1366
    %v1401 = vpack.c.b16 %v1369, %v1367
    %1434 = vmatprep.subr.bf16.mxu0 %v1371
    %1435 = vmatpush1.bf16.msra.mxu0 %v1370
    %1436 = vmatprep.subr.bf16.mxu0 %v1373
    %1437 = vmatpush1.bf16.msra.mxu0 %v1372
    %1438 = vmatprep.subr.bf16.mxu0 %v1375
    %1439 = vmatpush1.bf16.msra.mxu0 %v1374
    %1440 = vmatprep.subr.bf16.mxu0 %v1377
    %1441 = vmatpush1.bf16.msra.mxu0 %v1376
    %1442 = vmatprep.subr.bf16.mxu0 %v1379
    %1443 = vmatpush1.bf16.msra.mxu0 %v1378
    %1444 = vmatprep.subr.bf16.mxu0 %v1381
    %1445 = vmatpush1.bf16.msra.mxu0 %v1380
    %1446 = vmatprep.subr.bf16.mxu0 %v1383
    %1447 = vmatpush1.bf16.msra.mxu0 %v1382
    %1448 = vmatprep.subr.bf16.mxu0 %v1385
    %1449 = vmatpush1.bf16.msra.mxu0 %v1384
    %1450 = vmatprep.subr.bf16.mxu0 %v1387
    %1451 = vmatpush1.bf16.msra.mxu0 %v1386
    %1452 = vmatprep.subr.bf16.mxu0 %v1389
    %1453 = vmatpush1.bf16.msra.mxu0 %v1388
    %1454 = vmatprep.subr.bf16.mxu0 %v1391
    %1455 = vmatpush1.bf16.msra.mxu0 %v1390
    %1456 = vmatprep.subr.bf16.mxu0 %v1393
    %1457 = vmatpush1.bf16.msra.mxu0 %v1392
    %1458 = vmatprep.subr.bf16.mxu0 %v1395
    %1459 = vmatpush1.bf16.msra.mxu0 %v1394
    %1460 = vmatprep.subr.bf16.mxu0 %v1397
    %1461 = vmatpush1.bf16.msra.mxu0 %v1396
    %1462 = vmatprep.subr.bf16.mxu0 %v1399
    %1463 = vmatpush1.bf16.msra.mxu0 %v1398
    %1464 = vmatprep.subr.bf16.mxu0 %v1401
    %1465 = vmatpush1.bf16.msra.mxu0 %v1400
    %1466 = vmatprep.mubr.bf16.mxu0 %v516
    %1467 = vmatmul.mubr.bf16.gmra.mrb[0].mxu0 %v515
    %v1468 = vpop.f32.mrb[0].mxu0
    %v1469 = vadd.f32 0.0, %v1468
    %v1470 = vpop.f32.mrb[0].mxu0
    %v1471 = vadd.f32 0.0, %v1470
    %v1472 = vpop.f32.mrb[0].mxu0
    %v1473 = vadd.f32 0.0, %v1472
    %v1474 = vpop.f32.mrb[0].mxu0
    %v1475 = vadd.f32 0.0, %v1474
    %1476 = vmatprep.mubr.bf16.mxu0 %v518
    %1477 = vmatmul.mubr.bf16.gmra.mrb[0].mxu0 %v517
    %v1478 = vpop.f32.mrb[0].mxu0
    %v1479 = vadd.f32 0.0, %v1478
    %v1480 = vpop.f32.mrb[0].mxu0
    %v1481 = vadd.f32 0.0, %v1480
    %v1482 = vpop.f32.mrb[0].mxu0
    %v1483 = vadd.f32 0.0, %v1482
    %v1484 = vpop.f32.mrb[0].mxu0
    %v1485 = vadd.f32 0.0, %v1484
    %1486 = vmatprep.mubr.bf16.mxu0 %v520
    %1487 = vmatmul.mubr.bf16.gmra.mrb[0].mxu0 %v519
    %v1488 = vpop.f32.mrb[0].mxu0
    %v1489 = vadd.f32 0.0, %v1488
    %v1490 = vpop.f32.mrb[0].mxu0
    %v1491 = vadd.f32 0.0, %v1490
    %v1492 = vpop.f32.mrb[0].mxu0
    %v1493 = vadd.f32 0.0, %v1492
    %v1494 = vpop.f32.mrb[0].mxu0
    %v1495 = vadd.f32 0.0, %v1494
    %1496 = vdwg.mxu0
    %v1497 = vunpack.c.l.b16 %v76
    %v1498 = vunpack.c.h.b16 %v76
    %v1499 = vunpack.c.l.b16 %v77
    %v1500 = vunpack.c.h.b16 %v77
    %v1501 = vunpack.c.l.b16 %v78
    %v1502 = vunpack.c.h.b16 %v78
    %v1503 = vunpack.c.l.b16 %v80
    %v1504 = vunpack.c.h.b16 %v80
    %v1505 = vunpack.c.l.b16 %v81
    %v1506 = vunpack.c.h.b16 %v81
    %v1507 = vunpack.c.l.b16 %v82
    %v1508 = vunpack.c.h.b16 %v82
    %v1509 = vpack.c.b16 %v1499, %v1497
    %v1510 = vpack.c.b16 %v1500, %v1498
    %v1511 = vpack.c.b16 %v1503, %v1501
    %v1512 = vpack.c.b16 %v1504, %v1502
    %v1513 = vpack.c.b16 %v1507, %v1505
    %v1514 = vpack.c.b16 %v1508, %v1506
    %v1553 = vunpack.c.l.b16 %v1209
    %v1554 = vunpack.c.h.b16 %v1209
    %v1555 = vunpack.c.l.b16 %v1210
    %v1556 = vunpack.c.h.b16 %v1210
    %v1557 = vunpack.c.l.b16 %v1211
    %v1558 = vunpack.c.h.b16 %v1211
    %v1559 = vunpack.c.l.b16 %v1212
    %v1560 = vunpack.c.h.b16 %v1212
    %v1561 = vunpack.c.l.b16 %v1213
    %v1562 = vunpack.c.h.b16 %v1213
    %v1563 = vunpack.c.l.b16 %v1214
    %v1564 = vunpack.c.h.b16 %v1214
    %v1565 = vunpack.c.l.b16 %v1215
    %v1566 = vunpack.c.h.b16 %v1215
    %v1567 = vunpack.c.l.b16 %v1216
    %v1568 = vunpack.c.h.b16 %v1216
    %v1569 = vunpack.c.l.b16 %v1217
    %v1570 = vunpack.c.h.b16 %v1217
    %v1571 = vunpack.c.l.b16 %v1218
    %v1572 = vunpack.c.h.b16 %v1218
    %v1573 = vunpack.c.l.b16 %v1219
    %v1574 = vunpack.c.h.b16 %v1219
    %v1575 = vunpack.c.l.b16 %v1220
    %v1576 = vunpack.c.h.b16 %v1220
    %v1577 = vunpack.c.l.b16 %v1221
    %v1578 = vunpack.c.h.b16 %v1221
    %v1579 = vunpack.c.l.b16 %v1222
    %v1580 = vunpack.c.h.b16 %v1222
    %v1581 = vunpack.c.l.b16 %v1223
    %v1582 = vunpack.c.h.b16 %v1223
    %v1583 = vunpack.c.l.b16 %v1224
    %v1584 = vunpack.c.h.b16 %v1224
    %v1585 = vunpack.c.l.b16 %v1225
    %v1586 = vunpack.c.h.b16 %v1225
    %v1587 = vunpack.c.l.b16 %v1226
    %v1588 = vunpack.c.h.b16 %v1226
    %v1589 = vunpack.c.l.b16 %v1227
    %v1590 = vunpack.c.h.b16 %v1227
    %v1591 = vunpack.c.l.b16 %v1228
    %v1592 = vunpack.c.h.b16 %v1228
    %v1593 = vunpack.c.l.b16 %v1229
    %v1594 = vunpack.c.h.b16 %v1229
    %v1595 = vunpack.c.l.b16 %v1230
    %v1596 = vunpack.c.h.b16 %v1230
    %v1597 = vunpack.c.l.b16 %v1231
    %v1598 = vunpack.c.h.b16 %v1231
    %v1599 = vunpack.c.l.b16 %v1232
    %v1600 = vunpack.c.h.b16 %v1232
    %v1601 = vunpack.c.l.b16 %v1233
    %v1602 = vunpack.c.h.b16 %v1233
    %v1603 = vunpack.c.l.b16 %v1234
    %v1604 = vunpack.c.h.b16 %v1234
    %v1605 = vunpack.c.l.b16 %v1235
    %v1606 = vunpack.c.h.b16 %v1235
    %v1607 = vunpack.c.l.b16 %v1236
    %v1608 = vunpack.c.h.b16 %v1236
    %v1609 = vunpack.c.l.b16 %v1237
    %v1610 = vunpack.c.h.b16 %v1237
    %v1611 = vunpack.c.l.b16 %v1238
    %v1612 = vunpack.c.h.b16 %v1238
    %v1613 = vunpack.c.l.b16 %v1239
    %v1614 = vunpack.c.h.b16 %v1239
    %v1615 = vunpack.c.l.b16 %v1240
    %v1616 = vunpack.c.h.b16 %v1240
    %v1617 = vpack.c.b16 %v1555, %v1553
    %v1618 = vpack.c.b16 %v1556, %v1554
    %v1619 = vpack.c.b16 %v1559, %v1557
    %v1620 = vpack.c.b16 %v1560, %v1558
    %v1621 = vpack.c.b16 %v1563, %v1561
    %v1622 = vpack.c.b16 %v1564, %v1562
    %v1623 = vpack.c.b16 %v1567, %v1565
    %v1624 = vpack.c.b16 %v1568, %v1566
    %v1625 = vpack.c.b16 %v1571, %v1569
    %v1626 = vpack.c.b16 %v1572, %v1570
    %v1627 = vpack.c.b16 %v1575, %v1573
    %v1628 = vpack.c.b16 %v1576, %v1574
    %v1629 = vpack.c.b16 %v1579, %v1577
    %v1630 = vpack.c.b16 %v1580, %v1578
    %v1631 = vpack.c.b16 %v1583, %v1581
    %v1632 = vpack.c.b16 %v1584, %v1582
    %v1633 = vpack.c.b16 %v1587, %v1585
    %v1634 = vpack.c.b16 %v1588, %v1586
    %v1635 = vpack.c.b16 %v1591, %v1589
    %v1636 = vpack.c.b16 %v1592, %v1590
    %v1637 = vpack.c.b16 %v1595, %v1593
    %v1638 = vpack.c.b16 %v1596, %v1594
    %v1639 = vpack.c.b16 %v1599, %v1597
    %v1640 = vpack.c.b16 %v1600, %v1598
    %v1641 = vpack.c.b16 %v1603, %v1601
    %v1642 = vpack.c.b16 %v1604, %v1602
    %v1643 = vpack.c.b16 %v1607, %v1605
    %v1644 = vpack.c.b16 %v1608, %v1606
    %v1645 = vpack.c.b16 %v1611, %v1609
    %v1646 = vpack.c.b16 %v1612, %v1610
    %v1647 = vpack.c.b16 %v1615, %v1613
    %v1648 = vpack.c.b16 %v1616, %v1614
    %1681 = vmatprep.subr.bf16.mxu0 %v1618
    %1682 = vmatpush1.bf16.msra.mxu0 %v1617
    %1683 = vmatprep.subr.bf16.mxu0 %v1620
    %1684 = vmatpush1.bf16.msra.mxu0 %v1619
    %1685 = vmatprep.subr.bf16.mxu0 %v1622
    %1686 = vmatpush1.bf16.msra.mxu0 %v1621
    %1687 = vmatprep.subr.bf16.mxu0 %v1624
    %1688 = vmatpush1.bf16.msra.mxu0 %v1623
    %1689 = vmatprep.subr.bf16.mxu0 %v1626
    %1690 = vmatpush1.bf16.msra.mxu0 %v1625
    %1691 = vmatprep.subr.bf16.mxu0 %v1628
    %1692 = vmatpush1.bf16.msra.mxu0 %v1627
    %1693 = vmatprep.subr.bf16.mxu0 %v1630
    %1694 = vmatpush1.bf16.msra.mxu0 %v1629
    %1695 = vmatprep.subr.bf16.mxu0 %v1632
    %1696 = vmatpush1.bf16.msra.mxu0 %v1631
    %1697 = vmatprep.subr.bf16.mxu0 %v1634
    %1698 = vmatpush1.bf16.msra.mxu0 %v1633
    %1699 = vmatprep.subr.bf16.mxu0 %v1636
    %1700 = vmatpush1.bf16.msra.mxu0 %v1635
    %1701 = vmatprep.subr.bf16.mxu0 %v1638
    %1702 = vmatpush1.bf16.msra.mxu0 %v1637
    %1703 = vmatprep.subr.bf16.mxu0 %v1640
    %1704 = vmatpush1.bf16.msra.mxu0 %v1639
    %1705 = vmatprep.subr.bf16.mxu0 %v1642
    %1706 = vmatpush1.bf16.msra.mxu0 %v1641
    %1707 = vmatprep.subr.bf16.mxu0 %v1644
    %1708 = vmatpush1.bf16.msra.mxu0 %v1643
    %1709 = vmatprep.subr.bf16.mxu0 %v1646
    %1710 = vmatpush1.bf16.msra.mxu0 %v1645
    %1711 = vmatprep.subr.bf16.mxu0 %v1648
    %1712 = vmatpush1.bf16.msra.mxu0 %v1647
    %1713 = vmatprep.mubr.bf16.mxu0 %v1510
    %1714 = vmatmul.mubr.bf16.gmra.mrb[0].mxu0 %v1509
    %v1715 = vpop.f32.mrb[0].mxu0
    %v1716 = vadd.f32 %v1469, %v1715
    %v1717 = vpop.f32.mrb[0].mxu0
    %v1718 = vadd.f32 %v1471, %v1717
    %v1719 = vpop.f32.mrb[0].mxu0
    %v1720 = vadd.f32 %v1473, %v1719
    %v1721 = vpop.f32.mrb[0].mxu0
    %v1722 = vadd.f32 %v1475, %v1721
    %1723 = vmatprep.mubr.bf16.mxu0 %v1512
    %1724 = vmatmul.mubr.bf16.gmra.mrb[0].mxu0 %v1511
    %v1725 = vpop.f32.mrb[0].mxu0
    %v1726 = vadd.f32 %v1479, %v1725
    %v1727 = vpop.f32.mrb[0].mxu0
    %v1728 = vadd.f32 %v1481, %v1727
    %v1729 = vpop.f32.mrb[0].mxu0
    %v1730 = vadd.f32 %v1483, %v1729
    %v1731 = vpop.f32.mrb[0].mxu0
    %v1732 = vadd.f32 %v1485, %v1731
    %1733 = vmatprep.mubr.bf16.mxu0 %v1514
    %1734 = vmatmul.mubr.bf16.gmra.mrb[0].mxu0 %v1513
    %v1735 = vpop.f32.mrb[0].mxu0
    %v1736 = vadd.f32 %v1489, %v1735
    %v1737 = vpop.f32.mrb[0].mxu0
    %v1738 = vadd.f32 %v1491, %v1737
    %v1739 = vpop.f32.mrb[0].mxu0
    %v1740 = vadd.f32 %v1493, %v1739
    %v1741 = vpop.f32.mrb[0].mxu0
    %v1742 = vadd.f32 %v1495, %v1741
    %1743 = vdwg.mxu0
    %s1744 = scalar_lea.vmem [#allocation7], 512
    %v1745 = vld [vmem:[%s1744] sm:$0xff]
    %v1746 = vld [vmem:[%s1744 + $0x8] sm:$0xff]
    %v1747 = vld [vmem:[%s1744 + $0x10] sm:$0xff]
    %v1748 = vld [vmem:[%s1744 + $0x18] sm:$0xff]
    %v1749 = vld [vmem:[%s1744 + $0x20] sm:$0xff]
    %v1750 = vld [vmem:[%s1744 + $0x28] sm:$0xff]
    %v1751 = vld [vmem:[%s1744 + $0x30] sm:$0xff]
    %v1752 = vld [vmem:[%s1744 + $0x38] sm:$0xff]
    %v1753 = vld [vmem:[%s1744 + $0x40] sm:$0xff]
    %v1754 = vld [vmem:[%s1744 + $0x48] sm:$0xff]
    %v1755 = vld [vmem:[%s1744 + $0x50] sm:$0xff]
    %v1756 = vld [vmem:[%s1744 + $0x58] sm:$0xff]
    %v1757 = vld [vmem:[%s1744 + $0x60] sm:$0xff]
    %v1758 = vld [vmem:[%s1744 + $0x68] sm:$0xff]
    %v1759 = vld [vmem:[%s1744 + $0x70] sm:$0xff]
    %v1760 = vld [vmem:[%s1744 + $0x78] sm:$0xff]
    %v1761 = vld [vmem:[%s1744 + $0x80] sm:$0xff]
    %v1762 = vld [vmem:[%s1744 + $0x88] sm:$0xff]
    %v1763 = vld [vmem:[%s1744 + $0x90] sm:$0xff]
    %v1764 = vld [vmem:[%s1744 + $0x98] sm:$0xff]
    %v1765 = vld [vmem:[%s1744 + $0xa0] sm:$0xff]
    %v1766 = vld [vmem:[%s1744 + $0xa8] sm:$0xff]
    %v1767 = vld [vmem:[%s1744 + $0xb0] sm:$0xff]
    %v1768 = vld [vmem:[%s1744 + $0xb8] sm:$0xff]
    %v1769 = vld [vmem:[%s1744 + $0xc0] sm:$0xff]
    %v1770 = vld [vmem:[%s1744 + $0xc8] sm:$0xff]
    %v1771 = vld [vmem:[%s1744 + $0xd0] sm:$0xff]
    %v1772 = vld [vmem:[%s1744 + $0xd8] sm:$0xff]
    %v1773 = vld [vmem:[%s1744 + $0xe0] sm:$0xff]
    %v1774 = vld [vmem:[%s1744 + $0xe8] sm:$0xff]
    %v1775 = vld [vmem:[%s1744 + $0xf0] sm:$0xff]
    %v1776 = vld [vmem:[%s1744 + $0xf8] sm:$0xff]
    %v1809 = vunpack.c.l.b16 %v1745
    %v1810 = vunpack.c.h.b16 %v1745
    %v1811 = vunpack.c.l.b16 %v1746
    %v1812 = vunpack.c.h.b16 %v1746
    %v1813 = vunpack.c.l.b16 %v1747
    %v1814 = vunpack.c.h.b16 %v1747
    %v1815 = vunpack.c.l.b16 %v1748
    %v1816 = vunpack.c.h.b16 %v1748
    %v1817 = vunpack.c.l.b16 %v1749
    %v1818 = vunpack.c.h.b16 %v1749
    %v1819 = vunpack.c.l.b16 %v1750
    %v1820 = vunpack.c.h.b16 %v1750
    %v1821 = vunpack.c.l.b16 %v1751
    %v1822 = vunpack.c.h.b16 %v1751
    %v1823 = vunpack.c.l.b16 %v1752
    %v1824 = vunpack.c.h.b16 %v1752
    %v1825 = vunpack.c.l.b16 %v1753
    %v1826 = vunpack.c.h.b16 %v1753
    %v1827 = vunpack.c.l.b16 %v1754
    %v1828 = vunpack.c.h.b16 %v1754
    %v1829 = vunpack.c.l.b16 %v1755
    %v1830 = vunpack.c.h.b16 %v1755
    %v1831 = vunpack.c.l.b16 %v1756
    %v1832 = vunpack.c.h.b16 %v1756
    %v1833 = vunpack.c.l.b16 %v1757
    %v1834 = vunpack.c.h.b16 %v1757
    %v1835 = vunpack.c.l.b16 %v1758
    %v1836 = vunpack.c.h.b16 %v1758
    %v1837 = vunpack.c.l.b16 %v1759
    %v1838 = vunpack.c.h.b16 %v1759
    %v1839 = vunpack.c.l.b16 %v1760
    %v1840 = vunpack.c.h.b16 %v1760
    %v1841 = vunpack.c.l.b16 %v1761
    %v1842 = vunpack.c.h.b16 %v1761
    %v1843 = vunpack.c.l.b16 %v1762
    %v1844 = vunpack.c.h.b16 %v1762
    %v1845 = vunpack.c.l.b16 %v1763
    %v1846 = vunpack.c.h.b16 %v1763
    %v1847 = vunpack.c.l.b16 %v1764
    %v1848 = vunpack.c.h.b16 %v1764
    %v1849 = vunpack.c.l.b16 %v1765
    %v1850 = vunpack.c.h.b16 %v1765
    %v1851 = vunpack.c.l.b16 %v1766
    %v1852 = vunpack.c.h.b16 %v1766
    %v1853 = vunpack.c.l.b16 %v1767
    %v1854 = vunpack.c.h.b16 %v1767
    %v1855 = vunpack.c.l.b16 %v1768
    %v1856 = vunpack.c.h.b16 %v1768
    %v1857 = vunpack.c.l.b16 %v1769
    %v1858 = vunpack.c.h.b16 %v1769
    %v1859 = vunpack.c.l.b16 %v1770
    %v1860 = vunpack.c.h.b16 %v1770
    %v1861 = vunpack.c.l.b16 %v1771
    %v1862 = vunpack.c.h.b16 %v1771
    %v1863 = vunpack.c.l.b16 %v1772
    %v1864 = vunpack.c.h.b16 %v1772
    %v1865 = vunpack.c.l.b16 %v1773
    %v1866 = vunpack.c.h.b16 %v1773
    %v1867 = vunpack.c.l.b16 %v1774
    %v1868 = vunpack.c.h.b16 %v1774
    %v1869 = vunpack.c.l.b16 %v1775
    %v1870 = vunpack.c.h.b16 %v1775
    %v1871 = vunpack.c.l.b16 %v1776
    %v1872 = vunpack.c.h.b16 %v1776
    %v1873 = vpack.c.b16 %v1811, %v1809
    %v1874 = vpack.c.b16 %v1812, %v1810
    %v1875 = vpack.c.b16 %v1815, %v1813
    %v1876 = vpack.c.b16 %v1816, %v1814
    %v1877 = vpack.c.b16 %v1819, %v1817
    %v1878 = vpack.c.b16 %v1820, %v1818
    %v1879 = vpack.c.b16 %v1823, %v1821
    %v1880 = vpack.c.b16 %v1824, %v1822
    %v1881 = vpack.c.b16 %v1827, %v1825
    %v1882 = vpack.c.b16 %v1828, %v1826
    %v1883 = vpack.c.b16 %v1831, %v1829
    %v1884 = vpack.c.b16 %v1832, %v1830
    %v1885 = vpack.c.b16 %v1835, %v1833
    %v1886 = vpack.c.b16 %v1836, %v1834
    %v1887 = vpack.c.b16 %v1839, %v1837
    %v1888 = vpack.c.b16 %v1840, %v1838
    %v1889 = vpack.c.b16 %v1843, %v1841
    %v1890 = vpack.c.b16 %v1844, %v1842
    %v1891 = vpack.c.b16 %v1847, %v1845
    %v1892 = vpack.c.b16 %v1848, %v1846
    %v1893 = vpack.c.b16 %v1851, %v1849
    %v1894 = vpack.c.b16 %v1852, %v1850
    %v1895 = vpack.c.b16 %v1855, %v1853
    %v1896 = vpack.c.b16 %v1856, %v1854
    %v1897 = vpack.c.b16 %v1859, %v1857
    %v1898 = vpack.c.b16 %v1860, %v1858
    %v1899 = vpack.c.b16 %v1863, %v1861
    %v1900 = vpack.c.b16 %v1864, %v1862
    %v1901 = vpack.c.b16 %v1867, %v1865
    %v1902 = vpack.c.b16 %v1868, %v1866
    %v1903 = vpack.c.b16 %v1871, %v1869
    %v1904 = vpack.c.b16 %v1872, %v1870
    %1937 = vmatprep.subr.bf16.mxu0 %v1874
    %1938 = vmatpush1.bf16.msra.mxu0 %v1873
    %1939 = vmatprep.subr.bf16.mxu0 %v1876
    %1940 = vmatpush1.bf16.msra.mxu0 %v1875
    %1941 = vmatprep.subr.bf16.mxu0 %v1878
    %1942 = vmatpush1.bf16.msra.mxu0 %v1877
    %1943 = vmatprep.subr.bf16.mxu0 %v1880
    %1944 = vmatpush1.bf16.msra.mxu0 %v1879
    %1945 = vmatprep.subr.bf16.mxu0 %v1882
    %1946 = vmatpush1.bf16.msra.mxu0 %v1881
    %1947 = vmatprep.subr.bf16.mxu0 %v1884
    %1948 = vmatpush1.bf16.msra.mxu0 %v1883
    %1949 = vmatprep.subr.bf16.mxu0 %v1886
    %1950 = vmatpush1.bf16.msra.mxu0 %v1885
    %1951 = vmatprep.subr.bf16.mxu0 %v1888
    %1952 = vmatpush1.bf16.msra.mxu0 %v1887
    %1953 = vmatprep.subr.bf16.mxu0 %v1890
    %1954 = vmatpush1.bf16.msra.mxu0 %v1889
    %1955 = vmatprep.subr.bf16.mxu0 %v1892
    %1956 = vmatpush1.bf16.msra.mxu0 %v1891
    %1957 = vmatprep.subr.bf16.mxu0 %v1894
    %1958 = vmatpush1.bf16.msra.mxu0 %v1893
    %1959 = vmatprep.subr.bf16.mxu0 %v1896
    %1960 = vmatpush1.bf16.msra.mxu0 %v1895
    %1961 = vmatprep.subr.bf16.mxu0 %v1898
    %1962 = vmatpush1.bf16.msra.mxu0 %v1897
    %1963 = vmatprep.subr.bf16.mxu0 %v1900
    %1964 = vmatpush1.bf16.msra.mxu0 %v1899
    %1965 = vmatprep.subr.bf16.mxu0 %v1902
    %1966 = vmatpush1.bf16.msra.mxu0 %v1901
    %1967 = vmatprep.subr.bf16.mxu0 %v1904
    %1968 = vmatpush1.bf16.msra.mxu0 %v1903
    %1969 = vmatprep.mubr.bf16.mxu0 %v269
    %1970 = vmatmul.mubr.bf16.gmra.mrb[0].mxu0 %v268
    %v1971 = vpop.f32.mrb[0].mxu0
    %v1972 = vadd.f32 0.0, %v1971
    %v1973 = vpop.f32.mrb[0].mxu0
    %v1974 = vadd.f32 0.0, %v1973
    %v1975 = vpop.f32.mrb[0].mxu0
    %v1976 = vadd.f32 0.0, %v1975
    %v1977 = vpop.f32.mrb[0].mxu0
    %v1978 = vadd.f32 0.0, %v1977
    %1979 = vmatprep.mubr.bf16.mxu0 %v271
    %1980 = vmatmul.mubr.bf16.gmra.mrb[0].mxu0 %v270
    %v1981 = vpop.f32.mrb[0].mxu0
    %v1982 = vadd.f32 0.0, %v1981
    %v1983 = vpop.f32.mrb[0].mxu0
    %v1984 = vadd.f32 0.0, %v1983
    %v1985 = vpop.f32.mrb[0].mxu0
    %v1986 = vadd.f32 0.0, %v1985
    %v1987 = vpop.f32.mrb[0].mxu0
    %v1988 = vadd.f32 0.0, %v1987
    %1989 = vmatprep.mubr.bf16.mxu0 %v273
    %1990 = vmatmul.mubr.bf16.gmra.mrb[0].mxu0 %v272
    %v1991 = vpop.f32.mrb[0].mxu0
    %v1992 = vadd.f32 0.0, %v1991
    %v1993 = vpop.f32.mrb[0].mxu0
    %v1994 = vadd.f32 0.0, %v1993
    %v1995 = vpop.f32.mrb[0].mxu0
    %v1996 = vadd.f32 0.0, %v1995
    %v1997 = vpop.f32.mrb[0].mxu0
    %v1998 = vadd.f32 0.0, %v1997
    %1999 = vdwg.mxu0
    %v2000 = vadd.f32 %v1716, %v1972
    %v2001 = vadd.f32 %v1718, %v1974
    %v2002 = vadd.f32 %v1720, %v1976
    %v2003 = vadd.f32 %v1722, %v1978
    %v2004 = vadd.f32 %v1726, %v1982
    %v2005 = vadd.f32 %v1728, %v1984
    %v2006 = vadd.f32 %v1730, %v1986
    %v2007 = vadd.f32 %v1732, %v1988
    %v2008 = vadd.f32 %v1736, %v1992
    %v2009 = vadd.f32 %v1738, %v1994
    %v2010 = vadd.f32 %v1740, %v1996
    %v2011 = vadd.f32 %v1742, %v1998
    %s2012 = scalar_lea.vmem [#allocation7], 768
    %v2013 = vld [vmem:[%s2012] sm:$0xff]
    %v2014 = vld [vmem:[%s2012 + $0x8] sm:$0xff]
    %v2015 = vld [vmem:[%s2012 + $0x10] sm:$0xff]
    %v2016 = vld [vmem:[%s2012 + $0x18] sm:$0xff]
    %v2017 = vld [vmem:[%s2012 + $0x20] sm:$0xff]
    %v2018 = vld [vmem:[%s2012 + $0x28] sm:$0xff]
    %v2019 = vld [vmem:[%s2012 + $0x30] sm:$0xff]
    %v2020 = vld [vmem:[%s2012 + $0x38] sm:$0xff]
    %v2021 = vld [vmem:[%s2012 + $0x40] sm:$0xff]
    %v2022 = vld [vmem:[%s2012 + $0x48] sm:$0xff]
    %v2023 = vld [vmem:[%s2012 + $0x50] sm:$0xff]
    %v2024 = vld [vmem:[%s2012 + $0x58] sm:$0xff]
    %v2025 = vld [vmem:[%s2012 + $0x60] sm:$0xff]
    %v2026 = vld [vmem:[%s2012 + $0x68] sm:$0xff]
    %v2027 = vld [vmem:[%s2012 + $0x70] sm:$0xff]
    %v2028 = vld [vmem:[%s2012 + $0x78] sm:$0xff]
    %v2029 = vld [vmem:[%s2012 + $0x80] sm:$0xff]
    %v2030 = vld [vmem:[%s2012 + $0x88] sm:$0xff]
    %v2031 = vld [vmem:[%s2012 + $0x90] sm:$0xff]
    %v2032 = vld [vmem:[%s2012 + $0x98] sm:$0xff]
    %v2033 = vld [vmem:[%s2012 + $0xa0] sm:$0xff]
    %v2034 = vld [vmem:[%s2012 + $0xa8] sm:$0xff]
    %v2035 = vld [vmem:[%s2012 + $0xb0] sm:$0xff]
    %v2036 = vld [vmem:[%s2012 + $0xb8] sm:$0xff]
    %v2037 = vld [vmem:[%s2012 + $0xc0] sm:$0xff]
    %v2038 = vld [vmem:[%s2012 + $0xc8] sm:$0xff]
    %v2039 = vld [vmem:[%s2012 + $0xd0] sm:$0xff]
    %v2040 = vld [vmem:[%s2012 + $0xd8] sm:$0xff]
    %v2041 = vld [vmem:[%s2012 + $0xe0] sm:$0xff]
    %v2042 = vld [vmem:[%s2012 + $0xe8] sm:$0xff]
    %v2043 = vld [vmem:[%s2012 + $0xf0] sm:$0xff]
    %v2044 = vld [vmem:[%s2012 + $0xf8] sm:$0xff]
    %v2077 = vunpack.c.l.b16 %v2013
    %v2078 = vunpack.c.h.b16 %v2013
    %v2079 = vunpack.c.l.b16 %v2014
    %v2080 = vunpack.c.h.b16 %v2014
    %v2081 = vunpack.c.l.b16 %v2015
    %v2082 = vunpack.c.h.b16 %v2015
    %v2083 = vunpack.c.l.b16 %v2016
    %v2084 = vunpack.c.h.b16 %v2016
    %v2085 = vunpack.c.l.b16 %v2017
    %v2086 = vunpack.c.h.b16 %v2017
    %v2087 = vunpack.c.l.b16 %v2018
    %v2088 = vunpack.c.h.b16 %v2018
    %v2089 = vunpack.c.l.b16 %v2019
    %v2090 = vunpack.c.h.b16 %v2019
    %v2091 = vunpack.c.l.b16 %v2020
    %v2092 = vunpack.c.h.b16 %v2020
    %v2093 = vunpack.c.l.b16 %v2021
    %v2094 = vunpack.c.h.b16 %v2021
    %v2095 = vunpack.c.l.b16 %v2022
    %v2096 = vunpack.c.h.b16 %v2022
    %v2097 = vunpack.c.l.b16 %v2023
    %v2098 = vunpack.c.h.b16 %v2023
    %v2099 = vunpack.c.l.b16 %v2024
    %v2100 = vunpack.c.h.b16 %v2024
    %v2101 = vunpack.c.l.b16 %v2025
    %v2102 = vunpack.c.h.b16 %v2025
    %v2103 = vunpack.c.l.b16 %v2026
    %v2104 = vunpack.c.h.b16 %v2026
    %v2105 = vunpack.c.l.b16 %v2027
    %v2106 = vunpack.c.h.b16 %v2027
    %v2107 = vunpack.c.l.b16 %v2028
    %v2108 = vunpack.c.h.b16 %v2028
    %v2109 = vunpack.c.l.b16 %v2029
    %v2110 = vunpack.c.h.b16 %v2029
    %v2111 = vunpack.c.l.b16 %v2030
    %v2112 = vunpack.c.h.b16 %v2030
    %v2113 = vunpack.c.l.b16 %v2031
    %v2114 = vunpack.c.h.b16 %v2031
    %v2115 = vunpack.c.l.b16 %v2032
    %v2116 = vunpack.c.h.b16 %v2032
    %v2117 = vunpack.c.l.b16 %v2033
    %v2118 = vunpack.c.h.b16 %v2033
    %v2119 = vunpack.c.l.b16 %v2034
    %v2120 = vunpack.c.h.b16 %v2034
    %v2121 = vunpack.c.l.b16 %v2035
    %v2122 = vunpack.c.h.b16 %v2035
    %v2123 = vunpack.c.l.b16 %v2036
    %v2124 = vunpack.c.h.b16 %v2036
    %v2125 = vunpack.c.l.b16 %v2037
    %v2126 = vunpack.c.h.b16 %v2037
    %v2127 = vunpack.c.l.b16 %v2038
    %v2128 = vunpack.c.h.b16 %v2038
    %v2129 = vunpack.c.l.b16 %v2039
    %v2130 = vunpack.c.h.b16 %v2039
    %v2131 = vunpack.c.l.b16 %v2040
    %v2132 = vunpack.c.h.b16 %v2040
    %v2133 = vunpack.c.l.b16 %v2041
    %v2134 = vunpack.c.h.b16 %v2041
    %v2135 = vunpack.c.l.b16 %v2042
    %v2136 = vunpack.c.h.b16 %v2042
    %v2137 = vunpack.c.l.b16 %v2043
    %v2138 = vunpack.c.h.b16 %v2043
    %v2139 = vunpack.c.l.b16 %v2044
    %v2140 = vunpack.c.h.b16 %v2044
    %v2141 = vpack.c.b16 %v2079, %v2077
    %v2142 = vpack.c.b16 %v2080, %v2078
    %v2143 = vpack.c.b16 %v2083, %v2081
    %v2144 = vpack.c.b16 %v2084, %v2082
    %v2145 = vpack.c.b16 %v2087, %v2085
    %v2146 = vpack.c.b16 %v2088, %v2086
    %v2147 = vpack.c.b16 %v2091, %v2089
    %v2148 = vpack.c.b16 %v2092, %v2090
    %v2149 = vpack.c.b16 %v2095, %v2093
    %v2150 = vpack.c.b16 %v2096, %v2094
    %v2151 = vpack.c.b16 %v2099, %v2097
    %v2152 = vpack.c.b16 %v2100, %v2098
    %v2153 = vpack.c.b16 %v2103, %v2101
    %v2154 = vpack.c.b16 %v2104, %v2102
    %v2155 = vpack.c.b16 %v2107, %v2105
    %v2156 = vpack.c.b16 %v2108, %v2106
    %v2157 = vpack.c.b16 %v2111, %v2109
    %v2158 = vpack.c.b16 %v2112, %v2110
    %v2159 = vpack.c.b16 %v2115, %v2113
    %v2160 = vpack.c.b16 %v2116, %v2114
    %v2161 = vpack.c.b16 %v2119, %v2117
    %v2162 = vpack.c.b16 %v2120, %v2118
    %v2163 = vpack.c.b16 %v2123, %v2121
    %v2164 = vpack.c.b16 %v2124, %v2122
    %v2165 = vpack.c.b16 %v2127, %v2125
    %v2166 = vpack.c.b16 %v2128, %v2126
    %v2167 = vpack.c.b16 %v2131, %v2129
    %v2168 = vpack.c.b16 %v2132, %v2130
    %v2169 = vpack.c.b16 %v2135, %v2133
    %v2170 = vpack.c.b16 %v2136, %v2134
    %v2171 = vpack.c.b16 %v2139, %v2137
    %v2172 = vpack.c.b16 %v2140, %v2138
    %2205 = vmatprep.subr.bf16.mxu0 %v2142
    %2206 = vmatpush1.bf16.msra.mxu0 %v2141
    %2207 = vmatprep.subr.bf16.mxu0 %v2144
    %2208 = vmatpush1.bf16.msra.mxu0 %v2143
    %2209 = vmatprep.subr.bf16.mxu0 %v2146
    %2210 = vmatpush1.bf16.msra.mxu0 %v2145
    %2211 = vmatprep.subr.bf16.mxu0 %v2148
    %2212 = vmatpush1.bf16.msra.mxu0 %v2147
    %2213 = vmatprep.subr.bf16.mxu0 %v2150
    %2214 = vmatpush1.bf16.msra.mxu0 %v2149
    %2215 = vmatprep.subr.bf16.mxu0 %v2152
    %2216 = vmatpush1.bf16.msra.mxu0 %v2151
    %2217 = vmatprep.subr.bf16.mxu0 %v2154
    %2218 = vmatpush1.bf16.msra.mxu0 %v2153
    %2219 = vmatprep.subr.bf16.mxu0 %v2156
    %2220 = vmatpush1.bf16.msra.mxu0 %v2155
    %2221 = vmatprep.subr.bf16.mxu0 %v2158
    %2222 = vmatpush1.bf16.msra.mxu0 %v2157
    %2223 = vmatprep.subr.bf16.mxu0 %v2160
    %2224 = vmatpush1.bf16.msra.mxu0 %v2159
    %2225 = vmatprep.subr.bf16.mxu0 %v2162
    %2226 = vmatpush1.bf16.msra.mxu0 %v2161
    %2227 = vmatprep.subr.bf16.mxu0 %v2164
    %2228 = vmatpush1.bf16.msra.mxu0 %v2163
    %2229 = vmatprep.subr.bf16.mxu0 %v2166
    %2230 = vmatpush1.bf16.msra.mxu0 %v2165
    %2231 = vmatprep.subr.bf16.mxu0 %v2168
    %2232 = vmatpush1.bf16.msra.mxu0 %v2167
    %2233 = vmatprep.subr.bf16.mxu0 %v2170
    %2234 = vmatpush1.bf16.msra.mxu0 %v2169
    %2235 = vmatprep.subr.bf16.mxu0 %v2172
    %2236 = vmatpush1.bf16.msra.mxu0 %v2171
    %2237 = vmatprep.mubr.bf16.mxu0 %v839
    %2238 = vmatmul.mubr.bf16.gmra.mrb[0].mxu0 %v838
    %v2239 = vpop.f32.mrb[0].mxu0
    %v2240 = vadd.f32 0.0, %v2239
    %v2241 = vpop.f32.mrb[0].mxu0
    %v2242 = vadd.f32 0.0, %v2241
    %v2243 = vpop.f32.mrb[0].mxu0
    %v2244 = vadd.f32 0.0, %v2243
    %v2245 = vpop.f32.mrb[0].mxu0
    %v2246 = vadd.f32 0.0, %v2245
    %2247 = vmatprep.mubr.bf16.mxu0 %v841
    %2248 = vmatmul.mubr.bf16.gmra.mrb[0].mxu0 %v840
    %v2249 = vpop.f32.mrb[0].mxu0
    %v2250 = vadd.f32 0.0, %v2249
    %v2251 = vpop.f32.mrb[0].mxu0
    %v2252 = vadd.f32 0.0, %v2251
    %v2253 = vpop.f32.mrb[0].mxu0
    %v2254 = vadd.f32 0.0, %v2253
    %v2255 = vpop.f32.mrb[0].mxu0
    %v2256 = vadd.f32 0.0, %v2255
    %2257 = vmatprep.mubr.bf16.mxu0 %v843
    %2258 = vmatmul.mubr.bf16.gmra.mrb[0].mxu0 %v842
    %v2259 = vpop.f32.mrb[0].mxu0
    %v2260 = vadd.f32 0.0, %v2259
    %v2261 = vpop.f32.mrb[0].mxu0
    %v2262 = vadd.f32 0.0, %v2261
    %v2263 = vpop.f32.mrb[0].mxu0
    %v2264 = vadd.f32 0.0, %v2263
    %v2265 = vpop.f32.mrb[0].mxu0
    %v2266 = vadd.f32 0.0, %v2265
    %2267 = vdwg.mxu0
    %v2268 = vadd.f32 %v2000, %v2240
    %v2269 = vadd.f32 %v2001, %v2242
    %v2270 = vadd.f32 %v2002, %v2244
    %v2271 = vadd.f32 %v2003, %v2246
    %v2272 = vadd.f32 %v2004, %v2250
    %v2273 = vadd.f32 %v2005, %v2252
    %v2274 = vadd.f32 %v2006, %v2254
    %v2275 = vadd.f32 %v2007, %v2256
    %v2276 = vadd.f32 %v2008, %v2260
    %v2277 = vadd.f32 %v2009, %v2262
    %v2278 = vadd.f32 %v2010, %v2264
    %v2279 = vadd.f32 %v2011, %v2266
    %v2281 = vlaneseq
    %v2282 = vshrl.u32 %v2281, 7
    %v2283 = vsub.s32 0, %v2282
    %v2284 = vrot.slane %v1208, %v2283
    %v2285 = vlaneseq
    %v2286 = vshrl.u32 %v2285, 7
    %v2287 = vsub.s32 1, %v2286
    %v2288 = vrot.slane %v1208, %v2287
    %v2291 = vadd.f32 %v2268, %v2284
    %v2292 = vadd.f32 %v2269, %v2288
    %v2293 = vadd.f32 %v2270, %v2284
    %v2294 = vadd.f32 %v2271, %v2288
    %v2295 = vadd.f32 %v2272, %v2284
    %v2296 = vadd.f32 %v2273, %v2288
    %v2297 = vadd.f32 %v2274, %v2284
    %v2298 = vadd.f32 %v2275, %v2288
    %v2299 = vadd.f32 %v2276, %v2284
    %v2300 = vadd.f32 %v2277, %v2288
    %v2301 = vadd.f32 %v2278, %v2284
    %v2302 = vadd.f32 %v2279, %v2288
    %v2303 = vmax.f32 %v2291, 0.0
    %v2304 = vmax.f32 %v2292, 0.0
    %v2305 = vmax.f32 %v2293, 0.0
    %v2306 = vmax.f32 %v2294, 0.0
    %v2307 = vmax.f32 %v2295, 0.0
    %v2308 = vmax.f32 %v2296, 0.0
    %v2309 = vmax.f32 %v2297, 0.0
    %v2310 = vmax.f32 %v2298, 0.0
    %v2311 = vmax.f32 %v2299, 0.0
    %v2312 = vmax.f32 %v2300, 0.0
    %v2313 = vmax.f32 %v2301, 0.0
    %v2314 = vmax.f32 %v2302, 0.0
    %vm2315 = vcmp.lt.s32.totalorder %v85, 17
    %vm2316 = vcmp.lt.s32.totalorder %v86, 17
    %vm2317 = vcmp.lt.s32.totalorder %v87, 17
    %v2318 = vsel %vm2315, 1, 0
    %v2319 = vsel %vm2316, 1, 0
    %v2320 = vsel %vm2317, 1, 0
    %vm2321 = vcmp.eq.s32.totalorder %v2318, 1
    %vm2322 = vcmp.eq.s32.totalorder %v2319, 1
    %vm2323 = vcmp.eq.s32.totalorder %v2320, 1
    %v2324 = vsel %vm2321, %v2303, 0.0
    %v2325 = vsel %vm2321, %v2304, 0.0
    %v2326 = vsel %vm2322, %v2305, 0.0
    %v2327 = vsel %vm2322, %v2306, 0.0
    %v2328 = vsel %vm2323, %v2307, 0.0
    %v2329 = vsel %vm2323, %v2308, 0.0
    %v2330 = vsel %vm2321, %v2309, 0.0
    %v2331 = vsel %vm2321, %v2310, 0.0
    %v2332 = vsel %vm2322, %v2311, 0.0
    %v2333 = vsel %vm2322, %v2312, 0.0
    %v2334 = vsel %vm2323, %v2313, 0.0
    %v2335 = vsel %vm2323, %v2314, 0.0
    %v2336 = vmax.f32 %v2324, %v2326
    %v2337 = vmax.f32 %v2336, %v2328
    %v2338 = vrot.slane %v2337, 4
    %v2339 = vmax.f32 %v2337, %v2338
    %v2340 = vrot.slane %v2339, 2
    %v2341 = vmax.f32 %v2339, %v2340
    %v2342 = vrot.slane %v2341, 1
    %v2343 = vmax.f32 %v2341, %v2342
    %v2344 = vmax.f32 %v2325, %v2327
    %v2345 = vmax.f32 %v2344, %v2329
    %v2346 = vrot.slane %v2345, 4
    %v2347 = vmax.f32 %v2345, %v2346
    %v2348 = vrot.slane %v2347, 2
    %v2349 = vmax.f32 %v2347, %v2348
    %v2350 = vrot.slane %v2349, 1
    %v2351 = vmax.f32 %v2349, %v2350
    %v2352 = vmax.f32 %v2330, %v2332
    %v2353 = vmax.f32 %v2352, %v2334
    %v2354 = vrot.slane %v2353, 4
    %v2355 = vmax.f32 %v2353, %v2354
    %v2356 = vrot.slane %v2355, 2
    %v2357 = vmax.f32 %v2355, %v2356
    %v2358 = vrot.slane %v2357, 1
    %v2359 = vmax.f32 %v2357, %v2358
    %v2360 = vmax.f32 %v2331, %v2333
    %v2361 = vmax.f32 %v2360, %v2335
    %v2362 = vrot.slane %v2361, 4
    %v2363 = vmax.f32 %v2361, %v2362
    %v2364 = vrot.slane %v2363, 2
    %v2365 = vmax.f32 %v2363, %v2364
    %v2366 = vrot.slane %v2365, 1
    %v2367 = vmax.f32 %v2365, %v2366
    %v2372 = vcombine.low %v2343, %v2351
    %v2374 = vunpack.c.l.s4 1983009808
    %v2375 = vunpack.c.0.s8 %v2374
    %v2376 = vlaneseq
    %v2377 = vshrl.u32 %v2376, 7
    %v2378 = vsub.s32 %v2375, %v2377
    %v2379 = vrot.slane %v2372, %v2378
    %v2380 = vcombine.low %v2359, %v2367
    %v2382 = vunpack.c.l.s4 1983009808
    %v2383 = vunpack.c.0.s8 %v2382
    %v2384 = vlaneseq
    %v2385 = vshrl.u32 %v2384, 7
    %v2386 = vsub.s32 %v2383, %v2385
    %v2387 = vrot.slane %v2380, %v2386
    %v2388 = vsel %vm1193, %v2379, %v2379
    %v2389 = vsel %vm1195, %v2379, %v2388
    %v2390 = vrot.slane %v2387, 7
    %v2391 = vsel %vm1198, %v2390, %v2389
    %v2392 = vsel %vm1200, %v2390, %v2391
    %v2393 = vsel %vm1202, %v2390, %v2392
    %v2394 = vsel %vm1204, %v2390, %v2393
    %2396 = vst [vmem:[#allocation10 + $0x4] sm:$0xf] %v2394
    %v2397 = vld [vmem:[%s4 + $0x4] sm:$0x3]
    %v2398 = vld [vmem:[#allocation8] sm:$0xff]
    %v2399 = vld [vmem:[#allocation8 + $0x8] sm:$0xff]
    %v2400 = vld [vmem:[#allocation8 + $0x10] sm:$0xff]
    %v2401 = vld [vmem:[#allocation8 + $0x18] sm:$0xff]
    %v2402 = vld [vmem:[#allocation8 + $0x20] sm:$0xff]
    %v2403 = vld [vmem:[#allocation8 + $0x28] sm:$0xff]
    %v2404 = vld [vmem:[#allocation8 + $0x30] sm:$0xff]
    %v2405 = vld [vmem:[#allocation8 + $0x38] sm:$0xff]
    %v2406 = vld [vmem:[#allocation8 + $0x40] sm:$0xff]
    %v2407 = vld [vmem:[#allocation8 + $0x48] sm:$0xff]
    %v2408 = vld [vmem:[#allocation8 + $0x50] sm:$0xff]
    %v2409 = vld [vmem:[#allocation8 + $0x58] sm:$0xff]
    %v2410 = vld [vmem:[#allocation8 + $0x60] sm:$0xff]
    %v2411 = vld [vmem:[#allocation8 + $0x68] sm:$0xff]
    %v2412 = vld [vmem:[#allocation8 + $0x70] sm:$0xff]
    %v2413 = vld [vmem:[#allocation8 + $0x78] sm:$0xff]
    %v2414 = vld [vmem:[#allocation8 + $0x80] sm:$0xff]
    %v2415 = vld [vmem:[#allocation8 + $0x88] sm:$0xff]
    %v2416 = vld [vmem:[#allocation8 + $0x90] sm:$0xff]
    %v2417 = vld [vmem:[#allocation8 + $0x98] sm:$0xff]
    %v2418 = vld [vmem:[#allocation8 + $0xa0] sm:$0xff]
    %v2419 = vld [vmem:[#allocation8 + $0xa8] sm:$0xff]
    %v2420 = vld [vmem:[#allocation8 + $0xb0] sm:$0xff]
    %v2421 = vld [vmem:[#allocation8 + $0xb8] sm:$0xff]
    %v2422 = vld [vmem:[#allocation8 + $0xc0] sm:$0xff]
    %v2423 = vld [vmem:[#allocation8 + $0xc8] sm:$0xff]
    %v2424 = vld [vmem:[#allocation8 + $0xd0] sm:$0xff]
    %v2425 = vld [vmem:[#allocation8 + $0xd8] sm:$0xff]
    %v2426 = vld [vmem:[#allocation8 + $0xe0] sm:$0xff]
    %v2427 = vld [vmem:[#allocation8 + $0xe8] sm:$0xff]
    %v2428 = vld [vmem:[#allocation8 + $0xf0] sm:$0xff]
    %v2429 = vld [vmem:[#allocation8 + $0xf8] sm:$0xff]
    %s2430 = scalar_lea.vmem [#allocation8], 256
    %v2431 = vld [vmem:[%s2430] sm:$0xff]
    %v2432 = vld [vmem:[%s2430 + $0x8] sm:$0xff]
    %v2433 = vld [vmem:[%s2430 + $0x10] sm:$0xff]
    %v2434 = vld [vmem:[%s2430 + $0x18] sm:$0xff]
    %v2435 = vld [vmem:[%s2430 + $0x20] sm:$0xff]
    %v2436 = vld [vmem:[%s2430 + $0x28] sm:$0xff]
    %v2437 = vld [vmem:[%s2430 + $0x30] sm:$0xff]
    %v2438 = vld [vmem:[%s2430 + $0x38] sm:$0xff]
    %v2439 = vld [vmem:[%s2430 + $0x40] sm:$0xff]
    %v2440 = vld [vmem:[%s2430 + $0x48] sm:$0xff]
    %v2441 = vld [vmem:[%s2430 + $0x50] sm:$0xff]
    %v2442 = vld [vmem:[%s2430 + $0x58] sm:$0xff]
    %v2443 = vld [vmem:[%s2430 + $0x60] sm:$0xff]
    %v2444 = vld [vmem:[%s2430 + $0x68] sm:$0xff]
    %v2445 = vld [vmem:[%s2430 + $0x70] sm:$0xff]
    %v2446 = vld [vmem:[%s2430 + $0x78] sm:$0xff]
    %v2447 = vld [vmem:[%s2430 + $0x80] sm:$0xff]
    %v2448 = vld [vmem:[%s2430 + $0x88] sm:$0xff]
    %v2449 = vld [vmem:[%s2430 + $0x90] sm:$0xff]
    %v2450 = vld [vmem:[%s2430 + $0x98] sm:$0xff]
    %v2451 = vld [vmem:[%s2430 + $0xa0] sm:$0xff]
    %v2452 = vld [vmem:[%s2430 + $0xa8] sm:$0xff]
    %v2453 = vld [vmem:[%s2430 + $0xb0] sm:$0xff]
    %v2454 = vld [vmem:[%s2430 + $0xb8] sm:$0xff]
    %v2455 = vld [vmem:[%s2430 + $0xc0] sm:$0xff]
    %v2456 = vld [vmem:[%s2430 + $0xc8] sm:$0xff]
    %v2457 = vld [vmem:[%s2430 + $0xd0] sm:$0xff]
    %v2458 = vld [vmem:[%s2430 + $0xd8] sm:$0xff]
    %v2459 = vld [vmem:[%s2430 + $0xe0] sm:$0xff]
    %v2460 = vld [vmem:[%s2430 + $0xe8] sm:$0xff]
    %v2461 = vld [vmem:[%s2430 + $0xf0] sm:$0xff]
    %v2462 = vld [vmem:[%s2430 + $0xf8] sm:$0xff]
    %v2495 = vunpack.c.l.b16 %v2431
    %v2496 = vunpack.c.h.b16 %v2431
    %v2497 = vunpack.c.l.b16 %v2432
    %v2498 = vunpack.c.h.b16 %v2432
    %v2499 = vunpack.c.l.b16 %v2433
    %v2500 = vunpack.c.h.b16 %v2433
    %v2501 = vunpack.c.l.b16 %v2434
    %v2502 = vunpack.c.h.b16 %v2434
    %v2503 = vunpack.c.l.b16 %v2435
    %v2504 = vunpack.c.h.b16 %v2435
    %v2505 = vunpack.c.l.b16 %v2436
    %v2506 = vunpack.c.h.b16 %v2436
    %v2507 = vunpack.c.l.b16 %v2437
    %v2508 = vunpack.c.h.b16 %v2437
    %v2509 = vunpack.c.l.b16 %v2438
    %v2510 = vunpack.c.h.b16 %v2438
    %v2511 = vunpack.c.l.b16 %v2439
    %v2512 = vunpack.c.h.b16 %v2439
    %v2513 = vunpack.c.l.b16 %v2440
    %v2514 = vunpack.c.h.b16 %v2440
    %v2515 = vunpack.c.l.b16 %v2441
    %v2516 = vunpack.c.h.b16 %v2441
    %v2517 = vunpack.c.l.b16 %v2442
    %v2518 = vunpack.c.h.b16 %v2442
    %v2519 = vunpack.c.l.b16 %v2443
    %v2520 = vunpack.c.h.b16 %v2443
    %v2521 = vunpack.c.l.b16 %v2444
    %v2522 = vunpack.c.h.b16 %v2444
    %v2523 = vunpack.c.l.b16 %v2445
    %v2524 = vunpack.c.h.b16 %v2445
    %v2525 = vunpack.c.l.b16 %v2446
    %v2526 = vunpack.c.h.b16 %v2446
    %v2527 = vunpack.c.l.b16 %v2447
    %v2528 = vunpack.c.h.b16 %v2447
    %v2529 = vunpack.c.l.b16 %v2448
    %v2530 = vunpack.c.h.b16 %v2448
    %v2531 = vunpack.c.l.b16 %v2449
    %v2532 = vunpack.c.h.b16 %v2449
    %v2533 = vunpack.c.l.b16 %v2450
    %v2534 = vunpack.c.h.b16 %v2450
    %v2535 = vunpack.c.l.b16 %v2451
    %v2536 = vunpack.c.h.b16 %v2451
    %v2537 = vunpack.c.l.b16 %v2452
    %v2538 = vunpack.c.h.b16 %v2452
    %v2539 = vunpack.c.l.b16 %v2453
    %v2540 = vunpack.c.h.b16 %v2453
    %v2541 = vunpack.c.l.b16 %v2454
    %v2542 = vunpack.c.h.b16 %v2454
    %v2543 = vunpack.c.l.b16 %v2455
    %v2544 = vunpack.c.h.b16 %v2455
    %v2545 = vunpack.c.l.b16 %v2456
    %v2546 = vunpack.c.h.b16 %v2456
    %v2547 = vunpack.c.l.b16 %v2457
    %v2548 = vunpack.c.h.b16 %v2457
    %v2549 = vunpack.c.l.b16 %v2458
    %v2550 = vunpack.c.h.b16 %v2458
    %v2551 = vunpack.c.l.b16 %v2459
    %v2552 = vunpack.c.h.b16 %v2459
    %v2553 = vunpack.c.l.b16 %v2460
    %v2554 = vunpack.c.h.b16 %v2460
    %v2555 = vunpack.c.l.b16 %v2461
    %v2556 = vunpack.c.h.b16 %v2461
    %v2557 = vunpack.c.l.b16 %v2462
    %v2558 = vunpack.c.h.b16 %v2462
    %v2559 = vpack.c.b16 %v2497, %v2495
    %v2560 = vpack.c.b16 %v2498, %v2496
    %v2561 = vpack.c.b16 %v2501, %v2499
    %v2562 = vpack.c.b16 %v2502, %v2500
    %v2563 = vpack.c.b16 %v2505, %v2503
    %v2564 = vpack.c.b16 %v2506, %v2504
    %v2565 = vpack.c.b16 %v2509, %v2507
    %v2566 = vpack.c.b16 %v2510, %v2508
    %v2567 = vpack.c.b16 %v2513, %v2511
    %v2568 = vpack.c.b16 %v2514, %v2512
    %v2569 = vpack.c.b16 %v2517, %v2515
    %v2570 = vpack.c.b16 %v2518, %v2516
    %v2571 = vpack.c.b16 %v2521, %v2519
    %v2572 = vpack.c.b16 %v2522, %v2520
    %v2573 = vpack.c.b16 %v2525, %v2523
    %v2574 = vpack.c.b16 %v2526, %v2524
    %v2575 = vpack.c.b16 %v2529, %v2527
    %v2576 = vpack.c.b16 %v2530, %v2528
    %v2577 = vpack.c.b16 %v2533, %v2531
    %v2578 = vpack.c.b16 %v2534, %v2532
    %v2579 = vpack.c.b16 %v2537, %v2535
    %v2580 = vpack.c.b16 %v2538, %v2536
    %v2581 = vpack.c.b16 %v2541, %v2539
    %v2582 = vpack.c.b16 %v2542, %v2540
    %v2583 = vpack.c.b16 %v2545, %v2543
    %v2584 = vpack.c.b16 %v2546, %v2544
    %v2585 = vpack.c.b16 %v2549, %v2547
    %v2586 = vpack.c.b16 %v2550, %v2548
    %v2587 = vpack.c.b16 %v2553, %v2551
    %v2588 = vpack.c.b16 %v2554, %v2552
    %v2589 = vpack.c.b16 %v2557, %v2555
    %v2590 = vpack.c.b16 %v2558, %v2556
    %2623 = vmatprep.subr.bf16.mxu0 %v2560
    %2624 = vmatpush1.bf16.msra.mxu0 %v2559
    %2625 = vmatprep.subr.bf16.mxu0 %v2562
    %2626 = vmatpush1.bf16.msra.mxu0 %v2561
    %2627 = vmatprep.subr.bf16.mxu0 %v2564
    %2628 = vmatpush1.bf16.msra.mxu0 %v2563
    %2629 = vmatprep.subr.bf16.mxu0 %v2566
    %2630 = vmatpush1.bf16.msra.mxu0 %v2565
    %2631 = vmatprep.subr.bf16.mxu0 %v2568
    %2632 = vmatpush1.bf16.msra.mxu0 %v2567
    %2633 = vmatprep.subr.bf16.mxu0 %v2570
    %2634 = vmatpush1.bf16.msra.mxu0 %v2569
    %2635 = vmatprep.subr.bf16.mxu0 %v2572
    %2636 = vmatpush1.bf16.msra.mxu0 %v2571
    %2637 = vmatprep.subr.bf16.mxu0 %v2574
    %2638 = vmatpush1.bf16.msra.mxu0 %v2573
    %2639 = vmatprep.subr.bf16.mxu0 %v2576
    %2640 = vmatpush1.bf16.msra.mxu0 %v2575
    %2641 = vmatprep.subr.bf16.mxu0 %v2578
    %2642 = vmatpush1.bf16.msra.mxu0 %v2577
    %2643 = vmatprep.subr.bf16.mxu0 %v2580
    %2644 = vmatpush1.bf16.msra.mxu0 %v2579
    %2645 = vmatprep.subr.bf16.mxu0 %v2582
    %2646 = vmatpush1.bf16.msra.mxu0 %v2581
    %2647 = vmatprep.subr.bf16.mxu0 %v2584
    %2648 = vmatpush1.bf16.msra.mxu0 %v2583
    %2649 = vmatprep.subr.bf16.mxu0 %v2586
    %2650 = vmatpush1.bf16.msra.mxu0 %v2585
    %2651 = vmatprep.subr.bf16.mxu0 %v2588
    %2652 = vmatpush1.bf16.msra.mxu0 %v2587
    %2653 = vmatprep.subr.bf16.mxu0 %v2590
    %2654 = vmatpush1.bf16.msra.mxu0 %v2589
    %2655 = vmatprep.mubr.bf16.mxu0 %v516
    %2656 = vmatmul.mubr.bf16.gmra.mrb[0].mxu0 %v515
    %v2657 = vpop.f32.mrb[0].mxu0
    %v2658 = vadd.f32 0.0, %v2657
    %v2659 = vpop.f32.mrb[0].mxu0
    %v2660 = vadd.f32 0.0, %v2659
    %v2661 = vpop.f32.mrb[0].mxu0
    %v2662 = vadd.f32 0.0, %v2661
    %v2663 = vpop.f32.mrb[0].mxu0
    %v2664 = vadd.f32 0.0, %v2663
    %2665 = vmatprep.mubr.bf16.mxu0 %v518
    %2666 = vmatmul.mubr.bf16.gmra.mrb[0].mxu0 %v517
    %v2667 = vpop.f32.mrb[0].mxu0
    %v2668 = vadd.f32 0.0, %v2667
    %v2669 = vpop.f32.mrb[0].mxu0
    %v2670 = vadd.f32 0.0, %v2669
    %v2671 = vpop.f32.mrb[0].mxu0
    %v2672 = vadd.f32 0.0, %v2671
    %v2673 = vpop.f32.mrb[0].mxu0
    %v2674 = vadd.f32 0.0, %v2673
    %2675 = vmatprep.mubr.bf16.mxu0 %v520
    %2676 = vmatmul.mubr.bf16.gmra.mrb[0].mxu0 %v519
    %v2677 = vpop.f32.mrb[0].mxu0
    %v2678 = vadd.f32 0.0, %v2677
    %v2679 = vpop.f32.mrb[0].mxu0
    %v2680 = vadd.f32 0.0, %v2679
    %v2681 = vpop.f32.mrb[0].mxu0
    %v2682 = vadd.f32 0.0, %v2681
    %v2683 = vpop.f32.mrb[0].mxu0
    %v2684 = vadd.f32 0.0, %v2683
    %2685 = vdwg.mxu0
    %v2718 = vunpack.c.l.b16 %v2398
    %v2719 = vunpack.c.h.b16 %v2398
    %v2720 = vunpack.c.l.b16 %v2399
    %v2721 = vunpack.c.h.b16 %v2399
    %v2722 = vunpack.c.l.b16 %v2400
    %v2723 = vunpack.c.h.b16 %v2400
    %v2724 = vunpack.c.l.b16 %v2401
    %v2725 = vunpack.c.h.b16 %v2401
    %v2726 = vunpack.c.l.b16 %v2402
    %v2727 = vunpack.c.h.b16 %v2402
    %v2728 = vunpack.c.l.b16 %v2403
    %v2729 = vunpack.c.h.b16 %v2403
    %v2730 = vunpack.c.l.b16 %v2404
    %v2731 = vunpack.c.h.b16 %v2404
    %v2732 = vunpack.c.l.b16 %v2405
    %v2733 = vunpack.c.h.b16 %v2405
    %v2734 = vunpack.c.l.b16 %v2406
    %v2735 = vunpack.c.h.b16 %v2406
    %v2736 = vunpack.c.l.b16 %v2407
    %v2737 = vunpack.c.h.b16 %v2407
    %v2738 = vunpack.c.l.b16 %v2408
    %v2739 = vunpack.c.h.b16 %v2408
    %v2740 = vunpack.c.l.b16 %v2409
    %v2741 = vunpack.c.h.b16 %v2409
    %v2742 = vunpack.c.l.b16 %v2410
    %v2743 = vunpack.c.h.b16 %v2410
    %v2744 = vunpack.c.l.b16 %v2411
    %v2745 = vunpack.c.h.b16 %v2411
    %v2746 = vunpack.c.l.b16 %v2412
    %v2747 = vunpack.c.h.b16 %v2412
    %v2748 = vunpack.c.l.b16 %v2413
    %v2749 = vunpack.c.h.b16 %v2413
    %v2750 = vunpack.c.l.b16 %v2414
    %v2751 = vunpack.c.h.b16 %v2414
    %v2752 = vunpack.c.l.b16 %v2415
    %v2753 = vunpack.c.h.b16 %v2415
    %v2754 = vunpack.c.l.b16 %v2416
    %v2755 = vunpack.c.h.b16 %v2416
    %v2756 = vunpack.c.l.b16 %v2417
    %v2757 = vunpack.c.h.b16 %v2417
    %v2758 = vunpack.c.l.b16 %v2418
    %v2759 = vunpack.c.h.b16 %v2418
    %v2760 = vunpack.c.l.b16 %v2419
    %v2761 = vunpack.c.h.b16 %v2419
    %v2762 = vunpack.c.l.b16 %v2420
    %v2763 = vunpack.c.h.b16 %v2420
    %v2764 = vunpack.c.l.b16 %v2421
    %v2765 = vunpack.c.h.b16 %v2421
    %v2766 = vunpack.c.l.b16 %v2422
    %v2767 = vunpack.c.h.b16 %v2422
    %v2768 = vunpack.c.l.b16 %v2423
    %v2769 = vunpack.c.h.b16 %v2423
    %v2770 = vunpack.c.l.b16 %v2424
    %v2771 = vunpack.c.h.b16 %v2424
    %v2772 = vunpack.c.l.b16 %v2425
    %v2773 = vunpack.c.h.b16 %v2425
    %v2774 = vunpack.c.l.b16 %v2426
    %v2775 = vunpack.c.h.b16 %v2426
    %v2776 = vunpack.c.l.b16 %v2427
    %v2777 = vunpack.c.h.b16 %v2427
    %v2778 = vunpack.c.l.b16 %v2428
    %v2779 = vunpack.c.h.b16 %v2428
    %v2780 = vunpack.c.l.b16 %v2429
    %v2781 = vunpack.c.h.b16 %v2429
    %v2782 = vpack.c.b16 %v2720, %v2718
    %v2783 = vpack.c.b16 %v2721, %v2719
    %v2784 = vpack.c.b16 %v2724, %v2722
    %v2785 = vpack.c.b16 %v2725, %v2723
    %v2786 = vpack.c.b16 %v2728, %v2726
    %v2787 = vpack.c.b16 %v2729, %v2727
    %v2788 = vpack.c.b16 %v2732, %v2730
    %v2789 = vpack.c.b16 %v2733, %v2731
    %v2790 = vpack.c.b16 %v2736, %v2734
    %v2791 = vpack.c.b16 %v2737, %v2735
    %v2792 = vpack.c.b16 %v2740, %v2738
    %v2793 = vpack.c.b16 %v2741, %v2739
    %v2794 = vpack.c.b16 %v2744, %v2742
    %v2795 = vpack.c.b16 %v2745, %v2743
    %v2796 = vpack.c.b16 %v2748, %v2746
    %v2797 = vpack.c.b16 %v2749, %v2747
    %v2798 = vpack.c.b16 %v2752, %v2750
    %v2799 = vpack.c.b16 %v2753, %v2751
    %v2800 = vpack.c.b16 %v2756, %v2754
    %v2801 = vpack.c.b16 %v2757, %v2755
    %v2802 = vpack.c.b16 %v2760, %v2758
    %v2803 = vpack.c.b16 %v2761, %v2759
    %v2804 = vpack.c.b16 %v2764, %v2762
    %v2805 = vpack.c.b16 %v2765, %v2763
    %v2806 = vpack.c.b16 %v2768, %v2766
    %v2807 = vpack.c.b16 %v2769, %v2767
    %v2808 = vpack.c.b16 %v2772, %v2770
    %v2809 = vpack.c.b16 %v2773, %v2771
    %v2810 = vpack.c.b16 %v2776, %v2774
    %v2811 = vpack.c.b16 %v2777, %v2775
    %v2812 = vpack.c.b16 %v2780, %v2778
    %v2813 = vpack.c.b16 %v2781, %v2779
    %2846 = vmatprep.subr.bf16.mxu0 %v2783
    %2847 = vmatpush1.bf16.msra.mxu0 %v2782
    %2848 = vmatprep.subr.bf16.mxu0 %v2785
    %2849 = vmatpush1.bf16.msra.mxu0 %v2784
    %2850 = vmatprep.subr.bf16.mxu0 %v2787
    %2851 = vmatpush1.bf16.msra.mxu0 %v2786
    %2852 = vmatprep.subr.bf16.mxu0 %v2789
    %2853 = vmatpush1.bf16.msra.mxu0 %v2788
    %2854 = vmatprep.subr.bf16.mxu0 %v2791
    %2855 = vmatpush1.bf16.msra.mxu0 %v2790
    %2856 = vmatprep.subr.bf16.mxu0 %v2793
    %2857 = vmatpush1.bf16.msra.mxu0 %v2792
    %2858 = vmatprep.subr.bf16.mxu0 %v2795
    %2859 = vmatpush1.bf16.msra.mxu0 %v2794
    %2860 = vmatprep.subr.bf16.mxu0 %v2797
    %2861 = vmatpush1.bf16.msra.mxu0 %v2796
    %2862 = vmatprep.subr.bf16.mxu0 %v2799
    %2863 = vmatpush1.bf16.msra.mxu0 %v2798
    %2864 = vmatprep.subr.bf16.mxu0 %v2801
    %2865 = vmatpush1.bf16.msra.mxu0 %v2800
    %2866 = vmatprep.subr.bf16.mxu0 %v2803
    %2867 = vmatpush1.bf16.msra.mxu0 %v2802
    %2868 = vmatprep.subr.bf16.mxu0 %v2805
    %2869 = vmatpush1.bf16.msra.mxu0 %v2804
    %2870 = vmatprep.subr.bf16.mxu0 %v2807
    %2871 = vmatpush1.bf16.msra.mxu0 %v2806
    %2872 = vmatprep.subr.bf16.mxu0 %v2809
    %2873 = vmatpush1.bf16.msra.mxu0 %v2808
    %2874 = vmatprep.subr.bf16.mxu0 %v2811
    %2875 = vmatpush1.bf16.msra.mxu0 %v2810
    %2876 = vmatprep.subr.bf16.mxu0 %v2813
    %2877 = vmatpush1.bf16.msra.mxu0 %v2812
    %2878 = vmatprep.mubr.bf16.mxu0 %v1510
    %2879 = vmatmul.mubr.bf16.gmra.mrb[0].mxu0 %v1509
    %v2880 = vpop.f32.mrb[0].mxu0
    %v2881 = vadd.f32 %v2658, %v2880
    %v2882 = vpop.f32.mrb[0].mxu0
    %v2883 = vadd.f32 %v2660, %v2882
    %v2884 = vpop.f32.mrb[0].mxu0
    %v2885 = vadd.f32 %v2662, %v2884
    %v2886 = vpop.f32.mrb[0].mxu0
    %v2887 = vadd.f32 %v2664, %v2886
    %2888 = vmatprep.mubr.bf16.mxu0 %v1512
    %2889 = vmatmul.mubr.bf16.gmra.mrb[0].mxu0 %v1511
    %v2890 = vpop.f32.mrb[0].mxu0
    %v2891 = vadd.f32 %v2668, %v2890
    %v2892 = vpop.f32.mrb[0].mxu0
    %v2893 = vadd.f32 %v2670, %v2892
    %v2894 = vpop.f32.mrb[0].mxu0
    %v2895 = vadd.f32 %v2672, %v2894
    %v2896 = vpop.f32.mrb[0].mxu0
    %v2897 = vadd.f32 %v2674, %v2896
    %2898 = vmatprep.mubr.bf16.mxu0 %v1514
    %2899 = vmatmul.mubr.bf16.gmra.mrb[0].mxu0 %v1513
    %v2900 = vpop.f32.mrb[0].mxu0
    %v2901 = vadd.f32 %v2678, %v2900
    %v2902 = vpop.f32.mrb[0].mxu0
    %v2903 = vadd.f32 %v2680, %v2902
    %v2904 = vpop.f32.mrb[0].mxu0
    %v2905 = vadd.f32 %v2682, %v2904
    %v2906 = vpop.f32.mrb[0].mxu0
    %v2907 = vadd.f32 %v2684, %v2906
    %2908 = vdwg.mxu0
    %s2909 = scalar_lea.vmem [#allocation8], 512
    %v2910 = vld [vmem:[%s2909] sm:$0xff]
    %v2911 = vld [vmem:[%s2909 + $0x8] sm:$0xff]
    %v2912 = vld [vmem:[%s2909 + $0x10] sm:$0xff]
    %v2913 = vld [vmem:[%s2909 + $0x18] sm:$0xff]
    %v2914 = vld [vmem:[%s2909 + $0x20] sm:$0xff]
    %v2915 = vld [vmem:[%s2909 + $0x28] sm:$0xff]
    %v2916 = vld [vmem:[%s2909 + $0x30] sm:$0xff]
    %v2917 = vld [vmem:[%s2909 + $0x38] sm:$0xff]
    %v2918 = vld [vmem:[%s2909 + $0x40] sm:$0xff]
    %v2919 = vld [vmem:[%s2909 + $0x48] sm:$0xff]
    %v2920 = vld [vmem:[%s2909 + $0x50] sm:$0xff]
    %v2921 = vld [vmem:[%s2909 + $0x58] sm:$0xff]
    %v2922 = vld [vmem:[%s2909 + $0x60] sm:$0xff]
    %v2923 = vld [vmem:[%s2909 + $0x68] sm:$0xff]
    %v2924 = vld [vmem:[%s2909 + $0x70] sm:$0xff]
    %v2925 = vld [vmem:[%s2909 + $0x78] sm:$0xff]
    %v2926 = vld [vmem:[%s2909 + $0x80] sm:$0xff]
    %v2927 = vld [vmem:[%s2909 + $0x88] sm:$0xff]
    %v2928 = vld [vmem:[%s2909 + $0x90] sm:$0xff]
    %v2929 = vld [vmem:[%s2909 + $0x98] sm:$0xff]
    %v2930 = vld [vmem:[%s2909 + $0xa0] sm:$0xff]
    %v2931 = vld [vmem:[%s2909 + $0xa8] sm:$0xff]
    %v2932 = vld [vmem:[%s2909 + $0xb0] sm:$0xff]
    %v2933 = vld [vmem:[%s2909 + $0xb8] sm:$0xff]
    %v2934 = vld [vmem:[%s2909 + $0xc0] sm:$0xff]
    %v2935 = vld [vmem:[%s2909 + $0xc8] sm:$0xff]
    %v2936 = vld [vmem:[%s2909 + $0xd0] sm:$0xff]
    %v2937 = vld [vmem:[%s2909 + $0xd8] sm:$0xff]
    %v2938 = vld [vmem:[%s2909 + $0xe0] sm:$0xff]
    %v2939 = vld [vmem:[%s2909 + $0xe8] sm:$0xff]
    %v2940 = vld [vmem:[%s2909 + $0xf0] sm:$0xff]
    %v2941 = vld [vmem:[%s2909 + $0xf8] sm:$0xff]
    %v2974 = vunpack.c.l.b16 %v2910
    %v2975 = vunpack.c.h.b16 %v2910
    %v2976 = vunpack.c.l.b16 %v2911
    %v2977 = vunpack.c.h.b16 %v2911
    %v2978 = vunpack.c.l.b16 %v2912
    %v2979 = vunpack.c.h.b16 %v2912
    %v2980 = vunpack.c.l.b16 %v2913
    %v2981 = vunpack.c.h.b16 %v2913
    %v2982 = vunpack.c.l.b16 %v2914
    %v2983 = vunpack.c.h.b16 %v2914
    %v2984 = vunpack.c.l.b16 %v2915
    %v2985 = vunpack.c.h.b16 %v2915
    %v2986 = vunpack.c.l.b16 %v2916
    %v2987 = vunpack.c.h.b16 %v2916
    %v2988 = vunpack.c.l.b16 %v2917
    %v2989 = vunpack.c.h.b16 %v2917
    %v2990 = vunpack.c.l.b16 %v2918
    %v2991 = vunpack.c.h.b16 %v2918
    %v2992 = vunpack.c.l.b16 %v2919
    %v2993 = vunpack.c.h.b16 %v2919
    %v2994 = vunpack.c.l.b16 %v2920
    %v2995 = vunpack.c.h.b16 %v2920
    %v2996 = vunpack.c.l.b16 %v2921
    %v2997 = vunpack.c.h.b16 %v2921
    %v2998 = vunpack.c.l.b16 %v2922
    %v2999 = vunpack.c.h.b16 %v2922
    %v3000 = vunpack.c.l.b16 %v2923
    %v3001 = vunpack.c.h.b16 %v2923
    %v3002 = vunpack.c.l.b16 %v2924
    %v3003 = vunpack.c.h.b16 %v2924
    %v3004 = vunpack.c.l.b16 %v2925
    %v3005 = vunpack.c.h.b16 %v2925
    %v3006 = vunpack.c.l.b16 %v2926
    %v3007 = vunpack.c.h.b16 %v2926
    %v3008 = vunpack.c.l.b16 %v2927
    %v3009 = vunpack.c.h.b16 %v2927
    %v3010 = vunpack.c.l.b16 %v2928
    %v3011 = vunpack.c.h.b16 %v2928
    %v3012 = vunpack.c.l.b16 %v2929
    %v3013 = vunpack.c.h.b16 %v2929
    %v3014 = vunpack.c.l.b16 %v2930
    %v3015 = vunpack.c.h.b16 %v2930
    %v3016 = vunpack.c.l.b16 %v2931
    %v3017 = vunpack.c.h.b16 %v2931
    %v3018 = vunpack.c.l.b16 %v2932
    %v3019 = vunpack.c.h.b16 %v2932
    %v3020 = vunpack.c.l.b16 %v2933
    %v3021 = vunpack.c.h.b16 %v2933
    %v3022 = vunpack.c.l.b16 %v2934
    %v3023 = vunpack.c.h.b16 %v2934
    %v3024 = vunpack.c.l.b16 %v2935
    %v3025 = vunpack.c.h.b16 %v2935
    %v3026 = vunpack.c.l.b16 %v2936
    %v3027 = vunpack.c.h.b16 %v2936
    %v3028 = vunpack.c.l.b16 %v2937
    %v3029 = vunpack.c.h.b16 %v2937
    %v3030 = vunpack.c.l.b16 %v2938
    %v3031 = vunpack.c.h.b16 %v2938
    %v3032 = vunpack.c.l.b16 %v2939
    %v3033 = vunpack.c.h.b16 %v2939
    %v3034 = vunpack.c.l.b16 %v2940
    %v3035 = vunpack.c.h.b16 %v2940
    %v3036 = vunpack.c.l.b16 %v2941
    %v3037 = vunpack.c.h.b16 %v2941
    %v3038 = vpack.c.b16 %v2976, %v2974
    %v3039 = vpack.c.b16 %v2977, %v2975
    %v3040 = vpack.c.b16 %v2980, %v2978
    %v3041 = vpack.c.b16 %v2981, %v2979
    %v3042 = vpack.c.b16 %v2984, %v2982
    %v3043 = vpack.c.b16 %v2985, %v2983
    %v3044 = vpack.c.b16 %v2988, %v2986
    %v3045 = vpack.c.b16 %v2989, %v2987
    %v3046 = vpack.c.b16 %v2992, %v2990
    %v3047 = vpack.c.b16 %v2993, %v2991
    %v3048 = vpack.c.b16 %v2996, %v2994
    %v3049 = vpack.c.b16 %v2997, %v2995
    %v3050 = vpack.c.b16 %v3000, %v2998
    %v3051 = vpack.c.b16 %v3001, %v2999
    %v3052 = vpack.c.b16 %v3004, %v3002
    %v3053 = vpack.c.b16 %v3005, %v3003
    %v3054 = vpack.c.b16 %v3008, %v3006
    %v3055 = vpack.c.b16 %v3009, %v3007
    %v3056 = vpack.c.b16 %v3012, %v3010
    %v3057 = vpack.c.b16 %v3013, %v3011
    %v3058 = vpack.c.b16 %v3016, %v3014
    %v3059 = vpack.c.b16 %v3017, %v3015
    %v3060 = vpack.c.b16 %v3020, %v3018
    %v3061 = vpack.c.b16 %v3021, %v3019
    %v3062 = vpack.c.b16 %v3024, %v3022
    %v3063 = vpack.c.b16 %v3025, %v3023
    %v3064 = vpack.c.b16 %v3028, %v3026
    %v3065 = vpack.c.b16 %v3029, %v3027
    %v3066 = vpack.c.b16 %v3032, %v3030
    %v3067 = vpack.c.b16 %v3033, %v3031
    %v3068 = vpack.c.b16 %v3036, %v3034
    %v3069 = vpack.c.b16 %v3037, %v3035
    %3102 = vmatprep.subr.bf16.mxu0 %v3039
    %3103 = vmatpush1.bf16.msra.mxu0 %v3038
    %3104 = vmatprep.subr.bf16.mxu0 %v3041
    %3105 = vmatpush1.bf16.msra.mxu0 %v3040
    %3106 = vmatprep.subr.bf16.mxu0 %v3043
    %3107 = vmatpush1.bf16.msra.mxu0 %v3042
    %3108 = vmatprep.subr.bf16.mxu0 %v3045
    %3109 = vmatpush1.bf16.msra.mxu0 %v3044
    %3110 = vmatprep.subr.bf16.mxu0 %v3047
    %3111 = vmatpush1.bf16.msra.mxu0 %v3046
    %3112 = vmatprep.subr.bf16.mxu0 %v3049
    %3113 = vmatpush1.bf16.msra.mxu0 %v3048
    %3114 = vmatprep.subr.bf16.mxu0 %v3051
    %3115 = vmatpush1.bf16.msra.mxu0 %v3050
    %3116 = vmatprep.subr.bf16.mxu0 %v3053
    %3117 = vmatpush1.bf16.msra.mxu0 %v3052
    %3118 = vmatprep.subr.bf16.mxu0 %v3055
    %3119 = vmatpush1.bf16.msra.mxu0 %v3054
    %3120 = vmatprep.subr.bf16.mxu0 %v3057
    %3121 = vmatpush1.bf16.msra.mxu0 %v3056
    %3122 = vmatprep.subr.bf16.mxu0 %v3059
    %3123 = vmatpush1.bf16.msra.mxu0 %v3058
    %3124 = vmatprep.subr.bf16.mxu0 %v3061
    %3125 = vmatpush1.bf16.msra.mxu0 %v3060
    %3126 = vmatprep.subr.bf16.mxu0 %v3063
    %3127 = vmatpush1.bf16.msra.mxu0 %v3062
    %3128 = vmatprep.subr.bf16.mxu0 %v3065
    %3129 = vmatpush1.bf16.msra.mxu0 %v3064
    %3130 = vmatprep.subr.bf16.mxu0 %v3067
    %3131 = vmatpush1.bf16.msra.mxu0 %v3066
    %3132 = vmatprep.subr.bf16.mxu0 %v3069
    %3133 = vmatpush1.bf16.msra.mxu0 %v3068
    %3134 = vmatprep.mubr.bf16.mxu0 %v269
    %3135 = vmatmul.mubr.bf16.gmra.mrb[0].mxu0 %v268
    %v3136 = vpop.f32.mrb[0].mxu0
    %v3137 = vadd.f32 0.0, %v3136
    %v3138 = vpop.f32.mrb[0].mxu0
    %v3139 = vadd.f32 0.0, %v3138
    %v3140 = vpop.f32.mrb[0].mxu0
    %v3141 = vadd.f32 0.0, %v3140
    %v3142 = vpop.f32.mrb[0].mxu0
    %v3143 = vadd.f32 0.0, %v3142
    %3144 = vmatprep.mubr.bf16.mxu0 %v271
    %3145 = vmatmul.mubr.bf16.gmra.mrb[0].mxu0 %v270
    %v3146 = vpop.f32.mrb[0].mxu0
    %v3147 = vadd.f32 0.0, %v3146
    %v3148 = vpop.f32.mrb[0].mxu0
    %v3149 = vadd.f32 0.0, %v3148
    %v3150 = vpop.f32.mrb[0].mxu0
    %v3151 = vadd.f32 0.0, %v3150
    %v3152 = vpop.f32.mrb[0].mxu0
    %v3153 = vadd.f32 0.0, %v3152
    %3154 = vmatprep.mubr.bf16.mxu0 %v273
    %3155 = vmatmul.mubr.bf16.gmra.mrb[0].mxu0 %v272
    %v3156 = vpop.f32.mrb[0].mxu0
    %v3157 = vadd.f32 0.0, %v3156
    %v3158 = vpop.f32.mrb[0].mxu0
    %v3159 = vadd.f32 0.0, %v3158
    %v3160 = vpop.f32.mrb[0].mxu0
    %v3161 = vadd.f32 0.0, %v3160
    %v3162 = vpop.f32.mrb[0].mxu0
    %v3163 = vadd.f32 0.0, %v3162
    %3164 = vdwg.mxu0
    %v3165 = vadd.f32 %v2881, %v3137
    %v3166 = vadd.f32 %v2883, %v3139
    %v3167 = vadd.f32 %v2885, %v3141
    %v3168 = vadd.f32 %v2887, %v3143
    %v3169 = vadd.f32 %v2891, %v3147
    %v3170 = vadd.f32 %v2893, %v3149
    %v3171 = vadd.f32 %v2895, %v3151
    %v3172 = vadd.f32 %v2897, %v3153
    %v3173 = vadd.f32 %v2901, %v3157
    %v3174 = vadd.f32 %v2903, %v3159
    %v3175 = vadd.f32 %v2905, %v3161
    %v3176 = vadd.f32 %v2907, %v3163
    %s3177 = scalar_lea.vmem [#allocation8], 768
    %v3178 = vld [vmem:[%s3177] sm:$0xff]
    %v3179 = vld [vmem:[%s3177 + $0x8] sm:$0xff]
    %v3180 = vld [vmem:[%s3177 + $0x10] sm:$0xff]
    %v3181 = vld [vmem:[%s3177 + $0x18] sm:$0xff]
    %v3182 = vld [vmem:[%s3177 + $0x20] sm:$0xff]
    %v3183 = vld [vmem:[%s3177 + $0x28] sm:$0xff]
    %v3184 = vld [vmem:[%s3177 + $0x30] sm:$0xff]
    %v3185 = vld [vmem:[%s3177 + $0x38] sm:$0xff]
    %v3186 = vld [vmem:[%s3177 + $0x40] sm:$0xff]
    %v3187 = vld [vmem:[%s3177 + $0x48] sm:$0xff]
    %v3188 = vld [vmem:[%s3177 + $0x50] sm:$0xff]
    %v3189 = vld [vmem:[%s3177 + $0x58] sm:$0xff]
    %v3190 = vld [vmem:[%s3177 + $0x60] sm:$0xff]
    %v3191 = vld [vmem:[%s3177 + $0x68] sm:$0xff]
    %v3192 = vld [vmem:[%s3177 + $0x70] sm:$0xff]
    %v3193 = vld [vmem:[%s3177 + $0x78] sm:$0xff]
    %v3194 = vld [vmem:[%s3177 + $0x80] sm:$0xff]
    %v3195 = vld [vmem:[%s3177 + $0x88] sm:$0xff]
    %v3196 = vld [vmem:[%s3177 + $0x90] sm:$0xff]
    %v3197 = vld [vmem:[%s3177 + $0x98] sm:$0xff]
    %v3198 = vld [vmem:[%s3177 + $0xa0] sm:$0xff]
    %v3199 = vld [vmem:[%s3177 + $0xa8] sm:$0xff]
    %v3200 = vld [vmem:[%s3177 + $0xb0] sm:$0xff]
    %v3201 = vld [vmem:[%s3177 + $0xb8] sm:$0xff]
    %v3202 = vld [vmem:[%s3177 + $0xc0] sm:$0xff]
    %v3203 = vld [vmem:[%s3177 + $0xc8] sm:$0xff]
    %v3204 = vld [vmem:[%s3177 + $0xd0] sm:$0xff]
    %v3205 = vld [vmem:[%s3177 + $0xd8] sm:$0xff]
    %v3206 = vld [vmem:[%s3177 + $0xe0] sm:$0xff]
    %v3207 = vld [vmem:[%s3177 + $0xe8] sm:$0xff]
    %v3208 = vld [vmem:[%s3177 + $0xf0] sm:$0xff]
    %v3209 = vld [vmem:[%s3177 + $0xf8] sm:$0xff]
    %v3242 = vunpack.c.l.b16 %v3178
    %v3243 = vunpack.c.h.b16 %v3178
    %v3244 = vunpack.c.l.b16 %v3179
    %v3245 = vunpack.c.h.b16 %v3179
    %v3246 = vunpack.c.l.b16 %v3180
    %v3247 = vunpack.c.h.b16 %v3180
    %v3248 = vunpack.c.l.b16 %v3181
    %v3249 = vunpack.c.h.b16 %v3181
    %v3250 = vunpack.c.l.b16 %v3182
    %v3251 = vunpack.c.h.b16 %v3182
    %v3252 = vunpack.c.l.b16 %v3183
    %v3253 = vunpack.c.h.b16 %v3183
    %v3254 = vunpack.c.l.b16 %v3184
    %v3255 = vunpack.c.h.b16 %v3184
    %v3256 = vunpack.c.l.b16 %v3185
    %v3257 = vunpack.c.h.b16 %v3185
    %v3258 = vunpack.c.l.b16 %v3186
    %v3259 = vunpack.c.h.b16 %v3186
    %v3260 = vunpack.c.l.b16 %v3187
    %v3261 = vunpack.c.h.b16 %v3187
    %v3262 = vunpack.c.l.b16 %v3188
    %v3263 = vunpack.c.h.b16 %v3188
    %v3264 = vunpack.c.l.b16 %v3189
    %v3265 = vunpack.c.h.b16 %v3189
    %v3266 = vunpack.c.l.b16 %v3190
    %v3267 = vunpack.c.h.b16 %v3190
    %v3268 = vunpack.c.l.b16 %v3191
    %v3269 = vunpack.c.h.b16 %v3191
    %v3270 = vunpack.c.l.b16 %v3192
    %v3271 = vunpack.c.h.b16 %v3192
    %v3272 = vunpack.c.l.b16 %v3193
    %v3273 = vunpack.c.h.b16 %v3193
    %v3274 = vunpack.c.l.b16 %v3194
    %v3275 = vunpack.c.h.b16 %v3194
    %v3276 = vunpack.c.l.b16 %v3195
    %v3277 = vunpack.c.h.b16 %v3195
    %v3278 = vunpack.c.l.b16 %v3196
    %v3279 = vunpack.c.h.b16 %v3196
    %v3280 = vunpack.c.l.b16 %v3197
    %v3281 = vunpack.c.h.b16 %v3197
    %v3282 = vunpack.c.l.b16 %v3198
    %v3283 = vunpack.c.h.b16 %v3198
    %v3284 = vunpack.c.l.b16 %v3199
    %v3285 = vunpack.c.h.b16 %v3199
    %v3286 = vunpack.c.l.b16 %v3200
    %v3287 = vunpack.c.h.b16 %v3200
    %v3288 = vunpack.c.l.b16 %v3201
    %v3289 = vunpack.c.h.b16 %v3201
    %v3290 = vunpack.c.l.b16 %v3202
    %v3291 = vunpack.c.h.b16 %v3202
    %v3292 = vunpack.c.l.b16 %v3203
    %v3293 = vunpack.c.h.b16 %v3203
    %v3294 = vunpack.c.l.b16 %v3204
    %v3295 = vunpack.c.h.b16 %v3204
    %v3296 = vunpack.c.l.b16 %v3205
    %v3297 = vunpack.c.h.b16 %v3205
    %v3298 = vunpack.c.l.b16 %v3206
    %v3299 = vunpack.c.h.b16 %v3206
    %v3300 = vunpack.c.l.b16 %v3207
    %v3301 = vunpack.c.h.b16 %v3207
    %v3302 = vunpack.c.l.b16 %v3208
    %v3303 = vunpack.c.h.b16 %v3208
    %v3304 = vunpack.c.l.b16 %v3209
    %v3305 = vunpack.c.h.b16 %v3209
    %v3306 = vpack.c.b16 %v3244, %v3242
    %v3307 = vpack.c.b16 %v3245, %v3243
    %v3308 = vpack.c.b16 %v3248, %v3246
    %v3309 = vpack.c.b16 %v3249, %v3247
    %v3310 = vpack.c.b16 %v3252, %v3250
    %v3311 = vpack.c.b16 %v3253, %v3251
    %v3312 = vpack.c.b16 %v3256, %v3254
    %v3313 = vpack.c.b16 %v3257, %v3255
    %v3314 = vpack.c.b16 %v3260, %v3258
    %v3315 = vpack.c.b16 %v3261, %v3259
    %v3316 = vpack.c.b16 %v3264, %v3262
    %v3317 = vpack.c.b16 %v3265, %v3263
    %v3318 = vpack.c.b16 %v3268, %v3266
    %v3319 = vpack.c.b16 %v3269, %v3267
    %v3320 = vpack.c.b16 %v3272, %v3270
    %v3321 = vpack.c.b16 %v3273, %v3271
    %v3322 = vpack.c.b16 %v3276, %v3274
    %v3323 = vpack.c.b16 %v3277, %v3275
    %v3324 = vpack.c.b16 %v3280, %v3278
    %v3325 = vpack.c.b16 %v3281, %v3279
    %v3326 = vpack.c.b16 %v3284, %v3282
    %v3327 = vpack.c.b16 %v3285, %v3283
    %v3328 = vpack.c.b16 %v3288, %v3286
    %v3329 = vpack.c.b16 %v3289, %v3287
    %v3330 = vpack.c.b16 %v3292, %v3290
    %v3331 = vpack.c.b16 %v3293, %v3291
    %v3332 = vpack.c.b16 %v3296, %v3294
    %v3333 = vpack.c.b16 %v3297, %v3295
    %v3334 = vpack.c.b16 %v3300, %v3298
    %v3335 = vpack.c.b16 %v3301, %v3299
    %v3336 = vpack.c.b16 %v3304, %v3302
    %v3337 = vpack.c.b16 %v3305, %v3303
    %3370 = vmatprep.subr.bf16.mxu0 %v3307
    %3371 = vmatpush1.bf16.msra.mxu0 %v3306
    %3372 = vmatprep.subr.bf16.mxu0 %v3309
    %3373 = vmatpush1.bf16.msra.mxu0 %v3308
    %3374 = vmatprep.subr.bf16.mxu0 %v3311
    %3375 = vmatpush1.bf16.msra.mxu0 %v3310
    %3376 = vmatprep.subr.bf16.mxu0 %v3313
    %3377 = vmatpush1.bf16.msra.mxu0 %v3312
    %3378 = vmatprep.subr.bf16.mxu0 %v3315
    %3379 = vmatpush1.bf16.msra.mxu0 %v3314
    %3380 = vmatprep.subr.bf16.mxu0 %v3317
    %3381 = vmatpush1.bf16.msra.mxu0 %v3316
    %3382 = vmatprep.subr.bf16.mxu0 %v3319
    %3383 = vmatpush1.bf16.msra.mxu0 %v3318
    %3384 = vmatprep.subr.bf16.mxu0 %v3321
    %3385 = vmatpush1.bf16.msra.mxu0 %v3320
    %3386 = vmatprep.subr.bf16.mxu0 %v3323
    %3387 = vmatpush1.bf16.msra.mxu0 %v3322
    %3388 = vmatprep.subr.bf16.mxu0 %v3325
    %3389 = vmatpush1.bf16.msra.mxu0 %v3324
    %3390 = vmatprep.subr.bf16.mxu0 %v3327
    %3391 = vmatpush1.bf16.msra.mxu0 %v3326
    %3392 = vmatprep.subr.bf16.mxu0 %v3329
    %3393 = vmatpush1.bf16.msra.mxu0 %v3328
    %3394 = vmatprep.subr.bf16.mxu0 %v3331
    %3395 = vmatpush1.bf16.msra.mxu0 %v3330
    %3396 = vmatprep.subr.bf16.mxu0 %v3333
    %3397 = vmatpush1.bf16.msra.mxu0 %v3332
    %3398 = vmatprep.subr.bf16.mxu0 %v3335
    %3399 = vmatpush1.bf16.msra.mxu0 %v3334
    %3400 = vmatprep.subr.bf16.mxu0 %v3337
    %3401 = vmatpush1.bf16.msra.mxu0 %v3336
    %3402 = vmatprep.mubr.bf16.mxu0 %v839
    %3403 = vmatmul.mubr.bf16.gmra.mrb[0].mxu0 %v838
    %v3404 = vpop.f32.mrb[0].mxu0
    %v3405 = vadd.f32 0.0, %v3404
    %v3406 = vpop.f32.mrb[0].mxu0
    %v3407 = vadd.f32 0.0, %v3406
    %v3408 = vpop.f32.mrb[0].mxu0
    %v3409 = vadd.f32 0.0, %v3408
    %v3410 = vpop.f32.mrb[0].mxu0
    %v3411 = vadd.f32 0.0, %v3410
    %3412 = vmatprep.mubr.bf16.mxu0 %v841
    %3413 = vmatmul.mubr.bf16.gmra.mrb[0].mxu0 %v840
    %v3414 = vpop.f32.mrb[0].mxu0
    %v3415 = vadd.f32 0.0, %v3414
    %v3416 = vpop.f32.mrb[0].mxu0
    %v3417 = vadd.f32 0.0, %v3416
    %v3418 = vpop.f32.mrb[0].mxu0
    %v3419 = vadd.f32 0.0, %v3418
    %v3420 = vpop.f32.mrb[0].mxu0
    %v3421 = vadd.f32 0.0, %v3420
    %3422 = vmatprep.mubr.bf16.mxu0 %v843
    %3423 = vmatmul.mubr.bf16.gmra.mrb[0].mxu0 %v842
    %v3424 = vpop.f32.mrb[0].mxu0
    %v3425 = vadd.f32 0.0, %v3424
    %v3426 = vpop.f32.mrb[0].mxu0
    %v3427 = vadd.f32 0.0, %v3426
    %v3428 = vpop.f32.mrb[0].mxu0
    %v3429 = vadd.f32 0.0, %v3428
    %v3430 = vpop.f32.mrb[0].mxu0
    %v3431 = vadd.f32 0.0, %v3430
    %3432 = vdwg.mxu0
    %v3433 = vadd.f32 %v3165, %v3405
    %v3434 = vadd.f32 %v3166, %v3407
    %v3435 = vadd.f32 %v3167, %v3409
    %v3436 = vadd.f32 %v3168, %v3411
    %v3437 = vadd.f32 %v3169, %v3415
    %v3438 = vadd.f32 %v3170, %v3417
    %v3439 = vadd.f32 %v3171, %v3419
    %v3440 = vadd.f32 %v3172, %v3421
    %v3441 = vadd.f32 %v3173, %v3425
    %v3442 = vadd.f32 %v3174, %v3427
    %v3443 = vadd.f32 %v3175, %v3429
    %v3444 = vadd.f32 %v3176, %v3431
    %vm3445 = vcmask 1041408
    %vm3446 = vcmask 1045508
    %vm3447 = vmor %vm3445, %vm3446
    %v3448 = vrot.slane %v76, 6
    %v3449 = vrot.slane %v3448, 4
    %v3450 = vrot.slane %v77, 6
    %v3451 = vsel %vm3447, %v3449, %v3450
    %v3452 = vrot.slane %v3450, 4
    %v3453 = vrot.slane %v78, 6
    %v3454 = vsel %vm3447, %v3452, %v3453
    %v3455 = vrot.slane %v3453, 4
    %v3456 = vrot.slane %v79, 6
    %v3457 = vsel %vm3447, %v3455, %v3456
    %v3458 = vrot.slane %v80, 6
    %v3459 = vrot.slane %v3458, 4
    %v3460 = vrot.slane %v81, 6
    %v3461 = vsel %vm3447, %v3459, %v3460
    %v3462 = vrot.slane %v3460, 4
    %v3463 = vrot.slane %v82, 6
    %v3464 = vsel %vm3447, %v3462, %v3463
    %v3465 = vrot.slane %v3463, 4
    %v3466 = vrot.slane %v83, 6
    %v3467 = vsel %vm3447, %v3465, %v3466
    %s3468 = scalar_lea.vmem [#allocation8], 1024
    %v3469 = vld [vmem:[%s3468] sm:$0xff]
    %v3470 = vld [vmem:[%s3468 + $0x8] sm:$0xff]
    %v3471 = vld [vmem:[%s3468 + $0x10] sm:$0xff]
    %v3472 = vld [vmem:[%s3468 + $0x18] sm:$0xff]
    %v3473 = vld [vmem:[%s3468 + $0x20] sm:$0xff]
    %v3474 = vld [vmem:[%s3468 + $0x28] sm:$0xff]
    %v3475 = vld [vmem:[%s3468 + $0x30] sm:$0xff]
    %v3476 = vld [vmem:[%s3468 + $0x38] sm:$0xff]
    %v3477 = vld [vmem:[%s3468 + $0x40] sm:$0xff]
    %v3478 = vld [vmem:[%s3468 + $0x48] sm:$0xff]
    %v3479 = vld [vmem:[%s3468 + $0x50] sm:$0xff]
    %v3480 = vld [vmem:[%s3468 + $0x58] sm:$0xff]
    %v3481 = vld [vmem:[%s3468 + $0x60] sm:$0xff]
    %v3482 = vld [vmem:[%s3468 + $0x68] sm:$0xff]
    %v3483 = vld [vmem:[%s3468 + $0x70] sm:$0xff]
    %v3484 = vld [vmem:[%s3468 + $0x78] sm:$0xff]
    %v3485 = vld [vmem:[%s3468 + $0x80] sm:$0xff]
    %v3486 = vld [vmem:[%s3468 + $0x88] sm:$0xff]
    %v3487 = vld [vmem:[%s3468 + $0x90] sm:$0xff]
    %v3488 = vld [vmem:[%s3468 + $0x98] sm:$0xff]
    %v3489 = vld [vmem:[%s3468 + $0xa0] sm:$0xff]
    %v3490 = vld [vmem:[%s3468 + $0xa8] sm:$0xff]
    %v3491 = vld [vmem:[%s3468 + $0xb0] sm:$0xff]
    %v3492 = vld [vmem:[%s3468 + $0xb8] sm:$0xff]
    %v3493 = vld [vmem:[%s3468 + $0xc0] sm:$0xff]
    %v3494 = vld [vmem:[%s3468 + $0xc8] sm:$0xff]
    %v3495 = vld [vmem:[%s3468 + $0xd0] sm:$0xff]
    %v3496 = vld [vmem:[%s3468 + $0xd8] sm:$0xff]
    %v3497 = vld [vmem:[%s3468 + $0xe0] sm:$0xff]
    %v3498 = vld [vmem:[%s3468 + $0xe8] sm:$0xff]
    %v3499 = vld [vmem:[%s3468 + $0xf0] sm:$0xff]
    %v3500 = vld [vmem:[%s3468 + $0xf8] sm:$0xff]
    %v3501 = vunpack.c.l.b16 %v3451
    %v3502 = vunpack.c.h.b16 %v3451
    %v3503 = vunpack.c.l.b16 %v3454
    %v3504 = vunpack.c.h.b16 %v3454
    %v3505 = vunpack.c.l.b16 %v3457
    %v3506 = vunpack.c.h.b16 %v3457
    %v3507 = vunpack.c.l.b16 %v3461
    %v3508 = vunpack.c.h.b16 %v3461
    %v3509 = vunpack.c.l.b16 %v3464
    %v3510 = vunpack.c.h.b16 %v3464
    %v3511 = vunpack.c.l.b16 %v3467
    %v3512 = vunpack.c.h.b16 %v3467
    %v3513 = vpack.c.b16 %v3503, %v3501
    %v3514 = vpack.c.b16 %v3504, %v3502
    %v3515 = vpack.c.b16 %v3507, %v3505
    %v3516 = vpack.c.b16 %v3508, %v3506
    %v3517 = vpack.c.b16 %v3511, %v3509
    %v3518 = vpack.c.b16 %v3512, %v3510
    %v3557 = vunpack.c.l.b16 %v3469
    %v3558 = vunpack.c.h.b16 %v3469
    %v3559 = vunpack.c.l.b16 %v3470
    %v3560 = vunpack.c.h.b16 %v3470
    %v3561 = vunpack.c.l.b16 %v3471
    %v3562 = vunpack.c.h.b16 %v3471
    %v3563 = vunpack.c.l.b16 %v3472
    %v3564 = vunpack.c.h.b16 %v3472
    %v3565 = vunpack.c.l.b16 %v3473
    %v3566 = vunpack.c.h.b16 %v3473
    %v3567 = vunpack.c.l.b16 %v3474
    %v3568 = vunpack.c.h.b16 %v3474
    %v3569 = vunpack.c.l.b16 %v3475
    %v3570 = vunpack.c.h.b16 %v3475
    %v3571 = vunpack.c.l.b16 %v3476
    %v3572 = vunpack.c.h.b16 %v3476
    %v3573 = vunpack.c.l.b16 %v3477
    %v3574 = vunpack.c.h.b16 %v3477
    %v3575 = vunpack.c.l.b16 %v3478
    %v3576 = vunpack.c.h.b16 %v3478
    %v3577 = vunpack.c.l.b16 %v3479
    %v3578 = vunpack.c.h.b16 %v3479
    %v3579 = vunpack.c.l.b16 %v3480
    %v3580 = vunpack.c.h.b16 %v3480
    %v3581 = vunpack.c.l.b16 %v3481
    %v3582 = vunpack.c.h.b16 %v3481
    %v3583 = vunpack.c.l.b16 %v3482
    %v3584 = vunpack.c.h.b16 %v3482
    %v3585 = vunpack.c.l.b16 %v3483
    %v3586 = vunpack.c.h.b16 %v3483
    %v3587 = vunpack.c.l.b16 %v3484
    %v3588 = vunpack.c.h.b16 %v3484
    %v3589 = vunpack.c.l.b16 %v3485
    %v3590 = vunpack.c.h.b16 %v3485
    %v3591 = vunpack.c.l.b16 %v3486
    %v3592 = vunpack.c.h.b16 %v3486
    %v3593 = vunpack.c.l.b16 %v3487
    %v3594 = vunpack.c.h.b16 %v3487
    %v3595 = vunpack.c.l.b16 %v3488
    %v3596 = vunpack.c.h.b16 %v3488
    %v3597 = vunpack.c.l.b16 %v3489
    %v3598 = vunpack.c.h.b16 %v3489
    %v3599 = vunpack.c.l.b16 %v3490
    %v3600 = vunpack.c.h.b16 %v3490
    %v3601 = vunpack.c.l.b16 %v3491
    %v3602 = vunpack.c.h.b16 %v3491
    %v3603 = vunpack.c.l.b16 %v3492
    %v3604 = vunpack.c.h.b16 %v3492
    %v3605 = vunpack.c.l.b16 %v3493
    %v3606 = vunpack.c.h.b16 %v3493
    %v3607 = vunpack.c.l.b16 %v3494
    %v3608 = vunpack.c.h.b16 %v3494
    %v3609 = vunpack.c.l.b16 %v3495
    %v3610 = vunpack.c.h.b16 %v3495
    %v3611 = vunpack.c.l.b16 %v3496
    %v3612 = vunpack.c.h.b16 %v3496
    %v3613 = vunpack.c.l.b16 %v3497
    %v3614 = vunpack.c.h.b16 %v3497
    %v3615 = vunpack.c.l.b16 %v3498
    %v3616 = vunpack.c.h.b16 %v3498
    %v3617 = vunpack.c.l.b16 %v3499
    %v3618 = vunpack.c.h.b16 %v3499
    %v3619 = vunpack.c.l.b16 %v3500
    %v3620 = vunpack.c.h.b16 %v3500
    %v3621 = vpack.c.b16 %v3559, %v3557
    %v3622 = vpack.c.b16 %v3560, %v3558
    %v3623 = vpack.c.b16 %v3563, %v3561
    %v3624 = vpack.c.b16 %v3564, %v3562
    %v3625 = vpack.c.b16 %v3567, %v3565
    %v3626 = vpack.c.b16 %v3568, %v3566
    %v3627 = vpack.c.b16 %v3571, %v3569
    %v3628 = vpack.c.b16 %v3572, %v3570
    %v3629 = vpack.c.b16 %v3575, %v3573
    %v3630 = vpack.c.b16 %v3576, %v3574
    %v3631 = vpack.c.b16 %v3579, %v3577
    %v3632 = vpack.c.b16 %v3580, %v3578
    %v3633 = vpack.c.b16 %v3583, %v3581
    %v3634 = vpack.c.b16 %v3584, %v3582
    %v3635 = vpack.c.b16 %v3587, %v3585
    %v3636 = vpack.c.b16 %v3588, %v3586
    %v3637 = vpack.c.b16 %v3591, %v3589
    %v3638 = vpack.c.b16 %v3592, %v3590
    %v3639 = vpack.c.b16 %v3595, %v3593
    %v3640 = vpack.c.b16 %v3596, %v3594
    %v3641 = vpack.c.b16 %v3599, %v3597
    %v3642 = vpack.c.b16 %v3600, %v3598
    %v3643 = vpack.c.b16 %v3603, %v3601
    %v3644 = vpack.c.b16 %v3604, %v3602
    %v3645 = vpack.c.b16 %v3607, %v3605
    %v3646 = vpack.c.b16 %v3608, %v3606
    %v3647 = vpack.c.b16 %v3611, %v3609
    %v3648 = vpack.c.b16 %v3612, %v3610
    %v3649 = vpack.c.b16 %v3615, %v3613
    %v3650 = vpack.c.b16 %v3616, %v3614
    %v3651 = vpack.c.b16 %v3619, %v3617
    %v3652 = vpack.c.b16 %v3620, %v3618
    %3685 = vmatprep.subr.bf16.mxu0 %v3622
    %3686 = vmatpush1.bf16.msra.mxu0 %v3621
    %3687 = vmatprep.subr.bf16.mxu0 %v3624
    %3688 = vmatpush1.bf16.msra.mxu0 %v3623
    %3689 = vmatprep.subr.bf16.mxu0 %v3626
    %3690 = vmatpush1.bf16.msra.mxu0 %v3625
    %3691 = vmatprep.subr.bf16.mxu0 %v3628
    %3692 = vmatpush1.bf16.msra.mxu0 %v3627
    %3693 = vmatprep.subr.bf16.mxu0 %v3630
    %3694 = vmatpush1.bf16.msra.mxu0 %v3629
    %3695 = vmatprep.subr.bf16.mxu0 %v3632
    %3696 = vmatpush1.bf16.msra.mxu0 %v3631
    %3697 = vmatprep.subr.bf16.mxu0 %v3634
    %3698 = vmatpush1.bf16.msra.mxu0 %v3633
    %3699 = vmatprep.subr.bf16.mxu0 %v3636
    %3700 = vmatpush1.bf16.msra.mxu0 %v3635
    %3701 = vmatprep.subr.bf16.mxu0 %v3638
    %3702 = vmatpush1.bf16.msra.mxu0 %v3637
    %3703 = vmatprep.subr.bf16.mxu0 %v3640
    %3704 = vmatpush1.bf16.msra.mxu0 %v3639
    %3705 = vmatprep.subr.bf16.mxu0 %v3642
    %3706 = vmatpush1.bf16.msra.mxu0 %v3641
    %3707 = vmatprep.subr.bf16.mxu0 %v3644
    %3708 = vmatpush1.bf16.msra.mxu0 %v3643
    %3709 = vmatprep.subr.bf16.mxu0 %v3646
    %3710 = vmatpush1.bf16.msra.mxu0 %v3645
    %3711 = vmatprep.subr.bf16.mxu0 %v3648
    %3712 = vmatpush1.bf16.msra.mxu0 %v3647
    %3713 = vmatprep.subr.bf16.mxu0 %v3650
    %3714 = vmatpush1.bf16.msra.mxu0 %v3649
    %3715 = vmatprep.subr.bf16.mxu0 %v3652
    %3716 = vmatpush1.bf16.msra.mxu0 %v3651
    %3717 = vmatprep.mubr.bf16.mxu0 %v3514
    %3718 = vmatmul.mubr.bf16.gmra.mrb[0].mxu0 %v3513
    %v3719 = vpop.f32.mrb[0].mxu0
    %v3720 = vadd.f32 0.0, %v3719
    %v3721 = vpop.f32.mrb[0].mxu0
    %v3722 = vadd.f32 0.0, %v3721
    %v3723 = vpop.f32.mrb[0].mxu0
    %v3724 = vadd.f32 0.0, %v3723
    %v3725 = vpop.f32.mrb[0].mxu0
    %v3726 = vadd.f32 0.0, %v3725
    %3727 = vmatprep.mubr.bf16.mxu0 %v3516
    %3728 = vmatmul.mubr.bf16.gmra.mrb[0].mxu0 %v3515
    %v3729 = vpop.f32.mrb[0].mxu0
    %v3730 = vadd.f32 0.0, %v3729
    %v3731 = vpop.f32.mrb[0].mxu0
    %v3732 = vadd.f32 0.0, %v3731
    %v3733 = vpop.f32.mrb[0].mxu0
    %v3734 = vadd.f32 0.0, %v3733
    %v3735 = vpop.f32.mrb[0].mxu0
    %v3736 = vadd.f32 0.0, %v3735
    %3737 = vmatprep.mubr.bf16.mxu0 %v3518
    %3738 = vmatmul.mubr.bf16.gmra.mrb[0].mxu0 %v3517
    %v3739 = vpop.f32.mrb[0].mxu0
    %v3740 = vadd.f32 0.0, %v3739
    %v3741 = vpop.f32.mrb[0].mxu0
    %v3742 = vadd.f32 0.0, %v3741
    %v3743 = vpop.f32.mrb[0].mxu0
    %v3744 = vadd.f32 0.0, %v3743
    %v3745 = vpop.f32.mrb[0].mxu0
    %v3746 = vadd.f32 0.0, %v3745
    %3747 = vdwg.mxu0
    %v3748 = vadd.f32 %v3433, %v3720
    %v3749 = vadd.f32 %v3434, %v3722
    %v3750 = vadd.f32 %v3435, %v3724
    %v3751 = vadd.f32 %v3436, %v3726
    %v3752 = vadd.f32 %v3437, %v3730
    %v3753 = vadd.f32 %v3438, %v3732
    %v3754 = vadd.f32 %v3439, %v3734
    %v3755 = vadd.f32 %v3440, %v3736
    %v3756 = vadd.f32 %v3441, %v3740
    %v3757 = vadd.f32 %v3442, %v3742
    %v3758 = vadd.f32 %v3443, %v3744
    %v3759 = vadd.f32 %v3444, %v3746
    %v3761 = vlaneseq
    %v3762 = vshrl.u32 %v3761, 7
    %v3763 = vsub.s32 0, %v3762
    %v3764 = vrot.slane %v2397, %v3763
    %v3765 = vlaneseq
    %v3766 = vshrl.u32 %v3765, 7
    %v3767 = vsub.s32 1, %v3766
    %v3768 = vrot.slane %v2397, %v3767
    %v3771 = vadd.f32 %v3748, %v3764
    %v3772 = vadd.f32 %v3749, %v3768
    %v3773 = vadd.f32 %v3750, %v3764
    %v3774 = vadd.f32 %v3751, %v3768
    %v3775 = vadd.f32 %v3752, %v3764
    %v3776 = vadd.f32 %v3753, %v3768
    %v3777 = vadd.f32 %v3754, %v3764
    %v3778 = vadd.f32 %v3755, %v3768
    %v3779 = vadd.f32 %v3756, %v3764
    %v3780 = vadd.f32 %v3757, %v3768
    %v3781 = vadd.f32 %v3758, %v3764
    %v3782 = vadd.f32 %v3759, %v3768
    %v3783 = vmax.f32 %v3771, 0.0
    %v3784 = vmax.f32 %v3772, 0.0
    %v3785 = vmax.f32 %v3773, 0.0
    %v3786 = vmax.f32 %v3774, 0.0
    %v3787 = vmax.f32 %v3775, 0.0
    %v3788 = vmax.f32 %v3776, 0.0
    %v3789 = vmax.f32 %v3777, 0.0
    %v3790 = vmax.f32 %v3778, 0.0
    %v3791 = vmax.f32 %v3779, 0.0
    %v3792 = vmax.f32 %v3780, 0.0
    %v3793 = vmax.f32 %v3781, 0.0
    %v3794 = vmax.f32 %v3782, 0.0
    %v3795 = vsel %vm1126, %v3783, 0.0
    %v3796 = vsel %vm1126, %v3784, 0.0
    %v3797 = vsel %vm1127, %v3785, 0.0
    %v3798 = vsel %vm1127, %v3786, 0.0
    %v3799 = vsel %vm1128, %v3787, 0.0
    %v3800 = vsel %vm1128, %v3788, 0.0
    %v3801 = vsel %vm1126, %v3789, 0.0
    %v3802 = vsel %vm1126, %v3790, 0.0
    %v3803 = vsel %vm1127, %v3791, 0.0
    %v3804 = vsel %vm1127, %v3792, 0.0
    %v3805 = vsel %vm1128, %v3793, 0.0
    %v3806 = vsel %vm1128, %v3794, 0.0
    %v3807 = vmax.f32 %v3795, %v3797
    %v3808 = vmax.f32 %v3807, %v3799
    %v3809 = vrot.slane %v3808, 4
    %v3810 = vmax.f32 %v3808, %v3809
    %v3811 = vrot.slane %v3810, 2
    %v3812 = vmax.f32 %v3810, %v3811
    %v3813 = vrot.slane %v3812, 1
    %v3814 = vmax.f32 %v3812, %v3813
    %v3815 = vmax.f32 %v3796, %v3798
    %v3816 = vmax.f32 %v3815, %v3800
    %v3817 = vrot.slane %v3816, 4
    %v3818 = vmax.f32 %v3816, %v3817
    %v3819 = vrot.slane %v3818, 2
    %v3820 = vmax.f32 %v3818, %v3819
    %v3821 = vrot.slane %v3820, 1
    %v3822 = vmax.f32 %v3820, %v3821
    %v3823 = vmax.f32 %v3801, %v3803
    %v3824 = vmax.f32 %v3823, %v3805
    %v3825 = vrot.slane %v3824, 4
    %v3826 = vmax.f32 %v3824, %v3825
    %v3827 = vrot.slane %v3826, 2
    %v3828 = vmax.f32 %v3826, %v3827
    %v3829 = vrot.slane %v3828, 1
    %v3830 = vmax.f32 %v3828, %v3829
    %v3831 = vmax.f32 %v3802, %v3804
    %v3832 = vmax.f32 %v3831, %v3806
    %v3833 = vrot.slane %v3832, 4
    %v3834 = vmax.f32 %v3832, %v3833
    %v3835 = vrot.slane %v3834, 2
    %v3836 = vmax.f32 %v3834, %v3835
    %v3837 = vrot.slane %v3836, 1
    %v3838 = vmax.f32 %v3836, %v3837
    %v3843 = vcombine.low %v3814, %v3822
    %v3845 = vunpack.c.l.s4 1983009808
    %v3846 = vunpack.c.0.s8 %v3845
    %v3847 = vlaneseq
    %v3848 = vshrl.u32 %v3847, 7
    %v3849 = vsub.s32 %v3846, %v3848
    %v3850 = vrot.slane %v3843, %v3849
    %v3851 = vcombine.low %v3830, %v3838
    %v3853 = vunpack.c.l.s4 1983009808
    %v3854 = vunpack.c.0.s8 %v3853
    %v3855 = vlaneseq
    %v3856 = vshrl.u32 %v3855, 7
    %v3857 = vsub.s32 %v3854, %v3856
    %v3858 = vrot.slane %v3851, %v3857
    %v3859 = vsel %vm1193, %v3850, %v3850
    %v3860 = vsel %vm1195, %v3850, %v3859
    %v3861 = vrot.slane %v3858, 7
    %v3862 = vsel %vm1198, %v3861, %v3860
    %v3863 = vsel %vm1200, %v3861, %v3862
    %v3864 = vsel %vm1202, %v3861, %v3863
    %v3865 = vsel %vm1204, %v3861, %v3864
    %3867 = vst [vmem:[#allocation10 + $0x8] sm:$0xf] %v3865
    // Predicated region
    $region38: #{tpu_custom_call.1} parent=1 // pred_check
      _
    $region39: #{tpu_custom_call.1} parent=1 // pred_check_branch
      %3869 = sbr.rel (0) target = $region41
    $region40: #{tpu_custom_call.1} parent=1 // pred_region
      %s3871 = ssub.s32 192, 192
      %3872 = vsyncadd [#allocation4], %s3871
      %s3874 = sshll.u32 [#allocation10], 4
      %s3875 = int_to_ptr.vmem [resolvable:$true] %s3874
      %3877 = dma.vmem_to_hbm [thread:$0]  %s3875, 192, %s5, [#allocation4]
    $region41: #{tpu_custom_call.1} parent=1 // pred_fallthru
      _
    // Predicated region
    $region42: #{tpu_custom_call.1} parent=1 // pred_check
      _
    $region43: #{tpu_custom_call.1} parent=1 // pred_check_branch
      %3879 = sbr.rel (0) target = $region45
    $region44: #{tpu_custom_call.1} parent=1 // pred_region
      %3880 = dma.done [#allocation4], 192
    $region45: #{tpu_custom_call.1} parent=1 // pred_fallthru
      _
    %3881 = vsyncpa [#allocation3], 1
    %3882 = vsyncpa [#allocation6], 1
    %3883 = vsyncpa [#allocation9], 1
    %3884 = vsyncpa [#allocation4], 1

</llo_original>
